<compile_context>
chip_gen: v6e
topology: v6e:2x2x1
jax: 0.10.0
libtpu: 0.0.40
codegen_flags: <defaults>
</compile_context>

<pallas_src>
import jax
import jax.numpy as jnp
import numpy as np
from jax.experimental import pallas as pl
from jax.experimental.pallas import tpu as pltpu

EPS = 1e-5  # nn.BatchNorm default eps


def stn3d_kernel(x_ref,
                 w1_ref, b1_ref,
                 w2_ref, b2_ref,
                 w3_ref, b3_ref,
                 wf1_ref, bf1_ref,
                 wf2_ref, bf2_ref,
                 wf3_ref, bf3_ref,
                 o_ref,
                 gmax_ref):
    n = pl.program_id(1)
    n_last = pl.num_programs(1) - 1

    @pl.when(n == 0)
    def _init():
        gmax_ref[...] = jnp.full(gmax_ref.shape, -jnp.inf, dtype=gmax_ref.dtype)

    bt, nt, _ = x_ref.shape
    pts = x_ref[...].reshape(bt * nt, 3)                          # (M, 3) f32

    # conv1 (1x3) + bn1 + relu: K=3 contraction done on the VPU (broadcast MACs).
    w1 = w1_ref[...]                                              # (3, 64) f32
    h = (pts[:, 0:1] * w1[0:1, :]
         + pts[:, 1:2] * w1[1:2, :]
         + pts[:, 2:3] * w1[2:3, :]) + b1_ref[...]
    h = jnp.maximum(h, 0.0)                                       # (M, 64) f32

    # conv2 (1x1) + bn2 + relu: bf16 MXU, f32 accumulate.
    h = jnp.dot(h.astype(jnp.bfloat16), w2_ref[...],
                preferred_element_type=jnp.float32) + b2_ref[...]
    h = jnp.maximum(h, 0.0)                                       # (M, 128)

    # conv3 (1x1) + bn3 + relu
    h = jnp.dot(h.astype(jnp.bfloat16), w3_ref[...],
                preferred_element_type=jnp.float32) + b3_ref[...]
    h = jnp.maximum(h, 0.0)                                       # (M, 1024)

    # Running max over this tile's points (== MaxPool2d over num_points).
    tile_max = jnp.max(h.reshape(bt, nt, h.shape[-1]), axis=1)    # (Bt, 1024)
    gmax_ref[...] = jnp.maximum(gmax_ref[...], tile_max)

    # FC head once per batch tile, after the last N tile.
    @pl.when(n == n_last)
    def _head():
        g = gmax_ref[...]                                         # (Bt, 1024)
        f = jnp.dot(g.astype(jnp.bfloat16), wf1_ref[...],
                    preferred_element_type=jnp.float32) + bf1_ref[...]
        f = jnp.maximum(f, 0.0)                                   # (Bt, 512)
        f = jnp.dot(f.astype(jnp.bfloat16), wf2_ref[...],
                    preferred_element_type=jnp.float32) + bf2_ref[...]
        f = jnp.maximum(f, 0.0)                                   # (Bt, 256)
        out = jnp.dot(f.astype(jnp.bfloat16), wf3_ref[...],
                      preferred_element_type=jnp.float32) + bf3_ref[...]
        o_ref[...] = out.reshape(o_ref.shape)                     # (Bt, 1, 128)


def _largest_divisor_at_most(n, cap):
    for d in range(min(cap, n), 0, -1):
        if n % d == 0:
            return d
    return 1


def stn3d_forward(x_nchw, params, *, block_b=8, block_n=128):
    """x_nchw: (B, 1, N, 3) float32, like the PyTorch NCHW input (k=3 path)."""
    B, C, N, K = x_nchw.shape
    assert C == 1 and K == 3, "k=3 path: channels=1, kernel_size=3"
    (w1, b1, w2, b2, w3, b3, wf1, bf1, wf2, bf2, wf3, bf3) = params
    out_pad = wf3.shape[-1]                                       # lane-padded k*k (=128)

    x = x_nchw[:, 0, :, :]                                        # (B, N, 3) glue reshape

    # Tile over points; pad N by repeating the last point (never changes the max).
    nt = min(block_n, max(8, N))
    n_pad = pl.cdiv(N, nt) * nt
    if n_pad != N:
        pad = jnp.broadcast_to(x[:, -1:, :], (B, n_pad - N, 3))
        x = jnp.concatenate([x, pad], axis=1)

    # Batch tile so the FC matmuls have >1 MXU row and per-grid-step overhead is
    # amortized; batch axis is "parallel" (shards across v7x's two TensorCores).
    bt = _largest_divisor_at_most(B, block_b)

    def full(arr):
        return pl.BlockSpec(arr.shape, lambda b, n: (0,) * arr.ndim)

    out = pl.pallas_call(
        stn3d_kernel,
        out_shape=jax.ShapeDtypeStruct((B, 1, out_pad), jnp.float32),
        grid_spec=pltpu.PrefetchScalarGridSpec(
            num_scalar_prefetch=0,
            grid=(B // bt, n_pad // nt),
            in_specs=[
                pl.BlockSpec((bt, nt, 3), lambda b, n: (b, n, 0)),
                full(w1), full(b1),
                full(w2), full(b2),
                full(w3), full(b3),
                full(wf1), full(bf1),
                full(wf2), full(bf2),
                full(wf3), full(bf3),
            ],
            out_specs=pl.BlockSpec((bt, 1, out_pad), lambda b, n: (b, 0, 0)),
            scratch_shapes=[pltpu.VMEM((bt, w3.shape[-1]), jnp.float32)],
        ),
        compiler_params=pltpu.CompilerParams(
            dimension_semantics=("parallel", "arbitrary")),
    )(x, *params)

    return out[:, 0, :9].reshape(B, 3, 3)


def make_params(key, k=3, out_pad=128):
    """Deterministic synthetic parameters; BatchNorm (eval mode) folded into W/b.

    Layout the kernel expects: w1 (3,64) f32 (VPU path), biases (1,C) f32,
    w2/w3/wf1/wf2/wf3 bf16, fc3 weight/bias zero-padded to `out_pad` columns
    with the "+ eye(k)" identity folded into the fc3 bias.
    """
    assert k == 3
    dims = [(3, 64), (64, 128), (128, 1024), (1024, 512), (512, 256)]
    keys = jax.random.split(key, 6 * len(dims) + 1)
    ki = iter(range(len(keys)))
    params = []
    for li, (fan_in, fan_out) in enumerate(dims):
        w = jax.random.normal(keys[next(ki)], (fan_in, fan_out), jnp.float32) / np.sqrt(fan_in)
        b = 0.05 * jax.random.normal(keys[next(ki)], (fan_out,), jnp.float32)
        gamma = 1.0 + 0.1 * jax.random.normal(keys[next(ki)], (fan_out,), jnp.float32)
        beta = 0.1 * jax.random.normal(keys[next(ki)], (fan_out,), jnp.float32)
        mean = 0.1 * jax.random.normal(keys[next(ki)], (fan_out,), jnp.float32)
        var = jnp.abs(1.0 + 0.1 * jax.random.normal(keys[next(ki)], (fan_out,), jnp.float32))
        scale = gamma / jnp.sqrt(var + EPS)
        w_eff = w * scale[None, :]
        b_eff = ((b - mean) * scale + beta).reshape(1, fan_out)
        if li == 0:
            params.extend([w_eff, b_eff])                         # conv1 stays f32 (VPU)
        else:
            params.extend([w_eff.astype(jnp.bfloat16), b_eff])
    # fc3: the module zero-inits weight/bias; use a small nonzero weight here so the
    # matmul path is exercised, and fold "+ eye(k)" into the (lane-padded) bias.
    wf3 = 0.02 * jax.random.normal(keys[next(ki)], (256, k * k), jnp.float32)
    wf3_full = jnp.zeros((256, out_pad), jnp.float32).at[:, :k * k].set(wf3)
    bf3_full = jnp.zeros((1, out_pad), jnp.float32).at[0, :k * k].set(jnp.eye(k).reshape(-1))
    params.extend([wf3_full.astype(jnp.bfloat16), bf3_full])
    return tuple(params)


def ref_forward(x_nchw, params, k=3):
    """Pure-JAX reference mirroring the kernel's bf16-MXU / f32-accumulate numerics."""
    (w1, b1, w2, b2, w3, b3, wf1, bf1, wf2, bf2, wf3, bf3) = params
    B, _, N, _ = x_nchw.shape
    x = x_nchw[:, 0].reshape(B * N, 3)
    h = jax.nn.relu(x[:, 0:1] * w1[0:1] + x[:, 1:2] * w1[1:2] + x[:, 2:3] * w1[2:3] + b1)
    h = jax.nn.relu(jnp.dot(h.astype(jnp.bfloat16), w2, preferred_element_type=jnp.float32) + b2)
    h = jax.nn.relu(jnp.dot(h.astype(jnp.bfloat16), w3, preferred_element_type=jnp.float32) + b3)
    g = jnp.max(h.reshape(B, N, -1), axis=1)
    f = jax.nn.relu(jnp.dot(g.astype(jnp.bfloat16), wf1, preferred_element_type=jnp.float32) + bf1)
    f = jax.nn.relu(jnp.dot(f.astype(jnp.bfloat16), wf2, preferred_element_type=jnp.float32) + bf2)
    out = jnp.dot(f.astype(jnp.bfloat16), wf3, preferred_element_type=jnp.float32) + bf3
    return out[:, :k * k].reshape(B, k, k)


if __name__ == "__main__":
    B, N, k = 2, 300, 3   # small; N deliberately NOT a multiple of the N tile (128)
    key = jax.random.PRNGKey(0)
    kx, kp = jax.random.split(key)
    x_nchw = jax.random.normal(kx, (B, 1, N, k), dtype=jnp.float32)
    params = make_params(kp, k=k)

    y = jax.block_until_ready(stn3d_forward(x_nchw, params))
    y_ref = jax.block_until_ready(ref_forward(x_nchw, params))

    assert y.shape == (B, k, k)
    np.testing.assert_allclose(np.asarray(y), np.asarray(y_ref), rtol=1e-2, atol=1e-2)
    print("KERNEL_OK")
</pallas_src>

<mosaic_0001>
module attributes {stable_mosaic.version = 11 : i64} {
  func.func @stn3d_kernel(%arg0: i32, %arg1: i32, %arg2: memref<2x128x3xf32, #tpu.memory_space<vmem>>, %arg3: memref<3x64xf32, #tpu.memory_space<vmem>>, %arg4: memref<1x64xf32, #tpu.memory_space<vmem>>, %arg5: memref<64x128xbf16, #tpu.memory_space<vmem>>, %arg6: memref<1x128xf32, #tpu.memory_space<vmem>>, %arg7: memref<128x1024xbf16, #tpu.memory_space<vmem>>, %arg8: memref<1x1024xf32, #tpu.memory_space<vmem>>, %arg9: memref<1024x512xbf16, #tpu.memory_space<vmem>>, %arg10: memref<1x512xf32, #tpu.memory_space<vmem>>, %arg11: memref<512x256xbf16, #tpu.memory_space<vmem>>, %arg12: memref<1x256xf32, #tpu.memory_space<vmem>>, %arg13: memref<256x128xbf16, #tpu.memory_space<vmem>>, %arg14: memref<1x128xf32, #tpu.memory_space<vmem>>, %arg15: memref<2x1x128xf32, #tpu.memory_space<vmem>>, %arg16: memref<2x1024xf32, #tpu.memory_space<vmem>>) attributes {dimension_semantics = [#tpu.dimension_semantics<parallel>, #tpu.dimension_semantics<arbitrary>], iteration_bounds = array<i64: 1, 3>, scalar_prefetch = 0 : i64, scratch_operands = 1 : i64, tpu.core_type = #tpu.core_type<tc>, window_params = [{transform_indices = @transform_0, window_bounds = array<i64: 2, 128, 3>}, {pipeline_mode = #tpu.pipeline_mode<synchronous>, transform_indices = @transform_1, window_bounds = array<i64: 3, 64>}, {pipeline_mode = #tpu.pipeline_mode<synchronous>, transform_indices = @transform_2, window_bounds = array<i64: 1, 64>}, {pipeline_mode = #tpu.pipeline_mode<synchronous>, transform_indices = @transform_3, window_bounds = array<i64: 64, 128>}, {pipeline_mode = #tpu.pipeline_mode<synchronous>, transform_indices = @transform_4, window_bounds = array<i64: 1, 128>}, {pipeline_mode = #tpu.pipeline_mode<synchronous>, transform_indices = @transform_5, window_bounds = array<i64: 128, 1024>}, {pipeline_mode = #tpu.pipeline_mode<synchronous>, transform_indices = @transform_6, window_bounds = array<i64: 1, 1024>}, {pipeline_mode = #tpu.pipeline_mode<synchronous>, transform_indices = @transform_7, window_bounds = array<i64: 1024, 512>}, {pipeline_mode = #tpu.pipeline_mode<synchronous>, transform_indices = @transform_8, window_bounds = array<i64: 1, 512>}, {pipeline_mode = #tpu.pipeline_mode<synchronous>, transform_indices = @transform_9, window_bounds = array<i64: 512, 256>}, {pipeline_mode = #tpu.pipeline_mode<synchronous>, transform_indices = @transform_10, window_bounds = array<i64: 1, 256>}, {pipeline_mode = #tpu.pipeline_mode<synchronous>, transform_indices = @transform_11, window_bounds = array<i64: 256, 128>}, {pipeline_mode = #tpu.pipeline_mode<synchronous>, transform_indices = @transform_12, window_bounds = array<i64: 1, 128>}, {transform_indices = @transform_13, window_bounds = array<i64: 2, 1, 128>}]} {
    %c0_i32 = arith.constant 0 : i32
    %0 = arith.cmpi eq, %arg1, %c0_i32 : i32
    %1 = arith.extui %0 : i1 to i32
    %c0_i32_0 = arith.constant 0 : i32
    %2 = arith.cmpi ne, %1, %c0_i32_0 : i32
    scf.if %2 {
      %cst_25 = arith.constant 0xFF800000 : f32
      %52 = vector.broadcast %cst_25 : f32 to vector<2x1024xf32>
      %c0_26 = arith.constant 0 : index
      %c0_27 = arith.constant 0 : index
      %53 = vector.load %arg16[%c0_26, %c0_27] : memref<2x1024xf32, #tpu.memory_space<vmem>>, vector<2x1024xf32>
      tpu.vector_store %arg16[%c0_26, %c0_27], %52 {strides = array<i32>} : memref<2x1024xf32, #tpu.memory_space<vmem>>, vector<2x1024xf32>,
    } else {
    }
    %c0 = arith.constant 0 : index
    %c0_1 = arith.constant 0 : index
    %c0_2 = arith.constant 0 : index
    %3 = vector.load %arg2[%c0, %c0_1, %c0_2] : memref<2x128x3xf32, #tpu.memory_space<vmem>>, vector<2x128x3xf32>
    %4 = vector.shape_cast %3 : vector<2x128x3xf32> to vector<256x3xf32>
    %c0_3 = arith.constant 0 : index
    %c0_4 = arith.constant 0 : index
    %5 = vector.load %arg3[%c0_3, %c0_4] : memref<3x64xf32, #tpu.memory_space<vmem>>, vector<3x64xf32>
    %6 = vector.extract_strided_slice %4 {offsets = [0, 0], sizes = [256, 1], strides = [1, 1]} : vector<256x3xf32> to vector<256x1xf32>
    %7 = vector.extract_strided_slice %5 {offsets = [0, 0], sizes = [1, 64], strides = [1, 1]} : vector<3x64xf32> to vector<1x64xf32>
    %8 = vector.broadcast %6 : vector<256x1xf32> to vector<256x64xf32>
    %9 = vector.broadcast %7 : vector<1x64xf32> to vector<256x64xf32>
    %10 = arith.mulf %8, %9 : vector<256x64xf32>
    %11 = vector.extract_strided_slice %4 {offsets = [0, 1], sizes = [256, 1], strides = [1, 1]} : vector<256x3xf32> to vector<256x1xf32>
    %12 = vector.extract_strided_slice %5 {offsets = [1, 0], sizes = [1, 64], strides = [1, 1]} : vector<3x64xf32> to vector<1x64xf32>
    %13 = vector.broadcast %11 : vector<256x1xf32> to vector<256x64xf32>
    %14 = vector.broadcast %12 : vector<1x64xf32> to vector<256x64xf32>
    %15 = arith.mulf %13, %14 : vector<256x64xf32>
    %16 = arith.addf %10, %15 : vector<256x64xf32>
    %17 = vector.extract_strided_slice %4 {offsets = [0, 2], sizes = [256, 1], strides = [1, 1]} : vector<256x3xf32> to vector<256x1xf32>
    %18 = vector.extract_strided_slice %5 {offsets = [2, 0], sizes = [1, 64], strides = [1, 1]} : vector<3x64xf32> to vector<1x64xf32>
    %19 = vector.broadcast %17 : vector<256x1xf32> to vector<256x64xf32>
    %20 = vector.broadcast %18 : vector<1x64xf32> to vector<256x64xf32>
    %21 = arith.mulf %19, %20 : vector<256x64xf32>
    %22 = arith.addf %16, %21 : vector<256x64xf32>
    %c0_5 = arith.constant 0 : index
    %c0_6 = arith.constant 0 : index
    %23 = vector.load %arg4[%c0_5, %c0_6] : memref<1x64xf32, #tpu.memory_space<vmem>>, vector<1x64xf32>
    %24 = vector.broadcast %23 : vector<1x64xf32> to vector<256x64xf32>
    %25 = arith.addf %22, %24 : vector<256x64xf32>
    %cst = arith.constant 0.000000e+00 : f32
    %26 = vector.broadcast %cst : f32 to vector<256x64xf32>
    %27 = arith.maximumf %25, %26 : vector<256x64xf32>
    %28 = arith.truncf %27 : vector<256x64xf32> to vector<256x64xbf16>
    %c0_7 = arith.constant 0 : index
    %c0_8 = arith.constant 0 : index
    %29 = vector.load %arg5[%c0_7, %c0_8] : memref<64x128xbf16, #tpu.memory_space<vmem>>, vector<64x128xbf16>
    %cst_9 = arith.constant dense<0.000000e+00> : vector<256x128xf32>
    %30 = tpu.matmul %28, %29, %cst_9 {dimension_numbers = #tpu.dot_dimension_numbers<[1], [0], [0], [1], [0, 0, 1, 1], [], []>} : vector<256x64xbf16>, vector<64x128xbf16>, vector<256x128xf32> -> vector<256x128xf32>
    %c0_10 = arith.constant 0 : index
    %c0_11 = arith.constant 0 : index
    %31 = vector.load %arg6[%c0_10, %c0_11] : memref<1x128xf32, #tpu.memory_space<vmem>>, vector<1x128xf32>
    %32 = vector.broadcast %31 : vector<1x128xf32> to vector<256x128xf32>
    %33 = arith.addf %30, %32 : vector<256x128xf32>
    %cst_12 = arith.constant 0.000000e+00 : f32
    %34 = vector.broadcast %cst_12 : f32 to vector<256x128xf32>
    %35 = arith.maximumf %33, %34 : vector<256x128xf32>
    %36 = arith.truncf %35 : vector<256x128xf32> to vector<256x128xbf16>
    %c0_13 = arith.constant 0 : index
    %c0_14 = arith.constant 0 : index
    %37 = vector.load %arg7[%c0_13, %c0_14] : memref<128x1024xbf16, #tpu.memory_space<vmem>>, vector<128x1024xbf16>
    %cst_15 = arith.constant dense<0.000000e+00> : vector<256x1024xf32>
    %38 = tpu.matmul %36, %37, %cst_15 {dimension_numbers = #tpu.dot_dimension_numbers<[1], [0], [0], [1], [0, 0, 1, 1], [], []>} : vector<256x128xbf16>, vector<128x1024xbf16>, vector<256x1024xf32> -> vector<256x1024xf32>
    %c0_16 = arith.constant 0 : index
    %c0_17 = arith.constant 0 : index
    %39 = vector.load %arg8[%c0_16, %c0_17] : memref<1x1024xf32, #tpu.memory_space<vmem>>, vector<1x1024xf32>
    %40 = vector.broadcast %39 : vector<1x1024xf32> to vector<256x1024xf32>
    %41 = arith.addf %38, %40 : vector<256x1024xf32>
    %cst_18 = arith.constant 0.000000e+00 : f32
    %42 = vector.broadcast %cst_18 : f32 to vector<256x1024xf32>
    %43 = arith.maximumf %41, %42 : vector<256x1024xf32>
    %44 = vector.shape_cast %43 : vector<256x1024xf32> to vector<2x128x1024xf32>
    %cst_19 = arith.constant dense<0xFF800000> : vector<2x1024xf32>
    %45 = vector.multi_reduction <maximumf>, %44, %cst_19 [1] : vector<2x128x1024xf32> to vector<2x1024xf32>
    %c0_20 = arith.constant 0 : index
    %c0_21 = arith.constant 0 : index
    %46 = vector.load %arg16[%c0_20, %c0_21] : memref<2x1024xf32, #tpu.memory_space<vmem>>, vector<2x1024xf32>
    %47 = arith.maximumf %46, %45 : vector<2x1024xf32>
    %c0_22 = arith.constant 0 : index
    %c0_23 = arith.constant 0 : index
    %48 = vector.load %arg16[%c0_22, %c0_23] : memref<2x1024xf32, #tpu.memory_space<vmem>>, vector<2x1024xf32>
    tpu.vector_store %arg16[%c0_22, %c0_23], %47 {strides = array<i32>} : memref<2x1024xf32, #tpu.memory_space<vmem>>, vector<2x1024xf32>,
    %c2_i32 = arith.constant 2 : i32
    %49 = arith.cmpi eq, %arg1, %c2_i32 : i32
    %50 = arith.extui %49 : i1 to i32
    %c0_i32_24 = arith.constant 0 : i32
    %51 = arith.cmpi ne, %50, %c0_i32_24 : i32
    scf.if %51 {
      %c0_25 = arith.constant 0 : index
      %c0_26 = arith.constant 0 : index
      %52 = vector.load %arg16[%c0_25, %c0_26] : memref<2x1024xf32, #tpu.memory_space<vmem>>, vector<2x1024xf32>
      %53 = arith.truncf %52 : vector<2x1024xf32> to vector<2x1024xbf16>
      %c0_27 = arith.constant 0 : index
      %c0_28 = arith.constant 0 : index
      %54 = vector.load %arg9[%c0_27, %c0_28] : memref<1024x512xbf16, #tpu.memory_space<vmem>>, vector<1024x512xbf16>
      %cst_29 = arith.constant dense<0.000000e+00> : vector<2x512xf32>
      %55 = tpu.matmul %53, %54, %cst_29 {dimension_numbers = #tpu.dot_dimension_numbers<[1], [0], [0], [1], [0, 0, 1, 1], [], []>} : vector<2x1024xbf16>, vector<1024x512xbf16>, vector<2x512xf32> -> vector<2x512xf32>
      %c0_30 = arith.constant 0 : index
      %c0_31 = arith.constant 0 : index
      %56 = vector.load %arg10[%c0_30, %c0_31] : memref<1x512xf32, #tpu.memory_space<vmem>>, vector<1x512xf32>
      %57 = vector.broadcast %56 : vector<1x512xf32> to vector<2x512xf32>
      %58 = arith.addf %55, %57 : vector<2x512xf32>
      %cst_32 = arith.constant 0.000000e+00 : f32
      %59 = vector.broadcast %cst_32 : f32 to vector<2x512xf32>
      %60 = arith.maximumf %58, %59 : vector<2x512xf32>
      %61 = arith.truncf %60 : vector<2x512xf32> to vector<2x512xbf16>
      %c0_33 = arith.constant 0 : index
      %c0_34 = arith.constant 0 : index
      %62 = vector.load %arg11[%c0_33, %c0_34] : memref<512x256xbf16, #tpu.memory_space<vmem>>, vector<512x256xbf16>
      %cst_35 = arith.constant dense<0.000000e+00> : vector<2x256xf32>
      %63 = tpu.matmul %61, %62, %cst_35 {dimension_numbers = #tpu.dot_dimension_numbers<[1], [0], [0], [1], [0, 0, 1, 1], [], []>} : vector<2x512xbf16>, vector<512x256xbf16>, vector<2x256xf32> -> vector<2x256xf32>
      %c0_36 = arith.constant 0 : index
      %c0_37 = arith.constant 0 : index
      %64 = vector.load %arg12[%c0_36, %c0_37] : memref<1x256xf32, #tpu.memory_space<vmem>>, vector<1x256xf32>
      %65 = vector.broadcast %64 : vector<1x256xf32> to vector<2x256xf32>
      %66 = arith.addf %63, %65 : vector<2x256xf32>
      %cst_38 = arith.constant 0.000000e+00 : f32
      %67 = vector.broadcast %cst_38 : f32 to vector<2x256xf32>
      %68 = arith.maximumf %66, %67 : vector<2x256xf32>
      %69 = arith.truncf %68 : vector<2x256xf32> to vector<2x256xbf16>
      %c0_39 = arith.constant 0 : index
      %c0_40 = arith.constant 0 : index
      %70 = vector.load %arg13[%c0_39, %c0_40] : memref<256x128xbf16, #tpu.memory_space<vmem>>, vector<256x128xbf16>
      %cst_41 = arith.constant dense<0.000000e+00> : vector<2x128xf32>
      %71 = tpu.matmul %69, %70, %cst_41 {dimension_numbers = #tpu.dot_dimension_numbers<[1], [0], [0], [1], [0, 0, 1, 1], [], []>} : vector<2x256xbf16>, vector<256x128xbf16>, vector<2x128xf32> -> vector<2x128xf32>
      %c0_42 = arith.constant 0 : index
      %c0_43 = arith.constant 0 : index
      %72 = vector.load %arg14[%c0_42, %c0_43] : memref<1x128xf32, #tpu.memory_space<vmem>>, vector<1x128xf32>
      %73 = vector.broadcast %72 : vector<1x128xf32> to vector<2x128xf32>
      %74 = arith.addf %71, %73 : vector<2x128xf32>
      %75 = vector.shape_cast %74 : vector<2x128xf32> to vector<2x1x128xf32>
      %c0_44 = arith.constant 0 : index
      %c0_45 = arith.constant 0 : index
      %c0_46 = arith.constant 0 : index
      %76 = vector.load %arg15[%c0_44, %c0_45, %c0_46] : memref<2x1x128xf32, #tpu.memory_space<vmem>>, vector<2x1x128xf32>
      tpu.vector_store %arg15[%c0_44, %c0_45, %c0_46], %75 {strides = array<i32>} : memref<2x1x128xf32, #tpu.memory_space<vmem>>, vector<2x1x128xf32>,
    } else {
    }
    return
  }
  func.func @transform_0(%arg0: i32, %arg1: i32) -> (i32, i32, i32) {
    %c0_i32 = arith.constant 0 : i32
    %c0_i32_0 = arith.constant 0 : i32
    return %arg0, %arg1, %c0_i32 : i32, i32, i32
  }
  func.func @transform_1(%arg0: i32, %arg1: i32) -> (i32, i32) {
    %c0_i32 = arith.constant 0 : i32
    %c0_i32_0 = arith.constant 0 : i32
    %c0_i32_1 = arith.constant 0 : i32
    return %c0_i32, %c0_i32_0 : i32, i32
  }
  func.func @transform_2(%arg0: i32, %arg1: i32) -> (i32, i32) {
    %c0_i32 = arith.constant 0 : i32
    %c0_i32_0 = arith.constant 0 : i32
    %c0_i32_1 = arith.constant 0 : i32
    return %c0_i32, %c0_i32_0 : i32, i32
  }
  func.func @transform_3(%arg0: i32, %arg1: i32) -> (i32, i32) {
    %c0_i32 = arith.constant 0 : i32
    %c0_i32_0 = arith.constant 0 : i32
    %c0_i32_1 = arith.constant 0 : i32
    return %c0_i32, %c0_i32_0 : i32, i32
  }
  func.func @transform_4(%arg0: i32, %arg1: i32) -> (i32, i32) {
    %c0_i32 = arith.constant 0 : i32
    %c0_i32_0 = arith.constant 0 : i32
    %c0_i32_1 = arith.constant 0 : i32
    return %c0_i32, %c0_i32_0 : i32, i32
  }
  func.func @transform_5(%arg0: i32, %arg1: i32) -> (i32, i32) {
    %c0_i32 = arith.constant 0 : i32
    %c0_i32_0 = arith.constant 0 : i32
    %c0_i32_1 = arith.constant 0 : i32
    return %c0_i32, %c0_i32_0 : i32, i32
  }
  func.func @transform_6(%arg0: i32, %arg1: i32) -> (i32, i32) {
    %c0_i32 = arith.constant 0 : i32
    %c0_i32_0 = arith.constant 0 : i32
    %c0_i32_1 = arith.constant 0 : i32
    return %c0_i32, %c0_i32_0 : i32, i32
  }
  func.func @transform_7(%arg0: i32, %arg1: i32) -> (i32, i32) {
    %c0_i32 = arith.constant 0 : i32
    %c0_i32_0 = arith.constant 0 : i32
    %c0_i32_1 = arith.constant 0 : i32
    return %c0_i32, %c0_i32_0 : i32, i32
  }
  func.func @transform_8(%arg0: i32, %arg1: i32) -> (i32, i32) {
    %c0_i32 = arith.constant 0 : i32
    %c0_i32_0 = arith.constant 0 : i32
    %c0_i32_1 = arith.constant 0 : i32
    return %c0_i32, %c0_i32_0 : i32, i32
  }
  func.func @transform_9(%arg0: i32, %arg1: i32) -> (i32, i32) {
    %c0_i32 = arith.constant 0 : i32
    %c0_i32_0 = arith.constant 0 : i32
    %c0_i32_1 = arith.constant 0 : i32
    return %c0_i32, %c0_i32_0 : i32, i32
  }
  func.func @transform_10(%arg0: i32, %arg1: i32) -> (i32, i32) {
    %c0_i32 = arith.constant 0 : i32
    %c0_i32_0 = arith.constant 0 : i32
    %c0_i32_1 = arith.constant 0 : i32
    return %c0_i32, %c0_i32_0 : i32, i32
  }
  func.func @transform_11(%arg0: i32, %arg1: i32) -> (i32, i32) {
    %c0_i32 = arith.constant 0 : i32
    %c0_i32_0 = arith.constant 0 : i32
    %c0_i32_1 = arith.constant 0 : i32
    return %c0_i32, %c0_i32_0 : i32, i32
  }
  func.func @transform_12(%arg0: i32, %arg1: i32) -> (i32, i32) {
    %c0_i32 = arith.constant 0 : i32
    %c0_i32_0 = arith.constant 0 : i32
    %c0_i32_1 = arith.constant 0 : i32
    return %c0_i32, %c0_i32_0 : i32, i32
  }
  func.func @transform_13(%arg0: i32, %arg1: i32) -> (i32, i32, i32) {
    %c0_i32 = arith.constant 0 : i32
    %c0_i32_0 = arith.constant 0 : i32
    %c0_i32_1 = arith.constant 0 : i32
    return %arg0, %c0_i32, %c0_i32_0 : i32, i32, i32
  }
}

</mosaic_0001>

<llo_original>
// kernel: tpu_custom_call.1
$region0: #{tpu_custom_call.1}
  #allocation0 [shape = 'u32[]', space=smem, size = 0x4, offset = 0x4, fixed_abs, tag = 'smem constant byte address 0x4 - core index']
  #allocation1 [shape = 'u32[144,128]{1,0:T(1,128)}', space=vmem, size = 0x12000, scoped, tag = 'internal scratch']
  #allocation2 [shape = 'f32[2,1024]{1,0:T(2,128)}', space=vmem, size = 0x2000, scoped, tag = 'scratch operand']
  %s0 = inlined_call_operand.vmem [shape: f32[2,384,3], index: 0, kind: input, shape index: {}]
  %s1 = inlined_call_operand.vmem [shape: f32[3,64], index: 1, kind: input, shape index: {}]
  %s2 = inlined_call_operand.vmem [shape: f32[1,64], index: 2, kind: input, shape index: {}]
  %s3 = inlined_call_operand.vmem [shape: bf16[64,128], index: 3, kind: input, shape index: {}]
  %s4 = inlined_call_operand.vmem [shape: f32[1,128], index: 4, kind: input, shape index: {}]
  %s5 = inlined_call_operand.vmem [shape: bf16[128,1024], index: 5, kind: input, shape index: {}]
  %s6 = inlined_call_operand.vmem [shape: f32[1,1024], index: 6, kind: input, shape index: {}]
  %s7 = inlined_call_operand.hbm [shape: bf16[1024,512], index: 7, kind: input, shape index: {}]
  %s8 = inlined_call_operand.vmem [shape: f32[1,512], index: 8, kind: input, shape index: {}]
  %s9 = inlined_call_operand.hbm [shape: bf16[512,256], index: 9, kind: input, shape index: {}]
  %s10 = inlined_call_operand.vmem [shape: f32[1,256], index: 10, kind: input, shape index: {}]
  %s11 = inlined_call_operand.vmem [shape: bf16[256,128], index: 11, kind: input, shape index: {}]
  %s12 = inlined_call_operand.vmem [shape: f32[1,128], index: 12, kind: input, shape index: {}]
  %s13 = inlined_call_operand.hbm [shape: f32[2,1,128], index: 13, kind: output, shape index: {}]
  %s14 = sld [smem:[#allocation0]]
  $region139: #{tpu_custom_call.1} parent=0
    _
  %s16 = ssub.s32 1, %s14
  %s17 = scalar_select 0, %s16, %s14
  $region1: #{tpu_custom_call.1} parent=0
    #allocation3 [shape = 'u8[262144]{0}', space=vmem, size = 0x40000, scoped, tag = 'input window, operand 0']
    #allocation4 [shape = 'u8[1048576]{0}', space=vmem, size = 0x100000, scoped, tag = 'input window, operand 7, single buffered']
    #allocation5 [shape = 's32[2]{0}', space=sflag, size = 0x8, scoped, tag = 'scoped memory for tpu_custom_call.1']
    #allocation6 [shape = 's32[2]{0}', space=sflag, size = 0x8, scoped, tag = 'scoped memory for tpu_custom_call.1']
    #allocation7 [shape = 'u8[262144]{0}', space=vmem, size = 0x40000, scoped, tag = 'input window, operand 9, single buffered']
    #allocation8 [shape = 's32[1]{0}', space=sflag, size = 0x4, scoped, tag = 'scoped memory for tpu_custom_call.1']
    #allocation9 [shape = 'u8[1024]{0}', space=vmem, size = 0x400, scoped, tag = 'output window, operand 0, single buffered']
    %18 = vsyncpa [#allocation5], 0
    %19 = vsyncpa [#allocation8], 0
    %20 = vsyncpa [#allocation6], 0
    loop: start=0, step=1, limit=5
    $region2: #{tpu_custom_call.1} parent=1 // loop_pre_header
      _
    $region3: #{tpu_custom_call.1} parent=1 // loop_header
      %s22 = sphi 0, %s26
      %p23 = scmp.ge.s32.totalorder %s22, 5
      %s29 = sphi 0, %s41
      %s30 = sphi 0, %s37
      %s31 = sphi 0, %s29
      %s32 = sphi 0, %s30
      %s33 = sphi 0, %s31
      %s34 = sphi 0, %s32
      %s46 = sphi 0, %s48
      %s49 = sphi 0, %s46
      %s50 = sphi 0, %s49
      %s66 = sphi 0, %s50
      %s70 = sphi 0, %s70
      %s72 = sphi 0, %s70
      %s73 = sphi 0, %s72
      %s87 = sphi 0, %s73
      %s91 = sphi 0, %s91
      %s93 = sphi 0, %s91
      %s94 = sphi 0, %s93
      %s108 = sphi 0, %s94
      %s112 = sphi 0, %s112
      %s114 = sphi 0, %s112
      %s115 = sphi 0, %s114
      %s129 = sphi 0, %s115
      %s133 = sphi 0, %s133
      %s135 = sphi 0, %s133
      %s136 = sphi 0, %s135
      %s150 = sphi 0, %s136
      %s154 = sphi 0, %s154
      %s156 = sphi 0, %s154
      %s157 = sphi 0, %s156
      %s171 = sphi 0, %s157
      %s175 = sphi 0, %s175
      %s177 = sphi 0, %s175
      %s178 = sphi 0, %s177
      %s192 = sphi 0, %s178
      %s196 = sphi 0, %s196
      %s198 = sphi 0, %s196
      %s199 = sphi 0, %s198
      %s213 = sphi 0, %s199
      %s217 = sphi 0, %s217
      %s219 = sphi 0, %s217
      %s220 = sphi 0, %s219
      %s234 = sphi 0, %s220
      %s238 = sphi 0, %s238
      %s240 = sphi 0, %s238
      %s241 = sphi 0, %s240
      %s255 = sphi 0, %s241
      %s259 = sphi 0, %s259
      %s261 = sphi 0, %s259
      %s262 = sphi 0, %s261
      %s276 = sphi 0, %s262
      %s280 = sphi 0, %s280
      %s282 = sphi 0, %s280
      %s283 = sphi 0, %s282
      %s297 = sphi 0, %s283
      %s301 = sphi 0, %s301
      %s303 = sphi 0, %s301
      %s304 = sphi 0, %s303
      %s318 = sphi 0, %s304
      %s324 = sphi 0, %s326
      %s327 = sphi 0, %s324
      %s328 = sphi 0, %s327
      %s344 = sphi 0, %s328
    $region4: #{tpu_custom_call.1} parent=1 // loop_header_branch
      %25 = sbr.rel (%p23) target = $region8
    $region5: #{tpu_custom_call.1} parent=1 // loop_body
      %s27 = ssub.s32 %s22, 1
      %s28 = ssub.s32 %s22, 2
      %s35 = sadd.s32 1, %s30
      %p36 = scmp.ge.s32.totalorder %s35, 3
      %s37 = scalar_select %p36, 0, %s35
      %s38 = sadd.s32 1, %s29
      %s39 = scalar_select %p36, %s38, %s29
      %p40 = scmp.ge.s32.totalorder %s39, 1
      %s41 = scalar_select %p40, 0, %s39
      %s42 = ssub.s32 %s29, %s41
      %s43 = ssub.s32 %s30, %s37
      %s44 = sor.u32 %s42, %s43
      %p45 = scmp.eq.s32.totalorder %s44, 0
      %s47 = sadd.s32 %s46, 1
      %s48 = scalar_select %p45, %s46, %s47
      %p51 = pneg %p45
      %p52 = scmp.eq.s32.totalorder %s22, 2
      %p53 = por %p51, %p52
      %p54 = scmp.ne.s32.totalorder %s46, %s49
      %p55 = scmp.eq.s32.totalorder %s22, 0
      %p56 = por %p54, %p55
      %p57 = scmp.ne.s32.totalorder %s46, %s49
      %p58 = scmp.eq.s32.totalorder %s27, 2
      %p59 = por %p57, %p58
      %p60 = scmp.ne.s32.totalorder %s49, %s50
      %p61 = scmp.eq.s32.totalorder %s27, 0
      %p62 = por %p60, %p61
      %p63 = scmp.ne.s32.totalorder %s49, %s50
      %p64 = scmp.eq.s32.totalorder %s28, 2
      %p65 = por %p63, %p64
      %p67 = scmp.ne.s32.totalorder %s50, %s66
      %p68 = scmp.eq.s32.totalorder %s28, 0
      %p69 = por %p67, %p68
      %s71 = sadd.s32 %s70, 1
      %p74 = scmp.eq.s32.totalorder %s22, 2
      %p75 = scmp.ne.s32.totalorder %s70, %s72
      %p76 = scmp.eq.s32.totalorder %s22, 0
      %p77 = por %p75, %p76
      %p78 = scmp.ne.s32.totalorder %s70, %s72
      %p79 = scmp.eq.s32.totalorder %s27, 2
      %p80 = por %p78, %p79
      %p81 = scmp.ne.s32.totalorder %s72, %s73
      %p82 = scmp.eq.s32.totalorder %s27, 0
      %p83 = por %p81, %p82
      %p84 = scmp.ne.s32.totalorder %s72, %s73
      %p85 = scmp.eq.s32.totalorder %s28, 2
      %p86 = por %p84, %p85
      %p88 = scmp.ne.s32.totalorder %s73, %s87
      %p89 = scmp.eq.s32.totalorder %s28, 0
      %p90 = por %p88, %p89
      %s92 = sadd.s32 %s91, 1
      %p95 = scmp.eq.s32.totalorder %s22, 2
      %p96 = scmp.ne.s32.totalorder %s91, %s93
      %p97 = scmp.eq.s32.totalorder %s22, 0
      %p98 = por %p96, %p97
      %p99 = scmp.ne.s32.totalorder %s91, %s93
      %p100 = scmp.eq.s32.totalorder %s27, 2
      %p101 = por %p99, %p100
      %p102 = scmp.ne.s32.totalorder %s93, %s94
      %p103 = scmp.eq.s32.totalorder %s27, 0
      %p104 = por %p102, %p103
      %p105 = scmp.ne.s32.totalorder %s93, %s94
      %p106 = scmp.eq.s32.totalorder %s28, 2
      %p107 = por %p105, %p106
      %p109 = scmp.ne.s32.totalorder %s94, %s108
      %p110 = scmp.eq.s32.totalorder %s28, 0
      %p111 = por %p109, %p110
      %s113 = sadd.s32 %s112, 1
      %p116 = scmp.eq.s32.totalorder %s22, 2
      %p117 = scmp.ne.s32.totalorder %s112, %s114
      %p118 = scmp.eq.s32.totalorder %s22, 0
      %p119 = por %p117, %p118
      %p120 = scmp.ne.s32.totalorder %s112, %s114
      %p121 = scmp.eq.s32.totalorder %s27, 2
      %p122 = por %p120, %p121
      %p123 = scmp.ne.s32.totalorder %s114, %s115
      %p124 = scmp.eq.s32.totalorder %s27, 0
      %p125 = por %p123, %p124
      %p126 = scmp.ne.s32.totalorder %s114, %s115
      %p127 = scmp.eq.s32.totalorder %s28, 2
      %p128 = por %p126, %p127
      %p130 = scmp.ne.s32.totalorder %s115, %s129
      %p131 = scmp.eq.s32.totalorder %s28, 0
      %p132 = por %p130, %p131
      %s134 = sadd.s32 %s133, 1
      %p137 = scmp.eq.s32.totalorder %s22, 2
      %p138 = scmp.ne.s32.totalorder %s133, %s135
      %p139 = scmp.eq.s32.totalorder %s22, 0
      %p140 = por %p138, %p139
      %p141 = scmp.ne.s32.totalorder %s133, %s135
      %p142 = scmp.eq.s32.totalorder %s27, 2
      %p143 = por %p141, %p142
      %p144 = scmp.ne.s32.totalorder %s135, %s136
      %p145 = scmp.eq.s32.totalorder %s27, 0
      %p146 = por %p144, %p145
      %p147 = scmp.ne.s32.totalorder %s135, %s136
      %p148 = scmp.eq.s32.totalorder %s28, 2
      %p149 = por %p147, %p148
      %p151 = scmp.ne.s32.totalorder %s136, %s150
      %p152 = scmp.eq.s32.totalorder %s28, 0
      %p153 = por %p151, %p152
      %s155 = sadd.s32 %s154, 1
      %p158 = scmp.eq.s32.totalorder %s22, 2
      %p159 = scmp.ne.s32.totalorder %s154, %s156
      %p160 = scmp.eq.s32.totalorder %s22, 0
      %p161 = por %p159, %p160
      %p162 = scmp.ne.s32.totalorder %s154, %s156
      %p163 = scmp.eq.s32.totalorder %s27, 2
      %p164 = por %p162, %p163
      %p165 = scmp.ne.s32.totalorder %s156, %s157
      %p166 = scmp.eq.s32.totalorder %s27, 0
      %p167 = por %p165, %p166
      %p168 = scmp.ne.s32.totalorder %s156, %s157
      %p169 = scmp.eq.s32.totalorder %s28, 2
      %p170 = por %p168, %p169
      %p172 = scmp.ne.s32.totalorder %s157, %s171
      %p173 = scmp.eq.s32.totalorder %s28, 0
      %p174 = por %p172, %p173
      %s176 = sadd.s32 %s175, 1
      %p179 = scmp.eq.s32.totalorder %s22, 2
      %p180 = scmp.ne.s32.totalorder %s175, %s177
      %p181 = scmp.eq.s32.totalorder %s22, 0
      %p182 = por %p180, %p181
      %p183 = scmp.ne.s32.totalorder %s175, %s177
      %p184 = scmp.eq.s32.totalorder %s27, 2
      %p185 = por %p183, %p184
      %p186 = scmp.ne.s32.totalorder %s177, %s178
      %p187 = scmp.eq.s32.totalorder %s27, 0
      %p188 = por %p186, %p187
      %p189 = scmp.ne.s32.totalorder %s177, %s178
      %p190 = scmp.eq.s32.totalorder %s28, 2
      %p191 = por %p189, %p190
      %p193 = scmp.ne.s32.totalorder %s178, %s192
      %p194 = scmp.eq.s32.totalorder %s28, 0
      %p195 = por %p193, %p194
      %s197 = sadd.s32 %s196, 1
      %p200 = scmp.eq.s32.totalorder %s22, 2
      %p201 = scmp.ne.s32.totalorder %s196, %s198
      %p202 = scmp.eq.s32.totalorder %s22, 0
      %p203 = por %p201, %p202
      %p204 = scmp.ne.s32.totalorder %s196, %s198
      %p205 = scmp.eq.s32.totalorder %s27, 2
      %p206 = por %p204, %p205
      %p207 = scmp.ne.s32.totalorder %s198, %s199
      %p208 = scmp.eq.s32.totalorder %s27, 0
      %p209 = por %p207, %p208
      %p210 = scmp.ne.s32.totalorder %s198, %s199
      %p211 = scmp.eq.s32.totalorder %s28, 2
      %p212 = por %p210, %p211
      %p214 = scmp.ne.s32.totalorder %s199, %s213
      %p215 = scmp.eq.s32.totalorder %s28, 0
      %p216 = por %p214, %p215
      %s218 = sadd.s32 %s217, 1
      %p221 = scmp.eq.s32.totalorder %s22, 2
      %p222 = scmp.ne.s32.totalorder %s217, %s219
      %p223 = scmp.eq.s32.totalorder %s22, 0
      %p224 = por %p222, %p223
      %p225 = scmp.ne.s32.totalorder %s217, %s219
      %p226 = scmp.eq.s32.totalorder %s27, 2
      %p227 = por %p225, %p226
      %p228 = scmp.ne.s32.totalorder %s219, %s220
      %p229 = scmp.eq.s32.totalorder %s27, 0
      %p230 = por %p228, %p229
      %p231 = scmp.ne.s32.totalorder %s219, %s220
      %p232 = scmp.eq.s32.totalorder %s28, 2
      %p233 = por %p231, %p232
      %p235 = scmp.ne.s32.totalorder %s220, %s234
      %p236 = scmp.eq.s32.totalorder %s28, 0
      %p237 = por %p235, %p236
      %s239 = sadd.s32 %s238, 1
      %p242 = scmp.eq.s32.totalorder %s22, 2
      %p243 = scmp.ne.s32.totalorder %s238, %s240
      %p244 = scmp.eq.s32.totalorder %s22, 0
      %p245 = por %p243, %p244
      %p246 = scmp.ne.s32.totalorder %s238, %s240
      %p247 = scmp.eq.s32.totalorder %s27, 2
      %p248 = por %p246, %p247
      %p249 = scmp.ne.s32.totalorder %s240, %s241
      %p250 = scmp.eq.s32.totalorder %s27, 0
      %p251 = por %p249, %p250
      %p252 = scmp.ne.s32.totalorder %s240, %s241
      %p253 = scmp.eq.s32.totalorder %s28, 2
      %p254 = por %p252, %p253
      %p256 = scmp.ne.s32.totalorder %s241, %s255
      %p257 = scmp.eq.s32.totalorder %s28, 0
      %p258 = por %p256, %p257
      %s260 = sadd.s32 %s259, 1
      %p263 = scmp.eq.s32.totalorder %s22, 2
      %p264 = scmp.ne.s32.totalorder %s259, %s261
      %p265 = scmp.eq.s32.totalorder %s22, 0
      %p266 = por %p264, %p265
      %p267 = scmp.ne.s32.totalorder %s259, %s261
      %p268 = scmp.eq.s32.totalorder %s27, 2
      %p269 = por %p267, %p268
      %p270 = scmp.ne.s32.totalorder %s261, %s262
      %p271 = scmp.eq.s32.totalorder %s27, 0
      %p272 = por %p270, %p271
      %p273 = scmp.ne.s32.totalorder %s261, %s262
      %p274 = scmp.eq.s32.totalorder %s28, 2
      %p275 = por %p273, %p274
      %p277 = scmp.ne.s32.totalorder %s262, %s276
      %p278 = scmp.eq.s32.totalorder %s28, 0
      %p279 = por %p277, %p278
      %s281 = sadd.s32 %s280, 1
      %p284 = scmp.eq.s32.totalorder %s22, 2
      %p285 = scmp.ne.s32.totalorder %s280, %s282
      %p286 = scmp.eq.s32.totalorder %s22, 0
      %p287 = por %p285, %p286
      %p288 = scmp.ne.s32.totalorder %s280, %s282
      %p289 = scmp.eq.s32.totalorder %s27, 2
      %p290 = por %p288, %p289
      %p291 = scmp.ne.s32.totalorder %s282, %s283
      %p292 = scmp.eq.s32.totalorder %s27, 0
      %p293 = por %p291, %p292
      %p294 = scmp.ne.s32.totalorder %s282, %s283
      %p295 = scmp.eq.s32.totalorder %s28, 2
      %p296 = por %p294, %p295
      %p298 = scmp.ne.s32.totalorder %s283, %s297
      %p299 = scmp.eq.s32.totalorder %s28, 0
      %p300 = por %p298, %p299
      %s302 = sadd.s32 %s301, 1
      %p305 = scmp.eq.s32.totalorder %s22, 2
      %p306 = scmp.ne.s32.totalorder %s301, %s303
      %p307 = scmp.eq.s32.totalorder %s22, 0
      %p308 = por %p306, %p307
      %p309 = scmp.ne.s32.totalorder %s301, %s303
      %p310 = scmp.eq.s32.totalorder %s27, 2
      %p311 = por %p309, %p310
      %p312 = scmp.ne.s32.totalorder %s303, %s304
      %p313 = scmp.eq.s32.totalorder %s27, 0
      %p314 = por %p312, %p313
      %p315 = scmp.ne.s32.totalorder %s303, %s304
      %p316 = scmp.eq.s32.totalorder %s28, 2
      %p317 = por %p315, %p316
      %p319 = scmp.ne.s32.totalorder %s304, %s318
      %p320 = scmp.eq.s32.totalorder %s28, 0
      %p321 = por %p319, %p320
      %s322 = ssub.s32 %s29, %s41
      %p323 = scmp.eq.s32.totalorder %s322, 0
      %s325 = sadd.s32 %s324, 1
      %s326 = scalar_select %p323, %s324, %s325
      %p329 = pneg %p323
      %p330 = scmp.eq.s32.totalorder %s22, 2
      %p331 = por %p329, %p330
      %p332 = scmp.ne.s32.totalorder %s324, %s327
      %p333 = scmp.eq.s32.totalorder %s22, 0
      %p334 = por %p332, %p333
      %p335 = scmp.ne.s32.totalorder %s324, %s327
      %p336 = scmp.eq.s32.totalorder %s27, 2
      %p337 = por %p335, %p336
      %p338 = scmp.ne.s32.totalorder %s327, %s328
      %p339 = scmp.eq.s32.totalorder %s27, 0
      %p340 = por %p338, %p339
      %p341 = scmp.ne.s32.totalorder %s327, %s328
      %p342 = scmp.eq.s32.totalorder %s28, 2
      %p343 = por %p341, %p342
      %p345 = scmp.ne.s32.totalorder %s328, %s344
      %p346 = scmp.eq.s32.totalorder %s28, 0
      %p347 = por %p345, %p346
      %p348 = scmp.le.s32.totalorder 1, %s22
      %p349 = scmp.lt.s32.totalorder %s22, 4
      %p350 = pnand %p348, %p349
      %p351 = pneg %p350
      // Predicated region
      $region9: #{tpu_custom_call.1} parent=5 // pred_check
        _
      $region10: #{tpu_custom_call.1} parent=5 // pred_check_branch
        %353 = sbr.rel (%p350) target = $region12
      $region11: #{tpu_custom_call.1} parent=5 // pred_region
        %s354 = ssub.s32 %s22, 1
        // Predicated region
        $region13: #{tpu_custom_call.1} parent=11 // pred_check
          %p355 = pneg %p83
        $region14: #{tpu_custom_call.1} parent=11 // pred_check_branch
          %357 = sbr.rel (%p355) target = $region16
        $region15: #{tpu_custom_call.1} parent=11 // pred_region
          _
        $region16: #{tpu_custom_call.1} parent=11 // pred_fallthru
          _
        // Predicated region
        $region17: #{tpu_custom_call.1} parent=11 // pred_check
          %p358 = pneg %p104
        $region18: #{tpu_custom_call.1} parent=11 // pred_check_branch
          %360 = sbr.rel (%p358) target = $region20
        $region19: #{tpu_custom_call.1} parent=11 // pred_region
          _
        $region20: #{tpu_custom_call.1} parent=11 // pred_fallthru
          _
        // Predicated region
        $region21: #{tpu_custom_call.1} parent=11 // pred_check
          %p361 = pneg %p125
        $region22: #{tpu_custom_call.1} parent=11 // pred_check_branch
          %363 = sbr.rel (%p361) target = $region24
        $region23: #{tpu_custom_call.1} parent=11 // pred_region
          _
        $region24: #{tpu_custom_call.1} parent=11 // pred_fallthru
          _
        // Predicated region
        $region25: #{tpu_custom_call.1} parent=11 // pred_check
          %p364 = pneg %p146
        $region26: #{tpu_custom_call.1} parent=11 // pred_check_branch
          %366 = sbr.rel (%p364) target = $region28
        $region27: #{tpu_custom_call.1} parent=11 // pred_region
          _
        $region28: #{tpu_custom_call.1} parent=11 // pred_fallthru
          _
        // Predicated region
        $region29: #{tpu_custom_call.1} parent=11 // pred_check
          %p367 = pneg %p167
        $region30: #{tpu_custom_call.1} parent=11 // pred_check_branch
          %369 = sbr.rel (%p367) target = $region32
        $region31: #{tpu_custom_call.1} parent=11 // pred_region
          _
        $region32: #{tpu_custom_call.1} parent=11 // pred_fallthru
          _
        // Predicated region
        $region33: #{tpu_custom_call.1} parent=11 // pred_check
          %p370 = pneg %p188
        $region34: #{tpu_custom_call.1} parent=11 // pred_check_branch
          %372 = sbr.rel (%p370) target = $region36
        $region35: #{tpu_custom_call.1} parent=11 // pred_region
          _
        $region36: #{tpu_custom_call.1} parent=11 // pred_fallthru
          _
        // Predicated region
        $region37: #{tpu_custom_call.1} parent=11 // pred_check
          %p373 = pneg %p209
        $region38: #{tpu_custom_call.1} parent=11 // pred_check_branch
          %375 = sbr.rel (%p373) target = $region40
        $region39: #{tpu_custom_call.1} parent=11 // pred_region
          %s377 = ssub.s32 32768, 32768
          %378 = vsyncadd [#allocation5], %s377
          %s379 = sshll.u32 [#allocation4], 4
          %s380 = int_to_ptr.vmem [resolvable:$true] %s379
          %385 = dma.hbm_to_vmem [thread:$0]  %s7, 32768, %s380, [#allocation5], 256, 256, 16
        $region40: #{tpu_custom_call.1} parent=11 // pred_fallthru
          _
        // Predicated region
        $region41: #{tpu_custom_call.1} parent=11 // pred_check
          %p386 = pneg %p230
        $region42: #{tpu_custom_call.1} parent=11 // pred_check_branch
          %388 = sbr.rel (%p386) target = $region44
        $region43: #{tpu_custom_call.1} parent=11 // pred_region
          _
        $region44: #{tpu_custom_call.1} parent=11 // pred_fallthru
          _
        // Predicated region
        $region45: #{tpu_custom_call.1} parent=11 // pred_check
          %p389 = pneg %p251
        $region46: #{tpu_custom_call.1} parent=11 // pred_check_branch
          %391 = sbr.rel (%p389) target = $region48
        $region47: #{tpu_custom_call.1} parent=11 // pred_region
          %s393 = ssub.s32 8192, 8192
          %394 = vsyncadd [#allocation8], %s393
          %s395 = sshll.u32 [#allocation7], 4
          %s396 = int_to_ptr.vmem [resolvable:$true] %s395
          %401 = dma.hbm_to_vmem [thread:$0]  %s9, 8192, %s396, [#allocation8], 128, 128, 8
        $region48: #{tpu_custom_call.1} parent=11 // pred_fallthru
          _
        // Predicated region
        $region49: #{tpu_custom_call.1} parent=11 // pred_check
          %p402 = pneg %p272
        $region50: #{tpu_custom_call.1} parent=11 // pred_check_branch
          %404 = sbr.rel (%p402) target = $region52
        $region51: #{tpu_custom_call.1} parent=11 // pred_region
          _
        $region52: #{tpu_custom_call.1} parent=11 // pred_fallthru
          _
        // Predicated region
        $region53: #{tpu_custom_call.1} parent=11 // pred_check
          %p405 = pneg %p293
        $region54: #{tpu_custom_call.1} parent=11 // pred_check_branch
          %407 = sbr.rel (%p405) target = $region56
        $region55: #{tpu_custom_call.1} parent=11 // pred_region
          _
        $region56: #{tpu_custom_call.1} parent=11 // pred_fallthru
          _
        // Predicated region
        $region57: #{tpu_custom_call.1} parent=11 // pred_check
          %p408 = pneg %p314
        $region58: #{tpu_custom_call.1} parent=11 // pred_check_branch
          %410 = sbr.rel (%p408) target = $region60
        $region59: #{tpu_custom_call.1} parent=11 // pred_region
          _
        $region60: #{tpu_custom_call.1} parent=11 // pred_fallthru
          _
      $region12: #{tpu_custom_call.1} parent=5 // pred_fallthru
        _
      %p411 = scmp.lt.s32.totalorder %s22, 3
      // Predicated region
      $region61: #{tpu_custom_call.1} parent=5 // pred_check
        %p412 = pneg %p411
      $region62: #{tpu_custom_call.1} parent=5 // pred_check_branch
        %414 = sbr.rel (%p412) target = $region64
      $region63: #{tpu_custom_call.1} parent=5 // pred_region
        // Predicated region
        $region65: #{tpu_custom_call.1} parent=63 // pred_check
          %p415 = pneg %p56
        $region66: #{tpu_custom_call.1} parent=63 // pred_check_branch
          %417 = sbr.rel (%p415) target = $region68
        $region67: #{tpu_custom_call.1} parent=63 // pred_region
          %s418 = sand.u32 %s46, 1
          %s419 = sand.u32 %s46, 1
          %s420 = smul.addr %s419, 256
          %s421 = scalar_lea.vmem [#allocation3], %s420
          %s422 = smul.u32 2, %s29
          %s423 = smul.u32 16, %s30
          %s424 = smul.addr %s422, 48
          %s425 = sadd.s32 %s423, %s424
          %s426 = smul.addr %s425, 8
          %s427 = scalar_lea.vmem %s0, %s426
          // Predicated region
          $region69: #{tpu_custom_call.1} parent=67 // pred_check
            _
          $region70: #{tpu_custom_call.1} parent=67 // pred_check_branch
            %429 = sbr.rel (0) target = $region72
          $region71: #{tpu_custom_call.1} parent=67 // pred_region
            // Predicated region
            $region73: #{tpu_custom_call.1} parent=71 // pred_check
              _
            $region74: #{tpu_custom_call.1} parent=71 // pred_check_branch
              %431 = sbr.rel (0) target = $region76
            $region75: #{tpu_custom_call.1} parent=71 // pred_region
              // Predicated region
              $region88: #{tpu_custom_call.1} parent=75 // pred_check
                _
              $region89: #{tpu_custom_call.1} parent=75 // pred_check_branch
                %509 = sbr.rel (0) target = $region91
              $region90: #{tpu_custom_call.1} parent=75 // pred_region
                loop: start=0, step=1, limit=1
                $region92: #{tpu_custom_call.1} parent=90 // loop_pre_header
                  _
                $region93: #{tpu_custom_call.1} parent=90 // loop_header
                  %s511 = sphi 0, %s515
                  %p512 = scmp.ge.s32.totalorder %s511, 1
                  %s516 = sphi %s427, %s427
                  %s517 = sphi %s421, %s421
                $region94: #{tpu_custom_call.1} parent=90 // loop_header_branch
                  %514 = sbr.rel (%p512) target = $region98
                $region95: #{tpu_custom_call.1} parent=90 // loop_body
                  %v518 = vld [vmem:[%s516] sm:$0xff]
                  %519 = vst [vmem:[%s517] sm:$0xff] %v518
                  %v520 = vld [vmem:[%s516 + $0x8] sm:$0xff]
                  %521 = vst [vmem:[%s517 + $0x8] sm:$0xff] %v520
                  %v522 = vld [vmem:[%s516 + $0x10] sm:$0xff]
                  %523 = vst [vmem:[%s517 + $0x10] sm:$0xff] %v522
                  %v524 = vld [vmem:[%s516 + $0x18] sm:$0xff]
                  %525 = vst [vmem:[%s517 + $0x18] sm:$0xff] %v524
                  %v526 = vld [vmem:[%s516 + $0x20] sm:$0xff]
                  %527 = vst [vmem:[%s517 + $0x20] sm:$0xff] %v526
                  %v528 = vld [vmem:[%s516 + $0x28] sm:$0xff]
                  %529 = vst [vmem:[%s517 + $0x28] sm:$0xff] %v528
                  %v530 = vld [vmem:[%s516 + $0x30] sm:$0xff]
                  %531 = vst [vmem:[%s517 + $0x30] sm:$0xff] %v530
                  %v532 = vld [vmem:[%s516 + $0x38] sm:$0xff]
                  %533 = vst [vmem:[%s517 + $0x38] sm:$0xff] %v532
                  %v534 = vld [vmem:[%s516 + $0x40] sm:$0xff]
                  %535 = vst [vmem:[%s517 + $0x40] sm:$0xff] %v534
                  %v536 = vld [vmem:[%s516 + $0x48] sm:$0xff]
                  %537 = vst [vmem:[%s517 + $0x48] sm:$0xff] %v536
                  %v538 = vld [vmem:[%s516 + $0x50] sm:$0xff]
                  %539 = vst [vmem:[%s517 + $0x50] sm:$0xff] %v538
                  %v540 = vld [vmem:[%s516 + $0x58] sm:$0xff]
                  %541 = vst [vmem:[%s517 + $0x58] sm:$0xff] %v540
                  %v542 = vld [vmem:[%s516 + $0x60] sm:$0xff]
                  %543 = vst [vmem:[%s517 + $0x60] sm:$0xff] %v542
                  %v544 = vld [vmem:[%s516 + $0x68] sm:$0xff]
                  %545 = vst [vmem:[%s517 + $0x68] sm:$0xff] %v544
                  %v546 = vld [vmem:[%s516 + $0x70] sm:$0xff]
                  %547 = vst [vmem:[%s517 + $0x70] sm:$0xff] %v546
                  %v548 = vld [vmem:[%s516 + $0x78] sm:$0xff]
                  %549 = vst [vmem:[%s517 + $0x78] sm:$0xff] %v548
                  %v550 = vld [vmem:[%s516 + $0x180] sm:$0xff]
                  %551 = vst [vmem:[%s517 + $0x80] sm:$0xff] %v550
                  %v552 = vld [vmem:[%s516 + $0x188] sm:$0xff]
                  %553 = vst [vmem:[%s517 + $0x88] sm:$0xff] %v552
                  %v554 = vld [vmem:[%s516 + $0x190] sm:$0xff]
                  %555 = vst [vmem:[%s517 + $0x90] sm:$0xff] %v554
                  %v556 = vld [vmem:[%s516 + $0x198] sm:$0xff]
                  %557 = vst [vmem:[%s517 + $0x98] sm:$0xff] %v556
                  %v558 = vld [vmem:[%s516 + $0x1a0] sm:$0xff]
                  %559 = vst [vmem:[%s517 + $0xa0] sm:$0xff] %v558
                  %v560 = vld [vmem:[%s516 + $0x1a8] sm:$0xff]
                  %561 = vst [vmem:[%s517 + $0xa8] sm:$0xff] %v560
                  %v562 = vld [vmem:[%s516 + $0x1b0] sm:$0xff]
                  %563 = vst [vmem:[%s517 + $0xb0] sm:$0xff] %v562
                  %v564 = vld [vmem:[%s516 + $0x1b8] sm:$0xff]
                  %565 = vst [vmem:[%s517 + $0xb8] sm:$0xff] %v564
                  %v566 = vld [vmem:[%s516 + $0x1c0] sm:$0xff]
                  %567 = vst [vmem:[%s517 + $0xc0] sm:$0xff] %v566
                  %v568 = vld [vmem:[%s516 + $0x1c8] sm:$0xff]
                  %569 = vst [vmem:[%s517 + $0xc8] sm:$0xff] %v568
                  %v570 = vld [vmem:[%s516 + $0x1d0] sm:$0xff]
                  %571 = vst [vmem:[%s517 + $0xd0] sm:$0xff] %v570
                  %v572 = vld [vmem:[%s516 + $0x1d8] sm:$0xff]
                  %573 = vst [vmem:[%s517 + $0xd8] sm:$0xff] %v572
                  %v574 = vld [vmem:[%s516 + $0x1e0] sm:$0xff]
                  %575 = vst [vmem:[%s517 + $0xe0] sm:$0xff] %v574
                  %v576 = vld [vmem:[%s516 + $0x1e8] sm:$0xff]
                  %577 = vst [vmem:[%s517 + $0xe8] sm:$0xff] %v576
                  %v578 = vld [vmem:[%s516 + $0x1f0] sm:$0xff]
                  %579 = vst [vmem:[%s517 + $0xf0] sm:$0xff] %v578
                  %v580 = vld [vmem:[%s516 + $0x1f8] sm:$0xff]
                  %581 = vst [vmem:[%s517 + $0xf8] sm:$0xff] %v580
                $region96: #{tpu_custom_call.1} parent=90 // loop_footer
                  %s515 = sadd.s32 1, %s511
                $region97: #{tpu_custom_call.1} parent=90 // loop_footer_branch
                  %510 = sbr.rel target = $region93
                $region98: #{tpu_custom_call.1} parent=90 // loop_exit
                  _
              $region91: #{tpu_custom_call.1} parent=75 // pred_fallthru
                _
              // Predicated region
              $region99: #{tpu_custom_call.1} parent=75 // pred_check
                _
              $region100: #{tpu_custom_call.1} parent=75 // pred_check_branch
                %583 = sbr.rel target = $region102
              $region101: #{tpu_custom_call.1} parent=75 // pred_region
                _
              $region102: #{tpu_custom_call.1} parent=75 // pred_fallthru
                _
            $region76: #{tpu_custom_call.1} parent=71 // pred_fallthru
              _
            // Predicated region
            $region77: #{tpu_custom_call.1} parent=71 // pred_check
              _
            $region78: #{tpu_custom_call.1} parent=71 // pred_check_branch
              %433 = sbr.rel target = $region80
            $region79: #{tpu_custom_call.1} parent=71 // pred_region
              %s435 = ssub.s32 256, 1
              loop: start=0, step=1, limit=1
              $region81: #{tpu_custom_call.1} parent=79 // loop_pre_header
                _
              $region82: #{tpu_custom_call.1} parent=79 // loop_header
                %s437 = sphi 0, %s441
                %p438 = scmp.ge.s32.totalorder %s437, 1
                %s442 = sphi %s427, %s427
                %s443 = sphi %s421, %s421
              $region83: #{tpu_custom_call.1} parent=79 // loop_header_branch
                %440 = sbr.rel (%p438) target = $region87
              $region84: #{tpu_custom_call.1} parent=79 // loop_body
                %v444 = vld [vmem:[%s442] sm:%s435]
                %445 = vst [vmem:[%s443] sm:%s435] %v444
                %v446 = vld [vmem:[%s442 + $0x8] sm:%s435]
                %447 = vst [vmem:[%s443 + $0x8] sm:%s435] %v446
                %v448 = vld [vmem:[%s442 + $0x10] sm:%s435]
                %449 = vst [vmem:[%s443 + $0x10] sm:%s435] %v448
                %v450 = vld [vmem:[%s442 + $0x18] sm:%s435]
                %451 = vst [vmem:[%s443 + $0x18] sm:%s435] %v450
                %v452 = vld [vmem:[%s442 + $0x20] sm:%s435]
                %453 = vst [vmem:[%s443 + $0x20] sm:%s435] %v452
                %v454 = vld [vmem:[%s442 + $0x28] sm:%s435]
                %455 = vst [vmem:[%s443 + $0x28] sm:%s435] %v454
                %v456 = vld [vmem:[%s442 + $0x30] sm:%s435]
                %457 = vst [vmem:[%s443 + $0x30] sm:%s435] %v456
                %v458 = vld [vmem:[%s442 + $0x38] sm:%s435]
                %459 = vst [vmem:[%s443 + $0x38] sm:%s435] %v458
                %v460 = vld [vmem:[%s442 + $0x40] sm:%s435]
                %461 = vst [vmem:[%s443 + $0x40] sm:%s435] %v460
                %v462 = vld [vmem:[%s442 + $0x48] sm:%s435]
                %463 = vst [vmem:[%s443 + $0x48] sm:%s435] %v462
                %v464 = vld [vmem:[%s442 + $0x50] sm:%s435]
                %465 = vst [vmem:[%s443 + $0x50] sm:%s435] %v464
                %v466 = vld [vmem:[%s442 + $0x58] sm:%s435]
                %467 = vst [vmem:[%s443 + $0x58] sm:%s435] %v466
                %v468 = vld [vmem:[%s442 + $0x60] sm:%s435]
                %469 = vst [vmem:[%s443 + $0x60] sm:%s435] %v468
                %v470 = vld [vmem:[%s442 + $0x68] sm:%s435]
                %471 = vst [vmem:[%s443 + $0x68] sm:%s435] %v470
                %v472 = vld [vmem:[%s442 + $0x70] sm:%s435]
                %473 = vst [vmem:[%s443 + $0x70] sm:%s435] %v472
                %v474 = vld [vmem:[%s442 + $0x78] sm:%s435]
                %475 = vst [vmem:[%s443 + $0x78] sm:%s435] %v474
                %v476 = vld [vmem:[%s442 + $0x180] sm:%s435]
                %477 = vst [vmem:[%s443 + $0x80] sm:%s435] %v476
                %v478 = vld [vmem:[%s442 + $0x188] sm:%s435]
                %479 = vst [vmem:[%s443 + $0x88] sm:%s435] %v478
                %v480 = vld [vmem:[%s442 + $0x190] sm:%s435]
                %481 = vst [vmem:[%s443 + $0x90] sm:%s435] %v480
                %v482 = vld [vmem:[%s442 + $0x198] sm:%s435]
                %483 = vst [vmem:[%s443 + $0x98] sm:%s435] %v482
                %v484 = vld [vmem:[%s442 + $0x1a0] sm:%s435]
                %485 = vst [vmem:[%s443 + $0xa0] sm:%s435] %v484
                %v486 = vld [vmem:[%s442 + $0x1a8] sm:%s435]
                %487 = vst [vmem:[%s443 + $0xa8] sm:%s435] %v486
                %v488 = vld [vmem:[%s442 + $0x1b0] sm:%s435]
                %489 = vst [vmem:[%s443 + $0xb0] sm:%s435] %v488
                %v490 = vld [vmem:[%s442 + $0x1b8] sm:%s435]
                %491 = vst [vmem:[%s443 + $0xb8] sm:%s435] %v490
                %v492 = vld [vmem:[%s442 + $0x1c0] sm:%s435]
                %493 = vst [vmem:[%s443 + $0xc0] sm:%s435] %v492
                %v494 = vld [vmem:[%s442 + $0x1c8] sm:%s435]
                %495 = vst [vmem:[%s443 + $0xc8] sm:%s435] %v494
                %v496 = vld [vmem:[%s442 + $0x1d0] sm:%s435]
                %497 = vst [vmem:[%s443 + $0xd0] sm:%s435] %v496
                %v498 = vld [vmem:[%s442 + $0x1d8] sm:%s435]
                %499 = vst [vmem:[%s443 + $0xd8] sm:%s435] %v498
                %v500 = vld [vmem:[%s442 + $0x1e0] sm:%s435]
                %501 = vst [vmem:[%s443 + $0xe0] sm:%s435] %v500
                %v502 = vld [vmem:[%s442 + $0x1e8] sm:%s435]
                %503 = vst [vmem:[%s443 + $0xe8] sm:%s435] %v502
                %v504 = vld [vmem:[%s442 + $0x1f0] sm:%s435]
                %505 = vst [vmem:[%s443 + $0xf0] sm:%s435] %v504
                %v506 = vld [vmem:[%s442 + $0x1f8] sm:%s435]
                %507 = vst [vmem:[%s443 + $0xf8] sm:%s435] %v506
              $region85: #{tpu_custom_call.1} parent=79 // loop_footer
                %s441 = sadd.s32 1, %s437
              $region86: #{tpu_custom_call.1} parent=79 // loop_footer_branch
                %436 = sbr.rel target = $region82
              $region87: #{tpu_custom_call.1} parent=79 // loop_exit
                _
            $region80: #{tpu_custom_call.1} parent=71 // pred_fallthru
              _
          $region72: #{tpu_custom_call.1} parent=67 // pred_fallthru
            _
          %584 = vnop
        $region68: #{tpu_custom_call.1} parent=63 // pred_fallthru
          _
      $region64: #{tpu_custom_call.1} parent=5 // pred_fallthru
        _
      %p585 = scmp.le.s32.totalorder 1, %s22
      %p586 = scmp.lt.s32.totalorder %s22, 4
      %p587 = pnand %p585, %p586
      %p588 = pneg %p587
      // Predicated region
      $region103: #{tpu_custom_call.1} parent=5 // pred_check
        _
      $region104: #{tpu_custom_call.1} parent=5 // pred_check_branch
        %590 = sbr.rel (%p587) target = $region106
      $region105: #{tpu_custom_call.1} parent=5 // pred_region
        %s591 = ssub.s32 %s22, 1
        %s592 = sand.u32 %s49, 1
        %s593 = sand.u32 %s49, 1
        %s594 = smul.addr %s593, 256
        %s595 = scalar_lea.vmem [#allocation3], %s594
        // Predicated region
        $region107: #{tpu_custom_call.1} parent=105 // pred_check
          %p596 = pneg %p62
        $region108: #{tpu_custom_call.1} parent=105 // pred_check_branch
          %598 = sbr.rel (%p596) target = $region110
        $region109: #{tpu_custom_call.1} parent=105 // pred_region
          _
        $region110: #{tpu_custom_call.1} parent=105 // pred_fallthru
          _
        // Predicated region
        $region111: #{tpu_custom_call.1} parent=105 // pred_check
          %p599 = pneg %p209
        $region112: #{tpu_custom_call.1} parent=105 // pred_check_branch
          %601 = sbr.rel (%p599) target = $region114
        $region113: #{tpu_custom_call.1} parent=105 // pred_region
          %602 = dma.done [#allocation5], 32768
        $region114: #{tpu_custom_call.1} parent=105 // pred_fallthru
          _
        // Predicated region
        $region115: #{tpu_custom_call.1} parent=105 // pred_check
          %p603 = pneg %p251
        $region116: #{tpu_custom_call.1} parent=105 // pred_check_branch
          %605 = sbr.rel (%p603) target = $region118
        $region117: #{tpu_custom_call.1} parent=105 // pred_region
          %606 = dma.done [#allocation8], 8192
        $region118: #{tpu_custom_call.1} parent=105 // pred_fallthru
          _
        %s607 = sand.u32 %s49, 1
        %s608 = sand.u32 %s49, 1
        %s609 = smul.addr %s608, 256
        %s610 = scalar_lea.vmem [#allocation3], %s609
        %p611 = pneg %p62
        %p612 = pneg %p59
        %p613 = pneg %p83
        %p614 = pneg %p80
        %p615 = pneg %p104
        %p616 = pneg %p101
        %p617 = pneg %p125
        %p618 = pneg %p122
        %p619 = pneg %p146
        %p620 = pneg %p143
        %p621 = pneg %p167
        %p622 = pneg %p164
        %p623 = pneg %p188
        %p624 = pneg %p185
        %p625 = pneg %p209
        %p626 = pneg %p206
        %p627 = pneg %p230
        %p628 = pneg %p227
        %p629 = pneg %p251
        %p630 = pneg %p248
        %p631 = pneg %p272
        %p632 = pneg %p269
        %p633 = pneg %p293
        %p634 = pneg %p290
        %p635 = pneg %p314
        %p636 = pneg %p311
        %p637 = pneg %p340
        %p638 = pneg %p337
        %s639 = smul.u32 2, %s31
        %s640 = smul.u32 16, %s32
        %s641 = smul.u32 2, %s31
        %p643 = scmp.eq.s32.totalorder %s32, 0
        // Predicated region
        $region119: #{tpu_custom_call.1} parent=105 // pred_check
          %p644 = pneg %p643
        $region120: #{tpu_custom_call.1} parent=105 // pred_check_branch
          %646 = sbr.rel (%p644) target = $region122
        $region121: #{tpu_custom_call.1} parent=105 // pred_region
          %647 = vst [vmem:[#allocation2] sm:$0xff] -inf
          %648 = vst [vmem:[#allocation2 + $0x8] sm:$0xff] -inf
        $region122: #{tpu_custom_call.1} parent=105 // pred_fallthru
          _
        %v649 = vld [vmem:[%s595] sm:$0xff]
        %v650 = vld [vmem:[%s595 + $0x8] sm:$0xff]
        %v651 = vld [vmem:[%s595 + $0x10] sm:$0xff]
        %v652 = vld [vmem:[%s595 + $0x18] sm:$0xff]
        %v653 = vld [vmem:[%s595 + $0x20] sm:$0xff]
        %v654 = vld [vmem:[%s595 + $0x28] sm:$0xff]
        %v655 = vld [vmem:[%s595 + $0x30] sm:$0xff]
        %v656 = vld [vmem:[%s595 + $0x38] sm:$0xff]
        %v657 = vld [vmem:[%s595 + $0x40] sm:$0xff]
        %v658 = vld [vmem:[%s595 + $0x48] sm:$0xff]
        %v659 = vld [vmem:[%s595 + $0x50] sm:$0xff]
        %v660 = vld [vmem:[%s595 + $0x58] sm:$0xff]
        %v661 = vld [vmem:[%s595 + $0x60] sm:$0xff]
        %v662 = vld [vmem:[%s595 + $0x68] sm:$0xff]
        %v663 = vld [vmem:[%s595 + $0x70] sm:$0xff]
        %v664 = vld [vmem:[%s595 + $0x78] sm:$0xff]
        %v665 = vld [vmem:[%s595 + $0x80] sm:$0xff]
        %v666 = vld [vmem:[%s595 + $0x88] sm:$0xff]
        %v667 = vld [vmem:[%s595 + $0x90] sm:$0xff]
        %v668 = vld [vmem:[%s595 + $0x98] sm:$0xff]
        %v669 = vld [vmem:[%s595 + $0xa0] sm:$0xff]
        %v670 = vld [vmem:[%s595 + $0xa8] sm:$0xff]
        %v671 = vld [vmem:[%s595 + $0xb0] sm:$0xff]
        %v672 = vld [vmem:[%s595 + $0xb8] sm:$0xff]
        %v673 = vld [vmem:[%s595 + $0xc0] sm:$0xff]
        %v674 = vld [vmem:[%s595 + $0xc8] sm:$0xff]
        %v675 = vld [vmem:[%s595 + $0xd0] sm:$0xff]
        %v676 = vld [vmem:[%s595 + $0xd8] sm:$0xff]
        %v677 = vld [vmem:[%s595 + $0xe0] sm:$0xff]
        %v678 = vld [vmem:[%s595 + $0xe8] sm:$0xff]
        %v679 = vld [vmem:[%s595 + $0xf0] sm:$0xff]
        %v680 = vld [vmem:[%s595 + $0xf8] sm:$0xff]
        %v681 = vld [vmem:[%s1] sm:$0x7]
        %683 = vset.pattern.permute.xlu0 0
        %684 = vperm.xlu0 %683, %v649
        %v685 = vpop.permute.xlu0 %684
        %688 = vset.pattern.permute.xlu0 0
        %689 = vperm.xlu0 %688, %v650
        %v690 = vpop.permute.xlu0 %689
        %693 = vset.pattern.permute.xlu0 0
        %694 = vperm.xlu0 %693, %v651
        %v695 = vpop.permute.xlu0 %694
        %698 = vset.pattern.permute.xlu0 0
        %699 = vperm.xlu0 %698, %v652
        %v700 = vpop.permute.xlu0 %699
        %703 = vset.pattern.permute.xlu0 0
        %704 = vperm.xlu0 %703, %v653
        %v705 = vpop.permute.xlu0 %704
        %708 = vset.pattern.permute.xlu0 0
        %709 = vperm.xlu0 %708, %v654
        %v710 = vpop.permute.xlu0 %709
        %713 = vset.pattern.permute.xlu0 0
        %714 = vperm.xlu0 %713, %v655
        %v715 = vpop.permute.xlu0 %714
        %718 = vset.pattern.permute.xlu0 0
        %719 = vperm.xlu0 %718, %v656
        %v720 = vpop.permute.xlu0 %719
        %723 = vset.pattern.permute.xlu0 0
        %724 = vperm.xlu0 %723, %v657
        %v725 = vpop.permute.xlu0 %724
        %728 = vset.pattern.permute.xlu0 0
        %729 = vperm.xlu0 %728, %v658
        %v730 = vpop.permute.xlu0 %729
        %733 = vset.pattern.permute.xlu0 0
        %734 = vperm.xlu0 %733, %v659
        %v735 = vpop.permute.xlu0 %734
        %738 = vset.pattern.permute.xlu0 0
        %739 = vperm.xlu0 %738, %v660
        %v740 = vpop.permute.xlu0 %739
        %743 = vset.pattern.permute.xlu0 0
        %744 = vperm.xlu0 %743, %v661
        %v745 = vpop.permute.xlu0 %744
        %748 = vset.pattern.permute.xlu0 0
        %749 = vperm.xlu0 %748, %v662
        %v750 = vpop.permute.xlu0 %749
        %753 = vset.pattern.permute.xlu0 0
        %754 = vperm.xlu0 %753, %v663
        %v755 = vpop.permute.xlu0 %754
        %758 = vset.pattern.permute.xlu0 0
        %759 = vperm.xlu0 %758, %v664
        %v760 = vpop.permute.xlu0 %759
        %763 = vset.pattern.permute.xlu0 0
        %764 = vperm.xlu0 %763, %v665
        %v765 = vpop.permute.xlu0 %764
        %768 = vset.pattern.permute.xlu0 0
        %769 = vperm.xlu0 %768, %v666
        %v770 = vpop.permute.xlu0 %769
        %773 = vset.pattern.permute.xlu0 0
        %774 = vperm.xlu0 %773, %v667
        %v775 = vpop.permute.xlu0 %774
        %778 = vset.pattern.permute.xlu0 0
        %779 = vperm.xlu0 %778, %v668
        %v780 = vpop.permute.xlu0 %779
        %783 = vset.pattern.permute.xlu0 0
        %784 = vperm.xlu0 %783, %v669
        %v785 = vpop.permute.xlu0 %784
        %788 = vset.pattern.permute.xlu0 0
        %789 = vperm.xlu0 %788, %v670
        %v790 = vpop.permute.xlu0 %789
        %793 = vset.pattern.permute.xlu0 0
        %794 = vperm.xlu0 %793, %v671
        %v795 = vpop.permute.xlu0 %794
        %798 = vset.pattern.permute.xlu0 0
        %799 = vperm.xlu0 %798, %v672
        %v800 = vpop.permute.xlu0 %799
        %803 = vset.pattern.permute.xlu0 0
        %804 = vperm.xlu0 %803, %v673
        %v805 = vpop.permute.xlu0 %804
        %808 = vset.pattern.permute.xlu0 0
        %809 = vperm.xlu0 %808, %v674
        %v810 = vpop.permute.xlu0 %809
        %813 = vset.pattern.permute.xlu0 0
        %814 = vperm.xlu0 %813, %v675
        %v815 = vpop.permute.xlu0 %814
        %818 = vset.pattern.permute.xlu0 0
        %819 = vperm.xlu0 %818, %v676
        %v820 = vpop.permute.xlu0 %819
        %823 = vset.pattern.permute.xlu0 0
        %824 = vperm.xlu0 %823, %v677
        %v825 = vpop.permute.xlu0 %824
        %828 = vset.pattern.permute.xlu0 0
        %829 = vperm.xlu0 %828, %v678
        %v830 = vpop.permute.xlu0 %829
        %833 = vset.pattern.permute.xlu0 0
        %834 = vperm.xlu0 %833, %v679
        %v835 = vpop.permute.xlu0 %834
        %838 = vset.pattern.permute.xlu0 0
        %839 = vperm.xlu0 %838, %v680
        %v840 = vpop.permute.xlu0 %839
        %v842 = vlaneseq
        %v843 = vshrl.u32 %v842, 7
        %v844 = vsub.s32 0, %v843
        %v845 = vrot.slane %v681, %v844
        %v846 = vmul.f32 %v685, %v845
        %v847 = vmul.f32 %v690, %v845
        %v848 = vmul.f32 %v695, %v845
        %v849 = vmul.f32 %v700, %v845
        %v850 = vmul.f32 %v705, %v845
        %v851 = vmul.f32 %v710, %v845
        %v852 = vmul.f32 %v715, %v845
        %v853 = vmul.f32 %v720, %v845
        %v854 = vmul.f32 %v725, %v845
        %v855 = vmul.f32 %v730, %v845
        %v856 = vmul.f32 %v735, %v845
        %v857 = vmul.f32 %v740, %v845
        %v858 = vmul.f32 %v745, %v845
        %v859 = vmul.f32 %v750, %v845
        %v860 = vmul.f32 %v755, %v845
        %v861 = vmul.f32 %v760, %v845
        %v862 = vmul.f32 %v765, %v845
        %v863 = vmul.f32 %v770, %v845
        %v864 = vmul.f32 %v775, %v845
        %v865 = vmul.f32 %v780, %v845
        %v866 = vmul.f32 %v785, %v845
        %v867 = vmul.f32 %v790, %v845
        %v868 = vmul.f32 %v795, %v845
        %v869 = vmul.f32 %v800, %v845
        %v870 = vmul.f32 %v805, %v845
        %v871 = vmul.f32 %v810, %v845
        %v872 = vmul.f32 %v815, %v845
        %v873 = vmul.f32 %v820, %v845
        %v874 = vmul.f32 %v825, %v845
        %v875 = vmul.f32 %v830, %v845
        %v876 = vmul.f32 %v835, %v845
        %v877 = vmul.f32 %v840, %v845
        %878 = vset.pattern.permute.xlu0 1
        %879 = vperm.xlu0 %878, %v649
        %v880 = vpop.permute.xlu0 %879
        %882 = vset.pattern.permute.xlu0 1
        %883 = vperm.xlu0 %882, %v650
        %v884 = vpop.permute.xlu0 %883
        %886 = vset.pattern.permute.xlu0 1
        %887 = vperm.xlu0 %886, %v651
        %v888 = vpop.permute.xlu0 %887
        %890 = vset.pattern.permute.xlu0 1
        %891 = vperm.xlu0 %890, %v652
        %v892 = vpop.permute.xlu0 %891
        %894 = vset.pattern.permute.xlu0 1
        %895 = vperm.xlu0 %894, %v653
        %v896 = vpop.permute.xlu0 %895
        %898 = vset.pattern.permute.xlu0 1
        %899 = vperm.xlu0 %898, %v654
        %v900 = vpop.permute.xlu0 %899
        %902 = vset.pattern.permute.xlu0 1
        %903 = vperm.xlu0 %902, %v655
        %v904 = vpop.permute.xlu0 %903
        %906 = vset.pattern.permute.xlu0 1
        %907 = vperm.xlu0 %906, %v656
        %v908 = vpop.permute.xlu0 %907
        %910 = vset.pattern.permute.xlu0 1
        %911 = vperm.xlu0 %910, %v657
        %v912 = vpop.permute.xlu0 %911
        %914 = vset.pattern.permute.xlu0 1
        %915 = vperm.xlu0 %914, %v658
        %v916 = vpop.permute.xlu0 %915
        %918 = vset.pattern.permute.xlu0 1
        %919 = vperm.xlu0 %918, %v659
        %v920 = vpop.permute.xlu0 %919
        %922 = vset.pattern.permute.xlu0 1
        %923 = vperm.xlu0 %922, %v660
        %v924 = vpop.permute.xlu0 %923
        %926 = vset.pattern.permute.xlu0 1
        %927 = vperm.xlu0 %926, %v661
        %v928 = vpop.permute.xlu0 %927
        %930 = vset.pattern.permute.xlu0 1
        %931 = vperm.xlu0 %930, %v662
        %v932 = vpop.permute.xlu0 %931
        %934 = vset.pattern.permute.xlu0 1
        %935 = vperm.xlu0 %934, %v663
        %v936 = vpop.permute.xlu0 %935
        %938 = vset.pattern.permute.xlu0 1
        %939 = vperm.xlu0 %938, %v664
        %v940 = vpop.permute.xlu0 %939
        %942 = vset.pattern.permute.xlu0 1
        %943 = vperm.xlu0 %942, %v665
        %v944 = vpop.permute.xlu0 %943
        %946 = vset.pattern.permute.xlu0 1
        %947 = vperm.xlu0 %946, %v666
        %v948 = vpop.permute.xlu0 %947
        %950 = vset.pattern.permute.xlu0 1
        %951 = vperm.xlu0 %950, %v667
        %v952 = vpop.permute.xlu0 %951
        %954 = vset.pattern.permute.xlu0 1
        %955 = vperm.xlu0 %954, %v668
        %v956 = vpop.permute.xlu0 %955
        %958 = vset.pattern.permute.xlu0 1
        %959 = vperm.xlu0 %958, %v669
        %v960 = vpop.permute.xlu0 %959
        %962 = vset.pattern.permute.xlu0 1
        %963 = vperm.xlu0 %962, %v670
        %v964 = vpop.permute.xlu0 %963
        %966 = vset.pattern.permute.xlu0 1
        %967 = vperm.xlu0 %966, %v671
        %v968 = vpop.permute.xlu0 %967
        %970 = vset.pattern.permute.xlu0 1
        %971 = vperm.xlu0 %970, %v672
        %v972 = vpop.permute.xlu0 %971
        %974 = vset.pattern.permute.xlu0 1
        %975 = vperm.xlu0 %974, %v673
        %v976 = vpop.permute.xlu0 %975
        %978 = vset.pattern.permute.xlu0 1
        %979 = vperm.xlu0 %978, %v674
        %v980 = vpop.permute.xlu0 %979
        %982 = vset.pattern.permute.xlu0 1
        %983 = vperm.xlu0 %982, %v675
        %v984 = vpop.permute.xlu0 %983
        %986 = vset.pattern.permute.xlu0 1
        %987 = vperm.xlu0 %986, %v676
        %v988 = vpop.permute.xlu0 %987
        %990 = vset.pattern.permute.xlu0 1
        %991 = vperm.xlu0 %990, %v677
        %v992 = vpop.permute.xlu0 %991
        %994 = vset.pattern.permute.xlu0 1
        %995 = vperm.xlu0 %994, %v678
        %v996 = vpop.permute.xlu0 %995
        %998 = vset.pattern.permute.xlu0 1
        %999 = vperm.xlu0 %998, %v679
        %v1000 = vpop.permute.xlu0 %999
        %1002 = vset.pattern.permute.xlu0 1
        %1003 = vperm.xlu0 %1002, %v680
        %v1004 = vpop.permute.xlu0 %1003
        %v1006 = vlaneseq
        %v1007 = vshrl.u32 %v1006, 7
        %v1008 = vsub.s32 1, %v1007
        %v1009 = vrot.slane %v681, %v1008
        %v1010 = vmul.f32 %v880, %v1009
        %v1011 = vmul.f32 %v884, %v1009
        %v1012 = vmul.f32 %v888, %v1009
        %v1013 = vmul.f32 %v892, %v1009
        %v1014 = vmul.f32 %v896, %v1009
        %v1015 = vmul.f32 %v900, %v1009
        %v1016 = vmul.f32 %v904, %v1009
        %v1017 = vmul.f32 %v908, %v1009
        %v1018 = vmul.f32 %v912, %v1009
        %v1019 = vmul.f32 %v916, %v1009
        %v1020 = vmul.f32 %v920, %v1009
        %v1021 = vmul.f32 %v924, %v1009
        %v1022 = vmul.f32 %v928, %v1009
        %v1023 = vmul.f32 %v932, %v1009
        %v1024 = vmul.f32 %v936, %v1009
        %v1025 = vmul.f32 %v940, %v1009
        %v1026 = vmul.f32 %v944, %v1009
        %v1027 = vmul.f32 %v948, %v1009
        %v1028 = vmul.f32 %v952, %v1009
        %v1029 = vmul.f32 %v956, %v1009
        %v1030 = vmul.f32 %v960, %v1009
        %v1031 = vmul.f32 %v964, %v1009
        %v1032 = vmul.f32 %v968, %v1009
        %v1033 = vmul.f32 %v972, %v1009
        %v1034 = vmul.f32 %v976, %v1009
        %v1035 = vmul.f32 %v980, %v1009
        %v1036 = vmul.f32 %v984, %v1009
        %v1037 = vmul.f32 %v988, %v1009
        %v1038 = vmul.f32 %v992, %v1009
        %v1039 = vmul.f32 %v996, %v1009
        %v1040 = vmul.f32 %v1000, %v1009
        %v1041 = vmul.f32 %v1004, %v1009
        %v1042 = vadd.f32 %v846, %v1010
        %v1043 = vadd.f32 %v847, %v1011
        %v1044 = vadd.f32 %v848, %v1012
        %v1045 = vadd.f32 %v849, %v1013
        %v1046 = vadd.f32 %v850, %v1014
        %v1047 = vadd.f32 %v851, %v1015
        %v1048 = vadd.f32 %v852, %v1016
        %v1049 = vadd.f32 %v853, %v1017
        %v1050 = vadd.f32 %v854, %v1018
        %v1051 = vadd.f32 %v855, %v1019
        %v1052 = vadd.f32 %v856, %v1020
        %v1053 = vadd.f32 %v857, %v1021
        %v1054 = vadd.f32 %v858, %v1022
        %v1055 = vadd.f32 %v859, %v1023
        %v1056 = vadd.f32 %v860, %v1024
        %v1057 = vadd.f32 %v861, %v1025
        %v1058 = vadd.f32 %v862, %v1026
        %v1059 = vadd.f32 %v863, %v1027
        %v1060 = vadd.f32 %v864, %v1028
        %v1061 = vadd.f32 %v865, %v1029
        %v1062 = vadd.f32 %v866, %v1030
        %v1063 = vadd.f32 %v867, %v1031
        %v1064 = vadd.f32 %v868, %v1032
        %v1065 = vadd.f32 %v869, %v1033
        %v1066 = vadd.f32 %v870, %v1034
        %v1067 = vadd.f32 %v871, %v1035
        %v1068 = vadd.f32 %v872, %v1036
        %v1069 = vadd.f32 %v873, %v1037
        %v1070 = vadd.f32 %v874, %v1038
        %v1071 = vadd.f32 %v875, %v1039
        %v1072 = vadd.f32 %v876, %v1040
        %v1073 = vadd.f32 %v877, %v1041
        %1074 = vset.pattern.permute.xlu0 2
        %1075 = vperm.xlu0 %1074, %v649
        %v1076 = vpop.permute.xlu0 %1075
        %1078 = vset.pattern.permute.xlu0 2
        %1079 = vperm.xlu0 %1078, %v650
        %v1080 = vpop.permute.xlu0 %1079
        %1082 = vset.pattern.permute.xlu0 2
        %1083 = vperm.xlu0 %1082, %v651
        %v1084 = vpop.permute.xlu0 %1083
        %1086 = vset.pattern.permute.xlu0 2
        %1087 = vperm.xlu0 %1086, %v652
        %v1088 = vpop.permute.xlu0 %1087
        %1090 = vset.pattern.permute.xlu0 2
        %1091 = vperm.xlu0 %1090, %v653
        %v1092 = vpop.permute.xlu0 %1091
        %1094 = vset.pattern.permute.xlu0 2
        %1095 = vperm.xlu0 %1094, %v654
        %v1096 = vpop.permute.xlu0 %1095
        %1098 = vset.pattern.permute.xlu0 2
        %1099 = vperm.xlu0 %1098, %v655
        %v1100 = vpop.permute.xlu0 %1099
        %1102 = vset.pattern.permute.xlu0 2
        %1103 = vperm.xlu0 %1102, %v656
        %v1104 = vpop.permute.xlu0 %1103
        %1106 = vset.pattern.permute.xlu0 2
        %1107 = vperm.xlu0 %1106, %v657
        %v1108 = vpop.permute.xlu0 %1107
        %1110 = vset.pattern.permute.xlu0 2
        %1111 = vperm.xlu0 %1110, %v658
        %v1112 = vpop.permute.xlu0 %1111
        %1114 = vset.pattern.permute.xlu0 2
        %1115 = vperm.xlu0 %1114, %v659
        %v1116 = vpop.permute.xlu0 %1115
        %1118 = vset.pattern.permute.xlu0 2
        %1119 = vperm.xlu0 %1118, %v660
        %v1120 = vpop.permute.xlu0 %1119
        %1122 = vset.pattern.permute.xlu0 2
        %1123 = vperm.xlu0 %1122, %v661
        %v1124 = vpop.permute.xlu0 %1123
        %1126 = vset.pattern.permute.xlu0 2
        %1127 = vperm.xlu0 %1126, %v662
        %v1128 = vpop.permute.xlu0 %1127
        %1130 = vset.pattern.permute.xlu0 2
        %1131 = vperm.xlu0 %1130, %v663
        %v1132 = vpop.permute.xlu0 %1131
        %1134 = vset.pattern.permute.xlu0 2
        %1135 = vperm.xlu0 %1134, %v664
        %v1136 = vpop.permute.xlu0 %1135
        %1138 = vset.pattern.permute.xlu0 2
        %1139 = vperm.xlu0 %1138, %v665
        %v1140 = vpop.permute.xlu0 %1139
        %1142 = vset.pattern.permute.xlu0 2
        %1143 = vperm.xlu0 %1142, %v666
        %v1144 = vpop.permute.xlu0 %1143
        %1146 = vset.pattern.permute.xlu0 2
        %1147 = vperm.xlu0 %1146, %v667
        %v1148 = vpop.permute.xlu0 %1147
        %1150 = vset.pattern.permute.xlu0 2
        %1151 = vperm.xlu0 %1150, %v668
        %v1152 = vpop.permute.xlu0 %1151
        %1154 = vset.pattern.permute.xlu0 2
        %1155 = vperm.xlu0 %1154, %v669
        %v1156 = vpop.permute.xlu0 %1155
        %1158 = vset.pattern.permute.xlu0 2
        %1159 = vperm.xlu0 %1158, %v670
        %v1160 = vpop.permute.xlu0 %1159
        %1162 = vset.pattern.permute.xlu0 2
        %1163 = vperm.xlu0 %1162, %v671
        %v1164 = vpop.permute.xlu0 %1163
        %1166 = vset.pattern.permute.xlu0 2
        %1167 = vperm.xlu0 %1166, %v672
        %v1168 = vpop.permute.xlu0 %1167
        %1170 = vset.pattern.permute.xlu0 2
        %1171 = vperm.xlu0 %1170, %v673
        %v1172 = vpop.permute.xlu0 %1171
        %1174 = vset.pattern.permute.xlu0 2
        %1175 = vperm.xlu0 %1174, %v674
        %v1176 = vpop.permute.xlu0 %1175
        %1178 = vset.pattern.permute.xlu0 2
        %1179 = vperm.xlu0 %1178, %v675
        %v1180 = vpop.permute.xlu0 %1179
        %1182 = vset.pattern.permute.xlu0 2
        %1183 = vperm.xlu0 %1182, %v676
        %v1184 = vpop.permute.xlu0 %1183
        %1186 = vset.pattern.permute.xlu0 2
        %1187 = vperm.xlu0 %1186, %v677
        %v1188 = vpop.permute.xlu0 %1187
        %1190 = vset.pattern.permute.xlu0 2
        %1191 = vperm.xlu0 %1190, %v678
        %v1192 = vpop.permute.xlu0 %1191
        %1194 = vset.pattern.permute.xlu0 2
        %1195 = vperm.xlu0 %1194, %v679
        %v1196 = vpop.permute.xlu0 %1195
        %1198 = vset.pattern.permute.xlu0 2
        %1199 = vperm.xlu0 %1198, %v680
        %v1200 = vpop.permute.xlu0 %1199
        %v1202 = vlaneseq
        %v1203 = vshrl.u32 %v1202, 7
        %v1204 = vsub.s32 2, %v1203
        %v1205 = vrot.slane %v681, %v1204
        %v1206 = vmul.f32 %v1076, %v1205
        %v1207 = vmul.f32 %v1080, %v1205
        %v1208 = vmul.f32 %v1084, %v1205
        %v1209 = vmul.f32 %v1088, %v1205
        %v1210 = vmul.f32 %v1092, %v1205
        %v1211 = vmul.f32 %v1096, %v1205
        %v1212 = vmul.f32 %v1100, %v1205
        %v1213 = vmul.f32 %v1104, %v1205
        %v1214 = vmul.f32 %v1108, %v1205
        %v1215 = vmul.f32 %v1112, %v1205
        %v1216 = vmul.f32 %v1116, %v1205
        %v1217 = vmul.f32 %v1120, %v1205
        %v1218 = vmul.f32 %v1124, %v1205
        %v1219 = vmul.f32 %v1128, %v1205
        %v1220 = vmul.f32 %v1132, %v1205
        %v1221 = vmul.f32 %v1136, %v1205
        %v1222 = vmul.f32 %v1140, %v1205
        %v1223 = vmul.f32 %v1144, %v1205
        %v1224 = vmul.f32 %v1148, %v1205
        %v1225 = vmul.f32 %v1152, %v1205
        %v1226 = vmul.f32 %v1156, %v1205
        %v1227 = vmul.f32 %v1160, %v1205
        %v1228 = vmul.f32 %v1164, %v1205
        %v1229 = vmul.f32 %v1168, %v1205
        %v1230 = vmul.f32 %v1172, %v1205
        %v1231 = vmul.f32 %v1176, %v1205
        %v1232 = vmul.f32 %v1180, %v1205
        %v1233 = vmul.f32 %v1184, %v1205
        %v1234 = vmul.f32 %v1188, %v1205
        %v1235 = vmul.f32 %v1192, %v1205
        %v1236 = vmul.f32 %v1196, %v1205
        %v1237 = vmul.f32 %v1200, %v1205
        %v1238 = vadd.f32 %v1042, %v1206
        %v1239 = vadd.f32 %v1043, %v1207
        %v1240 = vadd.f32 %v1044, %v1208
        %v1241 = vadd.f32 %v1045, %v1209
        %v1242 = vadd.f32 %v1046, %v1210
        %v1243 = vadd.f32 %v1047, %v1211
        %v1244 = vadd.f32 %v1048, %v1212
        %v1245 = vadd.f32 %v1049, %v1213
        %v1246 = vadd.f32 %v1050, %v1214
        %v1247 = vadd.f32 %v1051, %v1215
        %v1248 = vadd.f32 %v1052, %v1216
        %v1249 = vadd.f32 %v1053, %v1217
        %v1250 = vadd.f32 %v1054, %v1218
        %v1251 = vadd.f32 %v1055, %v1219
        %v1252 = vadd.f32 %v1056, %v1220
        %v1253 = vadd.f32 %v1057, %v1221
        %v1254 = vadd.f32 %v1058, %v1222
        %v1255 = vadd.f32 %v1059, %v1223
        %v1256 = vadd.f32 %v1060, %v1224
        %v1257 = vadd.f32 %v1061, %v1225
        %v1258 = vadd.f32 %v1062, %v1226
        %v1259 = vadd.f32 %v1063, %v1227
        %v1260 = vadd.f32 %v1064, %v1228
        %v1261 = vadd.f32 %v1065, %v1229
        %v1262 = vadd.f32 %v1066, %v1230
        %v1263 = vadd.f32 %v1067, %v1231
        %v1264 = vadd.f32 %v1068, %v1232
        %v1265 = vadd.f32 %v1069, %v1233
        %v1266 = vadd.f32 %v1070, %v1234
        %v1267 = vadd.f32 %v1071, %v1235
        %v1268 = vadd.f32 %v1072, %v1236
        %v1269 = vadd.f32 %v1073, %v1237
        %v1270 = vld [vmem:[%s2] sm:$0x1]
        %v1272 = vlaneseq
        %v1273 = vshrl.u32 %v1272, 7
        %v1274 = vsub.s32 0, %v1273
        %v1275 = vrot.slane %v1270, %v1274
        %v1277 = vadd.f32 %v1238, %v1275
        %v1278 = vadd.f32 %v1239, %v1275
        %v1279 = vadd.f32 %v1240, %v1275
        %v1280 = vadd.f32 %v1241, %v1275
        %v1281 = vadd.f32 %v1242, %v1275
        %v1282 = vadd.f32 %v1243, %v1275
        %v1283 = vadd.f32 %v1244, %v1275
        %v1284 = vadd.f32 %v1245, %v1275
        %v1285 = vadd.f32 %v1246, %v1275
        %v1286 = vadd.f32 %v1247, %v1275
        %v1287 = vadd.f32 %v1248, %v1275
        %v1288 = vadd.f32 %v1249, %v1275
        %v1289 = vadd.f32 %v1250, %v1275
        %v1290 = vadd.f32 %v1251, %v1275
        %v1291 = vadd.f32 %v1252, %v1275
        %v1292 = vadd.f32 %v1253, %v1275
        %v1293 = vadd.f32 %v1254, %v1275
        %v1294 = vadd.f32 %v1255, %v1275
        %v1295 = vadd.f32 %v1256, %v1275
        %v1296 = vadd.f32 %v1257, %v1275
        %v1297 = vadd.f32 %v1258, %v1275
        %v1298 = vadd.f32 %v1259, %v1275
        %v1299 = vadd.f32 %v1260, %v1275
        %v1300 = vadd.f32 %v1261, %v1275
        %v1301 = vadd.f32 %v1262, %v1275
        %v1302 = vadd.f32 %v1263, %v1275
        %v1303 = vadd.f32 %v1264, %v1275
        %v1304 = vadd.f32 %v1265, %v1275
        %v1305 = vadd.f32 %v1266, %v1275
        %v1306 = vadd.f32 %v1267, %v1275
        %v1307 = vadd.f32 %v1268, %v1275
        %v1308 = vadd.f32 %v1269, %v1275
        %v1309 = vmax.f32 %v1277, 0.0
        %v1310 = vmax.f32 %v1278, 0.0
        %v1311 = vmax.f32 %v1279, 0.0
        %v1312 = vmax.f32 %v1280, 0.0
        %v1313 = vmax.f32 %v1281, 0.0
        %v1314 = vmax.f32 %v1282, 0.0
        %v1315 = vmax.f32 %v1283, 0.0
        %v1316 = vmax.f32 %v1284, 0.0
        %v1317 = vmax.f32 %v1285, 0.0
        %v1318 = vmax.f32 %v1286, 0.0
        %v1319 = vmax.f32 %v1287, 0.0
        %v1320 = vmax.f32 %v1288, 0.0
        %v1321 = vmax.f32 %v1289, 0.0
        %v1322 = vmax.f32 %v1290, 0.0
        %v1323 = vmax.f32 %v1291, 0.0
        %v1324 = vmax.f32 %v1292, 0.0
        %v1325 = vmax.f32 %v1293, 0.0
        %v1326 = vmax.f32 %v1294, 0.0
        %v1327 = vmax.f32 %v1295, 0.0
        %v1328 = vmax.f32 %v1296, 0.0
        %v1329 = vmax.f32 %v1297, 0.0
        %v1330 = vmax.f32 %v1298, 0.0
        %v1331 = vmax.f32 %v1299, 0.0
        %v1332 = vmax.f32 %v1300, 0.0
        %v1333 = vmax.f32 %v1301, 0.0
        %v1334 = vmax.f32 %v1302, 0.0
        %v1335 = vmax.f32 %v1303, 0.0
        %v1336 = vmax.f32 %v1304, 0.0
        %v1337 = vmax.f32 %v1305, 0.0
        %v1338 = vmax.f32 %v1306, 0.0
        %v1339 = vmax.f32 %v1307, 0.0
        %v1340 = vmax.f32 %v1308, 0.0
        %v1341 = vpack.c.bf16 %v1310, %v1309
        %v1342 = vpack.c.bf16 %v1312, %v1311
        %v1343 = vpack.c.bf16 %v1314, %v1313
        %v1344 = vpack.c.bf16 %v1316, %v1315
        %v1345 = vpack.c.bf16 %v1318, %v1317
        %v1346 = vpack.c.bf16 %v1320, %v1319
        %v1347 = vpack.c.bf16 %v1322, %v1321
        %v1348 = vpack.c.bf16 %v1324, %v1323
        %v1349 = vpack.c.bf16 %v1326, %v1325
        %v1350 = vpack.c.bf16 %v1328, %v1327
        %v1351 = vpack.c.bf16 %v1330, %v1329
        %v1352 = vpack.c.bf16 %v1332, %v1331
        %v1353 = vpack.c.bf16 %v1334, %v1333
        %v1354 = vpack.c.bf16 %v1336, %v1335
        %v1355 = vpack.c.bf16 %v1338, %v1337
        %v1356 = vpack.c.bf16 %v1340, %v1339
        %v1357 = vld [vmem:[%s3] sm:$0xf]
        %v1358 = vld [vmem:[%s3 + $0x4] sm:$0xf]
        %v1359 = vld [vmem:[%s3 + $0x8] sm:$0xf]
        %v1360 = vld [vmem:[%s3 + $0xc] sm:$0xf]
        %v1361 = vld [vmem:[%s3 + $0x10] sm:$0xf]
        %v1362 = vld [vmem:[%s3 + $0x14] sm:$0xf]
        %v1363 = vld [vmem:[%s3 + $0x18] sm:$0xf]
        %v1364 = vld [vmem:[%s3 + $0x1c] sm:$0xf]
        %v1365 = vld [vmem:[%s4] sm:$0x1]
        %v1367 = vlaneseq
        %v1368 = vshrl.u32 %v1367, 7
        %v1369 = vsub.s32 0, %v1368
        %v1370 = vrot.slane %v1365, %v1369
        %v1380 = vunpack.c.l.b16 %v1357
        %v1381 = vunpack.c.l.b16 %v1358
        %v1382 = vunpack.c.l.b16 %v1359
        %v1383 = vunpack.c.l.b16 %v1360
        %v1384 = vunpack.c.l.b16 %v1361
        %v1385 = vunpack.c.l.b16 %v1362
        %v1386 = vunpack.c.l.b16 %v1363
        %v1387 = vunpack.c.l.b16 %v1364
        %v1388 = vpack.c.b16 %v1381, %v1380
        %v1389 = vpack.c.b16 %v1383, %v1382
        %v1390 = vpack.c.b16 %v1385, %v1384
        %v1391 = vpack.c.b16 %v1387, %v1386
        %vm1396 = vcmask 523264
        %v1398 = vsel %vm1396, %v1341, 0
        %v1401 = vsel %vm1396, %v1342, 0
        %v1404 = vsel %vm1396, %v1343, 0
        %v1407 = vsel %vm1396, %v1344, 0
        %v1410 = vsel %vm1396, %v1345, 0
        %v1413 = vsel %vm1396, %v1346, 0
        %v1416 = vsel %vm1396, %v1347, 0
        %v1419 = vsel %vm1396, %v1348, 0
        %v1422 = vsel %vm1396, %v1349, 0
        %v1425 = vsel %vm1396, %v1350, 0
        %v1428 = vsel %vm1396, %v1351, 0
        %v1431 = vsel %vm1396, %v1352, 0
        %v1434 = vsel %vm1396, %v1353, 0
        %v1437 = vsel %vm1396, %v1354, 0
        %v1440 = vsel %vm1396, %v1355, 0
        %v1443 = vsel %vm1396, %v1356, 0
        %1445 = vmatprep.subr.bf16.mxu0 0
        %1446 = vmatpush1.bf16.msra.mxu0 0
        %1447 = vmatprep.subr.bf16.mxu0 0
        %1448 = vmatpush1.bf16.msra.mxu0 0
        %1449 = vmatprep.subr.bf16.mxu0 0
        %1450 = vmatpush1.bf16.msra.mxu0 0
        %1451 = vmatprep.subr.bf16.mxu0 0
        %1452 = vmatpush1.bf16.msra.mxu0 0
        %1453 = vmatprep.subr.bf16.mxu0 0
        %1454 = vmatpush1.bf16.msra.mxu0 %v1391
        %1455 = vmatprep.subr.bf16.mxu0 0
        %1456 = vmatpush1.bf16.msra.mxu0 %v1390
        %1457 = vmatprep.subr.bf16.mxu0 0
        %1458 = vmatpush1.bf16.msra.mxu0 %v1389
        %1459 = vmatprep.subr.bf16.mxu0 0
        %1460 = vmatpush1.bf16.msra.mxu0 %v1388
        %1461 = vmatprep.subr.bf16.mxu0 0
        %1462 = vmatpush2.bf16.msra.mxu0 0
        %1463 = vmatprep.subr.bf16.mxu0 0
        %1464 = vmatpush2.bf16.msra.mxu0 0
        %1465 = vmatprep.subr.bf16.mxu0 0
        %1466 = vmatpush2.bf16.msra.mxu0 0
        %1467 = vmatprep.subr.bf16.mxu0 0
        %1468 = vmatpush2.bf16.msra.mxu0 0
        %1469 = vmatprep.subr.bf16.mxu0 0
        %1470 = vmatpush2.bf16.msra.mxu0 0
        %1471 = vmatprep.subr.bf16.mxu0 0
        %1472 = vmatpush2.bf16.msra.mxu0 0
        %1473 = vmatprep.subr.bf16.mxu0 0
        %1474 = vmatpush2.bf16.msra.mxu0 0
        %1475 = vmatprep.subr.bf16.mxu0 0
        %1476 = vmatpush2.bf16.msra.mxu0 0
        %1477 = vmatprep.mubr.bf16.mxu0 0
        %1478 = vmatmul.mubr.bf16.gmra.mxu0 %v1398
        %v1479 = vpop.f32.mrf.mxu0
        %v1480 = vadd.f32 %v1370, %v1479
        %v1481 = vpop.f32.mrf.mxu0
        %v1482 = vpop.f32.mrf.mxu0
        %v1483 = vadd.f32 %v1370, %v1482
        %v1484 = vpop.f32.mrf.mxu0
        %1485 = vmatprep.mubr.bf16.mxu0 0
        %1486 = vmatmul.mubr.bf16.gmra.mxu0 %v1401
        %v1487 = vpop.f32.mrf.mxu0
        %v1488 = vadd.f32 %v1370, %v1487
        %v1489 = vpop.f32.mrf.mxu0
        %v1490 = vpop.f32.mrf.mxu0
        %v1491 = vadd.f32 %v1370, %v1490
        %v1492 = vpop.f32.mrf.mxu0
        %1493 = vmatprep.mubr.bf16.mxu0 0
        %1494 = vmatmul.mubr.bf16.gmra.mxu0 %v1404
        %v1495 = vpop.f32.mrf.mxu0
        %v1496 = vadd.f32 %v1370, %v1495
        %v1497 = vpop.f32.mrf.mxu0
        %v1498 = vpop.f32.mrf.mxu0
        %v1499 = vadd.f32 %v1370, %v1498
        %v1500 = vpop.f32.mrf.mxu0
        %1501 = vmatprep.mubr.bf16.mxu0 0
        %1502 = vmatmul.mubr.bf16.gmra.mxu0 %v1407
        %v1503 = vpop.f32.mrf.mxu0
        %v1504 = vadd.f32 %v1370, %v1503
        %v1505 = vpop.f32.mrf.mxu0
        %v1506 = vpop.f32.mrf.mxu0
        %v1507 = vadd.f32 %v1370, %v1506
        %v1508 = vpop.f32.mrf.mxu0
        %1509 = vmatprep.mubr.bf16.mxu0 0
        %1510 = vmatmul.mubr.bf16.gmra.mxu0 %v1410
        %v1511 = vpop.f32.mrf.mxu0
        %v1512 = vadd.f32 %v1370, %v1511
        %v1513 = vpop.f32.mrf.mxu0
        %v1514 = vpop.f32.mrf.mxu0
        %v1515 = vadd.f32 %v1370, %v1514
        %v1516 = vpop.f32.mrf.mxu0
        %1517 = vmatprep.mubr.bf16.mxu0 0
        %1518 = vmatmul.mubr.bf16.gmra.mxu0 %v1413
        %v1519 = vpop.f32.mrf.mxu0
        %v1520 = vadd.f32 %v1370, %v1519
        %v1521 = vpop.f32.mrf.mxu0
        %v1522 = vpop.f32.mrf.mxu0
        %v1523 = vadd.f32 %v1370, %v1522
        %v1524 = vpop.f32.mrf.mxu0
        %1525 = vmatprep.mubr.bf16.mxu0 0
        %1526 = vmatmul.mubr.bf16.gmra.mxu0 %v1416
        %v1527 = vpop.f32.mrf.mxu0
        %v1528 = vadd.f32 %v1370, %v1527
        %v1529 = vpop.f32.mrf.mxu0
        %v1530 = vpop.f32.mrf.mxu0
        %v1531 = vadd.f32 %v1370, %v1530
        %v1532 = vpop.f32.mrf.mxu0
        %1533 = vmatprep.mubr.bf16.mxu0 0
        %1534 = vmatmul.mubr.bf16.gmra.mxu0 %v1419
        %v1535 = vpop.f32.mrf.mxu0
        %v1536 = vadd.f32 %v1370, %v1535
        %v1537 = vpop.f32.mrf.mxu0
        %v1538 = vpop.f32.mrf.mxu0
        %v1539 = vadd.f32 %v1370, %v1538
        %v1540 = vpop.f32.mrf.mxu0
        %1541 = vmatprep.mubr.bf16.mxu0 0
        %1542 = vmatmul.mubr.bf16.gmra.mxu0 %v1422
        %v1543 = vpop.f32.mrf.mxu0
        %v1544 = vadd.f32 %v1370, %v1543
        %v1545 = vpop.f32.mrf.mxu0
        %v1546 = vpop.f32.mrf.mxu0
        %v1547 = vadd.f32 %v1370, %v1546
        %v1548 = vpop.f32.mrf.mxu0
        %1549 = vmatprep.mubr.bf16.mxu0 0
        %1550 = vmatmul.mubr.bf16.gmra.mxu0 %v1425
        %v1551 = vpop.f32.mrf.mxu0
        %v1552 = vadd.f32 %v1370, %v1551
        %v1553 = vpop.f32.mrf.mxu0
        %v1554 = vpop.f32.mrf.mxu0
        %v1555 = vadd.f32 %v1370, %v1554
        %v1556 = vpop.f32.mrf.mxu0
        %1557 = vmatprep.mubr.bf16.mxu0 0
        %1558 = vmatmul.mubr.bf16.gmra.mxu0 %v1428
        %v1559 = vpop.f32.mrf.mxu0
        %v1560 = vadd.f32 %v1370, %v1559
        %v1561 = vpop.f32.mrf.mxu0
        %v1562 = vpop.f32.mrf.mxu0
        %v1563 = vadd.f32 %v1370, %v1562
        %v1564 = vpop.f32.mrf.mxu0
        %1565 = vmatprep.mubr.bf16.mxu0 0
        %1566 = vmatmul.mubr.bf16.gmra.mxu0 %v1431
        %v1567 = vpop.f32.mrf.mxu0
        %v1568 = vadd.f32 %v1370, %v1567
        %v1569 = vpop.f32.mrf.mxu0
        %v1570 = vpop.f32.mrf.mxu0
        %v1571 = vadd.f32 %v1370, %v1570
        %v1572 = vpop.f32.mrf.mxu0
        %1573 = vmatprep.mubr.bf16.mxu0 0
        %1574 = vmatmul.mubr.bf16.gmra.mxu0 %v1434
        %v1575 = vpop.f32.mrf.mxu0
        %v1576 = vadd.f32 %v1370, %v1575
        %v1577 = vpop.f32.mrf.mxu0
        %v1578 = vpop.f32.mrf.mxu0
        %v1579 = vadd.f32 %v1370, %v1578
        %v1580 = vpop.f32.mrf.mxu0
        %1581 = vmatprep.mubr.bf16.mxu0 0
        %1582 = vmatmul.mubr.bf16.gmra.mxu0 %v1437
        %v1583 = vpop.f32.mrf.mxu0
        %v1584 = vadd.f32 %v1370, %v1583
        %v1585 = vpop.f32.mrf.mxu0
        %v1586 = vpop.f32.mrf.mxu0
        %v1587 = vadd.f32 %v1370, %v1586
        %v1588 = vpop.f32.mrf.mxu0
        %1589 = vmatprep.mubr.bf16.mxu0 0
        %1590 = vmatmul.mubr.bf16.gmra.mxu0 %v1440
        %v1591 = vpop.f32.mrf.mxu0
        %v1592 = vadd.f32 %v1370, %v1591
        %v1593 = vpop.f32.mrf.mxu0
        %v1594 = vpop.f32.mrf.mxu0
        %v1595 = vadd.f32 %v1370, %v1594
        %v1596 = vpop.f32.mrf.mxu0
        %1597 = vmatprep.mubr.bf16.mxu0 0
        %1598 = vmatmul.mubr.bf16.gmra.mxu0 %v1443
        %v1599 = vpop.f32.mrf.mxu0
        %v1600 = vadd.f32 %v1370, %v1599
        %v1601 = vpop.f32.mrf.mxu0
        %v1602 = vpop.f32.mrf.mxu0
        %v1603 = vadd.f32 %v1370, %v1602
        %v1604 = vpop.f32.mrf.mxu0
        %1605 = vdwg.mxu0
        %v1606 = vmax.f32 %v1480, 0.0
        %v1607 = vmax.f32 %v1483, 0.0
        %v1608 = vmax.f32 %v1488, 0.0
        %v1609 = vmax.f32 %v1491, 0.0
        %v1610 = vmax.f32 %v1496, 0.0
        %v1611 = vmax.f32 %v1499, 0.0
        %v1612 = vmax.f32 %v1504, 0.0
        %v1613 = vmax.f32 %v1507, 0.0
        %v1614 = vmax.f32 %v1512, 0.0
        %v1615 = vmax.f32 %v1515, 0.0
        %v1616 = vmax.f32 %v1520, 0.0
        %v1617 = vmax.f32 %v1523, 0.0
        %v1618 = vmax.f32 %v1528, 0.0
        %v1619 = vmax.f32 %v1531, 0.0
        %v1620 = vmax.f32 %v1536, 0.0
        %v1621 = vmax.f32 %v1539, 0.0
        %v1622 = vmax.f32 %v1544, 0.0
        %v1623 = vmax.f32 %v1547, 0.0
        %v1624 = vmax.f32 %v1552, 0.0
        %v1625 = vmax.f32 %v1555, 0.0
        %v1626 = vmax.f32 %v1560, 0.0
        %v1627 = vmax.f32 %v1563, 0.0
        %v1628 = vmax.f32 %v1568, 0.0
        %v1629 = vmax.f32 %v1571, 0.0
        %v1630 = vmax.f32 %v1576, 0.0
        %v1631 = vmax.f32 %v1579, 0.0
        %v1632 = vmax.f32 %v1584, 0.0
        %v1633 = vmax.f32 %v1587, 0.0
        %v1634 = vmax.f32 %v1592, 0.0
        %v1635 = vmax.f32 %v1595, 0.0
        %v1636 = vmax.f32 %v1600, 0.0
        %v1637 = vmax.f32 %v1603, 0.0
        %v1638 = vpack.c.bf16 %v1607, %v1606
        %v1639 = vpack.c.bf16 %v1609, %v1608
        %v1640 = vpack.c.bf16 %v1611, %v1610
        %v1641 = vpack.c.bf16 %v1613, %v1612
        %v1642 = vpack.c.bf16 %v1615, %v1614
        %v1643 = vpack.c.bf16 %v1617, %v1616
        %v1644 = vpack.c.bf16 %v1619, %v1618
        %v1645 = vpack.c.bf16 %v1621, %v1620
        %v1646 = vpack.c.bf16 %v1623, %v1622
        %v1647 = vpack.c.bf16 %v1625, %v1624
        %v1648 = vpack.c.bf16 %v1627, %v1626
        %v1649 = vpack.c.bf16 %v1629, %v1628
        %v1650 = vpack.c.bf16 %v1631, %v1630
        %v1651 = vpack.c.bf16 %v1633, %v1632
        %v1652 = vpack.c.bf16 %v1635, %v1634
        %v1653 = vpack.c.bf16 %v1637, %v1636
        %v1654 = vld [vmem:[%s5] sm:$0xff]
        %v1655 = vld [vmem:[%s5 + $0x8] sm:$0xff]
        %v1656 = vld [vmem:[%s5 + $0x10] sm:$0xff]
        %v1657 = vld [vmem:[%s5 + $0x18] sm:$0xff]
        %v1658 = vld [vmem:[%s5 + $0x20] sm:$0xff]
        %v1659 = vld [vmem:[%s5 + $0x28] sm:$0xff]
        %v1660 = vld [vmem:[%s5 + $0x30] sm:$0xff]
        %v1661 = vld [vmem:[%s5 + $0x38] sm:$0xff]
        %v1662 = vld [vmem:[%s5 + $0x40] sm:$0xff]
        %v1663 = vld [vmem:[%s5 + $0x48] sm:$0xff]
        %v1664 = vld [vmem:[%s5 + $0x50] sm:$0xff]
        %v1665 = vld [vmem:[%s5 + $0x58] sm:$0xff]
        %v1666 = vld [vmem:[%s5 + $0x60] sm:$0xff]
        %v1667 = vld [vmem:[%s5 + $0x68] sm:$0xff]
        %v1668 = vld [vmem:[%s5 + $0x70] sm:$0xff]
        %v1669 = vld [vmem:[%s5 + $0x78] sm:$0xff]
        %v1670 = vld [vmem:[%s5 + $0x80] sm:$0xff]
        %v1671 = vld [vmem:[%s5 + $0x88] sm:$0xff]
        %v1672 = vld [vmem:[%s5 + $0x90] sm:$0xff]
        %v1673 = vld [vmem:[%s5 + $0x98] sm:$0xff]
        %v1674 = vld [vmem:[%s5 + $0xa0] sm:$0xff]
        %v1675 = vld [vmem:[%s5 + $0xa8] sm:$0xff]
        %v1676 = vld [vmem:[%s5 + $0xb0] sm:$0xff]
        %v1677 = vld [vmem:[%s5 + $0xb8] sm:$0xff]
        %v1678 = vld [vmem:[%s5 + $0xc0] sm:$0xff]
        %v1679 = vld [vmem:[%s5 + $0xc8] sm:$0xff]
        %v1680 = vld [vmem:[%s5 + $0xd0] sm:$0xff]
        %v1681 = vld [vmem:[%s5 + $0xd8] sm:$0xff]
        %v1682 = vld [vmem:[%s5 + $0xe0] sm:$0xff]
        %v1683 = vld [vmem:[%s5 + $0xe8] sm:$0xff]
        %v1684 = vld [vmem:[%s5 + $0xf0] sm:$0xff]
        %v1685 = vld [vmem:[%s5 + $0xf8] sm:$0xff]
        %v1686 = vld [vmem:[%s5 + $0x100] sm:$0xff]
        %v1687 = vld [vmem:[%s5 + $0x108] sm:$0xff]
        %v1688 = vld [vmem:[%s5 + $0x110] sm:$0xff]
        %v1689 = vld [vmem:[%s5 + $0x118] sm:$0xff]
        %v1690 = vld [vmem:[%s5 + $0x120] sm:$0xff]
        %v1691 = vld [vmem:[%s5 + $0x128] sm:$0xff]
        %v1692 = vld [vmem:[%s5 + $0x130] sm:$0xff]
        %v1693 = vld [vmem:[%s5 + $0x138] sm:$0xff]
        %v1694 = vld [vmem:[%s5 + $0x140] sm:$0xff]
        %v1695 = vld [vmem:[%s5 + $0x148] sm:$0xff]
        %v1696 = vld [vmem:[%s5 + $0x150] sm:$0xff]
        %v1697 = vld [vmem:[%s5 + $0x158] sm:$0xff]
        %v1698 = vld [vmem:[%s5 + $0x160] sm:$0xff]
        %v1699 = vld [vmem:[%s5 + $0x168] sm:$0xff]
        %v1700 = vld [vmem:[%s5 + $0x170] sm:$0xff]
        %v1701 = vld [vmem:[%s5 + $0x178] sm:$0xff]
        %v1702 = vld [vmem:[%s5 + $0x180] sm:$0xff]
        %v1703 = vld [vmem:[%s5 + $0x188] sm:$0xff]
        %v1704 = vld [vmem:[%s5 + $0x190] sm:$0xff]
        %v1705 = vld [vmem:[%s5 + $0x198] sm:$0xff]
        %v1706 = vld [vmem:[%s5 + $0x1a0] sm:$0xff]
        %v1707 = vld [vmem:[%s5 + $0x1a8] sm:$0xff]
        %v1708 = vld [vmem:[%s5 + $0x1b0] sm:$0xff]
        %v1709 = vld [vmem:[%s5 + $0x1b8] sm:$0xff]
        %v1710 = vld [vmem:[%s5 + $0x1c0] sm:$0xff]
        %v1711 = vld [vmem:[%s5 + $0x1c8] sm:$0xff]
        %v1712 = vld [vmem:[%s5 + $0x1d0] sm:$0xff]
        %v1713 = vld [vmem:[%s5 + $0x1d8] sm:$0xff]
        %v1714 = vld [vmem:[%s5 + $0x1e0] sm:$0xff]
        %v1715 = vld [vmem:[%s5 + $0x1e8] sm:$0xff]
        %v1716 = vld [vmem:[%s5 + $0x1f0] sm:$0xff]
        %v1717 = vld [vmem:[%s5 + $0x1f8] sm:$0xff]
        %v1718 = vld [vmem:[%s6] sm:$0xff]
        %v1720 = vlaneseq
        %v1721 = vshrl.u32 %v1720, 7
        %v1722 = vsub.s32 0, %v1721
        %v1723 = vrot.slane %v1718, %v1722
        %v1724 = vlaneseq
        %v1725 = vshrl.u32 %v1724, 7
        %v1726 = vsub.s32 1, %v1725
        %v1727 = vrot.slane %v1718, %v1726
        %v1728 = vlaneseq
        %v1729 = vshrl.u32 %v1728, 7
        %v1730 = vsub.s32 2, %v1729
        %v1731 = vrot.slane %v1718, %v1730
        %v1732 = vlaneseq
        %v1733 = vshrl.u32 %v1732, 7
        %v1734 = vsub.s32 3, %v1733
        %v1735 = vrot.slane %v1718, %v1734
        %v1736 = vlaneseq
        %v1737 = vshrl.u32 %v1736, 7
        %v1738 = vsub.s32 4, %v1737
        %v1739 = vrot.slane %v1718, %v1738
        %v1740 = vlaneseq
        %v1741 = vshrl.u32 %v1740, 7
        %v1742 = vsub.s32 5, %v1741
        %v1743 = vrot.slane %v1718, %v1742
        %v1744 = vlaneseq
        %v1745 = vshrl.u32 %v1744, 7
        %v1746 = vsub.s32 6, %v1745
        %v1747 = vrot.slane %v1718, %v1746
        %v1748 = vlaneseq
        %v1749 = vshrl.u32 %v1748, 7
        %v1750 = vsub.s32 7, %v1749
        %v1751 = vrot.slane %v1718, %v1750
        %v1824 = vunpack.c.l.b16 %v1654
        %v1825 = vunpack.c.h.b16 %v1654
        %v1826 = vunpack.c.l.b16 %v1655
        %v1827 = vunpack.c.h.b16 %v1655
        %v1828 = vunpack.c.l.b16 %v1656
        %v1829 = vunpack.c.h.b16 %v1656
        %v1830 = vunpack.c.l.b16 %v1657
        %v1831 = vunpack.c.h.b16 %v1657
        %v1832 = vunpack.c.l.b16 %v1658
        %v1833 = vunpack.c.h.b16 %v1658
        %v1834 = vunpack.c.l.b16 %v1659
        %v1835 = vunpack.c.h.b16 %v1659
        %v1836 = vunpack.c.l.b16 %v1660
        %v1837 = vunpack.c.h.b16 %v1660
        %v1838 = vunpack.c.l.b16 %v1661
        %v1839 = vunpack.c.h.b16 %v1661
        %v1840 = vunpack.c.l.b16 %v1662
        %v1841 = vunpack.c.h.b16 %v1662
        %v1842 = vunpack.c.l.b16 %v1663
        %v1843 = vunpack.c.h.b16 %v1663
        %v1844 = vunpack.c.l.b16 %v1664
        %v1845 = vunpack.c.h.b16 %v1664
        %v1846 = vunpack.c.l.b16 %v1665
        %v1847 = vunpack.c.h.b16 %v1665
        %v1848 = vunpack.c.l.b16 %v1666
        %v1849 = vunpack.c.h.b16 %v1666
        %v1850 = vunpack.c.l.b16 %v1667
        %v1851 = vunpack.c.h.b16 %v1667
        %v1852 = vunpack.c.l.b16 %v1668
        %v1853 = vunpack.c.h.b16 %v1668
        %v1854 = vunpack.c.l.b16 %v1669
        %v1855 = vunpack.c.h.b16 %v1669
        %v1856 = vunpack.c.l.b16 %v1670
        %v1857 = vunpack.c.h.b16 %v1670
        %v1858 = vunpack.c.l.b16 %v1671
        %v1859 = vunpack.c.h.b16 %v1671
        %v1860 = vunpack.c.l.b16 %v1672
        %v1861 = vunpack.c.h.b16 %v1672
        %v1862 = vunpack.c.l.b16 %v1673
        %v1863 = vunpack.c.h.b16 %v1673
        %v1864 = vunpack.c.l.b16 %v1674
        %v1865 = vunpack.c.h.b16 %v1674
        %v1866 = vunpack.c.l.b16 %v1675
        %v1867 = vunpack.c.h.b16 %v1675
        %v1868 = vunpack.c.l.b16 %v1676
        %v1869 = vunpack.c.h.b16 %v1676
        %v1870 = vunpack.c.l.b16 %v1677
        %v1871 = vunpack.c.h.b16 %v1677
        %v1872 = vunpack.c.l.b16 %v1678
        %v1873 = vunpack.c.h.b16 %v1678
        %v1874 = vunpack.c.l.b16 %v1679
        %v1875 = vunpack.c.h.b16 %v1679
        %v1876 = vunpack.c.l.b16 %v1680
        %v1877 = vunpack.c.h.b16 %v1680
        %v1878 = vunpack.c.l.b16 %v1681
        %v1879 = vunpack.c.h.b16 %v1681
        %v1880 = vunpack.c.l.b16 %v1682
        %v1881 = vunpack.c.h.b16 %v1682
        %v1882 = vunpack.c.l.b16 %v1683
        %v1883 = vunpack.c.h.b16 %v1683
        %v1884 = vunpack.c.l.b16 %v1684
        %v1885 = vunpack.c.h.b16 %v1684
        %v1886 = vunpack.c.l.b16 %v1685
        %v1887 = vunpack.c.h.b16 %v1685
        %v1888 = vunpack.c.l.b16 %v1686
        %v1889 = vunpack.c.h.b16 %v1686
        %v1890 = vunpack.c.l.b16 %v1687
        %v1891 = vunpack.c.h.b16 %v1687
        %v1892 = vunpack.c.l.b16 %v1688
        %v1893 = vunpack.c.h.b16 %v1688
        %v1894 = vunpack.c.l.b16 %v1689
        %v1895 = vunpack.c.h.b16 %v1689
        %v1896 = vunpack.c.l.b16 %v1690
        %v1897 = vunpack.c.h.b16 %v1690
        %v1898 = vunpack.c.l.b16 %v1691
        %v1899 = vunpack.c.h.b16 %v1691
        %v1900 = vunpack.c.l.b16 %v1692
        %v1901 = vunpack.c.h.b16 %v1692
        %v1902 = vunpack.c.l.b16 %v1693
        %v1903 = vunpack.c.h.b16 %v1693
        %v1904 = vunpack.c.l.b16 %v1694
        %v1905 = vunpack.c.h.b16 %v1694
        %v1906 = vunpack.c.l.b16 %v1695
        %v1907 = vunpack.c.h.b16 %v1695
        %v1908 = vunpack.c.l.b16 %v1696
        %v1909 = vunpack.c.h.b16 %v1696
        %v1910 = vunpack.c.l.b16 %v1697
        %v1911 = vunpack.c.h.b16 %v1697
        %v1912 = vunpack.c.l.b16 %v1698
        %v1913 = vunpack.c.h.b16 %v1698
        %v1914 = vunpack.c.l.b16 %v1699
        %v1915 = vunpack.c.h.b16 %v1699
        %v1916 = vunpack.c.l.b16 %v1700
        %v1917 = vunpack.c.h.b16 %v1700
        %v1918 = vunpack.c.l.b16 %v1701
        %v1919 = vunpack.c.h.b16 %v1701
        %v1920 = vunpack.c.l.b16 %v1702
        %v1921 = vunpack.c.h.b16 %v1702
        %v1922 = vunpack.c.l.b16 %v1703
        %v1923 = vunpack.c.h.b16 %v1703
        %v1924 = vunpack.c.l.b16 %v1704
        %v1925 = vunpack.c.h.b16 %v1704
        %v1926 = vunpack.c.l.b16 %v1705
        %v1927 = vunpack.c.h.b16 %v1705
        %v1928 = vunpack.c.l.b16 %v1706
        %v1929 = vunpack.c.h.b16 %v1706
        %v1930 = vunpack.c.l.b16 %v1707
        %v1931 = vunpack.c.h.b16 %v1707
        %v1932 = vunpack.c.l.b16 %v1708
        %v1933 = vunpack.c.h.b16 %v1708
        %v1934 = vunpack.c.l.b16 %v1709
        %v1935 = vunpack.c.h.b16 %v1709
        %v1936 = vunpack.c.l.b16 %v1710
        %v1937 = vunpack.c.h.b16 %v1710
        %v1938 = vunpack.c.l.b16 %v1711
        %v1939 = vunpack.c.h.b16 %v1711
        %v1940 = vunpack.c.l.b16 %v1712
        %v1941 = vunpack.c.h.b16 %v1712
        %v1942 = vunpack.c.l.b16 %v1713
        %v1943 = vunpack.c.h.b16 %v1713
        %v1944 = vunpack.c.l.b16 %v1714
        %v1945 = vunpack.c.h.b16 %v1714
        %v1946 = vunpack.c.l.b16 %v1715
        %v1947 = vunpack.c.h.b16 %v1715
        %v1948 = vunpack.c.l.b16 %v1716
        %v1949 = vunpack.c.h.b16 %v1716
        %v1950 = vunpack.c.l.b16 %v1717
        %v1951 = vunpack.c.h.b16 %v1717
        %v1952 = vpack.c.b16 %v1832, %v1824
        %v1953 = vpack.c.b16 %v1833, %v1825
        %v1954 = vpack.c.b16 %v1834, %v1826
        %v1955 = vpack.c.b16 %v1835, %v1827
        %v1956 = vpack.c.b16 %v1836, %v1828
        %v1957 = vpack.c.b16 %v1837, %v1829
        %v1958 = vpack.c.b16 %v1838, %v1830
        %v1959 = vpack.c.b16 %v1839, %v1831
        %v1960 = vpack.c.b16 %v1848, %v1840
        %v1961 = vpack.c.b16 %v1849, %v1841
        %v1962 = vpack.c.b16 %v1850, %v1842
        %v1963 = vpack.c.b16 %v1851, %v1843
        %v1964 = vpack.c.b16 %v1852, %v1844
        %v1965 = vpack.c.b16 %v1853, %v1845
        %v1966 = vpack.c.b16 %v1854, %v1846
        %v1967 = vpack.c.b16 %v1855, %v1847
        %v1968 = vpack.c.b16 %v1864, %v1856
        %v1969 = vpack.c.b16 %v1865, %v1857
        %v1970 = vpack.c.b16 %v1866, %v1858
        %v1971 = vpack.c.b16 %v1867, %v1859
        %v1972 = vpack.c.b16 %v1868, %v1860
        %v1973 = vpack.c.b16 %v1869, %v1861
        %v1974 = vpack.c.b16 %v1870, %v1862
        %v1975 = vpack.c.b16 %v1871, %v1863
        %v1976 = vpack.c.b16 %v1880, %v1872
        %v1977 = vpack.c.b16 %v1881, %v1873
        %v1978 = vpack.c.b16 %v1882, %v1874
        %v1979 = vpack.c.b16 %v1883, %v1875
        %v1980 = vpack.c.b16 %v1884, %v1876
        %v1981 = vpack.c.b16 %v1885, %v1877
        %v1982 = vpack.c.b16 %v1886, %v1878
        %v1983 = vpack.c.b16 %v1887, %v1879
        %v1984 = vpack.c.b16 %v1896, %v1888
        %v1985 = vpack.c.b16 %v1897, %v1889
        %v1986 = vpack.c.b16 %v1898, %v1890
        %v1987 = vpack.c.b16 %v1899, %v1891
        %v1988 = vpack.c.b16 %v1900, %v1892
        %v1989 = vpack.c.b16 %v1901, %v1893
        %v1990 = vpack.c.b16 %v1902, %v1894
        %v1991 = vpack.c.b16 %v1903, %v1895
        %v1992 = vpack.c.b16 %v1912, %v1904
        %v1993 = vpack.c.b16 %v1913, %v1905
        %v1994 = vpack.c.b16 %v1914, %v1906
        %v1995 = vpack.c.b16 %v1915, %v1907
        %v1996 = vpack.c.b16 %v1916, %v1908
        %v1997 = vpack.c.b16 %v1917, %v1909
        %v1998 = vpack.c.b16 %v1918, %v1910
        %v1999 = vpack.c.b16 %v1919, %v1911
        %v2000 = vpack.c.b16 %v1928, %v1920
        %v2001 = vpack.c.b16 %v1929, %v1921
        %v2002 = vpack.c.b16 %v1930, %v1922
        %v2003 = vpack.c.b16 %v1931, %v1923
        %v2004 = vpack.c.b16 %v1932, %v1924
        %v2005 = vpack.c.b16 %v1933, %v1925
        %v2006 = vpack.c.b16 %v1934, %v1926
        %v2007 = vpack.c.b16 %v1935, %v1927
        %v2008 = vpack.c.b16 %v1944, %v1936
        %v2009 = vpack.c.b16 %v1945, %v1937
        %v2010 = vpack.c.b16 %v1946, %v1938
        %v2011 = vpack.c.b16 %v1947, %v1939
        %v2012 = vpack.c.b16 %v1948, %v1940
        %v2013 = vpack.c.b16 %v1949, %v1941
        %v2014 = vpack.c.b16 %v1950, %v1942
        %v2015 = vpack.c.b16 %v1951, %v1943
        %2080 = vmatprep.subr.bf16.mxu0 %v2009
        %2081 = vmatpush1.bf16.msra.mxu0 %v2008
        %2082 = vmatprep.subr.bf16.mxu0 %v2001
        %2083 = vmatpush1.bf16.msra.mxu0 %v2000
        %2084 = vmatprep.subr.bf16.mxu0 %v1993
        %2085 = vmatpush1.bf16.msra.mxu0 %v1992
        %2086 = vmatprep.subr.bf16.mxu0 %v1985
        %2087 = vmatpush1.bf16.msra.mxu0 %v1984
        %2088 = vmatprep.subr.bf16.mxu0 %v1977
        %2089 = vmatpush1.bf16.msra.mxu0 %v1976
        %2090 = vmatprep.subr.bf16.mxu0 %v1969
        %2091 = vmatpush1.bf16.msra.mxu0 %v1968
        %2092 = vmatprep.subr.bf16.mxu0 %v1961
        %2093 = vmatpush1.bf16.msra.mxu0 %v1960
        %2094 = vmatprep.subr.bf16.mxu0 %v1953
        %2095 = vmatpush1.bf16.msra.mxu0 %v1952
        %2096 = vmatprep.subr.bf16.mxu0 0
        %2097 = vmatpush2.bf16.msra.mxu0 0
        %2098 = vmatprep.subr.bf16.mxu0 0
        %2099 = vmatpush2.bf16.msra.mxu0 0
        %2100 = vmatprep.subr.bf16.mxu0 0
        %2101 = vmatpush2.bf16.msra.mxu0 0
        %2102 = vmatprep.subr.bf16.mxu0 0
        %2103 = vmatpush2.bf16.msra.mxu0 0
        %2104 = vmatprep.subr.bf16.mxu0 0
        %2105 = vmatpush2.bf16.msra.mxu0 0
        %2106 = vmatprep.subr.bf16.mxu0 0
        %2107 = vmatpush2.bf16.msra.mxu0 0
        %2108 = vmatprep.subr.bf16.mxu0 0
        %2109 = vmatpush2.bf16.msra.mxu0 0
        %2110 = vmatprep.subr.bf16.mxu0 0
        %2111 = vmatpush2.bf16.msra.mxu0 0
        %2112 = vmatprep.mubr.bf16.mxu0 0
        %2113 = vmatmul.mubr.bf16.gmra.mxu0 %v1638
        %v2114 = vpop.f32.mrf.mxu0
        %v2115 = vadd.f32 %v1723, %v2114
        %v2116 = vpop.f32.mrf.mxu0
        %v2117 = vadd.f32 %v1727, %v2116
        %v2118 = vpop.f32.mrf.mxu0
        %v2119 = vadd.f32 %v1723, %v2118
        %v2120 = vpop.f32.mrf.mxu0
        %v2121 = vadd.f32 %v1727, %v2120
        %2122 = vmatprep.mubr.bf16.mxu0 0
        %2123 = vmatmul.mubr.bf16.gmra.mxu0 %v1639
        %v2124 = vpop.f32.mrf.mxu0
        %v2125 = vadd.f32 %v1723, %v2124
        %v2126 = vpop.f32.mrf.mxu0
        %v2127 = vadd.f32 %v1727, %v2126
        %v2128 = vpop.f32.mrf.mxu0
        %v2129 = vadd.f32 %v1723, %v2128
        %v2130 = vpop.f32.mrf.mxu0
        %v2131 = vadd.f32 %v1727, %v2130
        %2132 = vmatprep.mubr.bf16.mxu0 0
        %2133 = vmatmul.mubr.bf16.gmra.mxu0 %v1640
        %v2134 = vpop.f32.mrf.mxu0
        %v2135 = vadd.f32 %v1723, %v2134
        %v2136 = vpop.f32.mrf.mxu0
        %v2137 = vadd.f32 %v1727, %v2136
        %v2138 = vpop.f32.mrf.mxu0
        %v2139 = vadd.f32 %v1723, %v2138
        %v2140 = vpop.f32.mrf.mxu0
        %v2141 = vadd.f32 %v1727, %v2140
        %2142 = vmatprep.mubr.bf16.mxu0 0
        %2143 = vmatmul.mubr.bf16.gmra.mxu0 %v1641
        %v2144 = vpop.f32.mrf.mxu0
        %v2145 = vadd.f32 %v1723, %v2144
        %v2146 = vpop.f32.mrf.mxu0
        %v2147 = vadd.f32 %v1727, %v2146
        %v2148 = vpop.f32.mrf.mxu0
        %v2149 = vadd.f32 %v1723, %v2148
        %v2150 = vpop.f32.mrf.mxu0
        %v2151 = vadd.f32 %v1727, %v2150
        %2152 = vmatprep.mubr.bf16.mxu0 0
        %2153 = vmatmul.mubr.bf16.gmra.mxu0 %v1642
        %v2154 = vpop.f32.mrf.mxu0
        %v2155 = vadd.f32 %v1723, %v2154
        %v2156 = vpop.f32.mrf.mxu0
        %v2157 = vadd.f32 %v1727, %v2156
        %v2158 = vpop.f32.mrf.mxu0
        %v2159 = vadd.f32 %v1723, %v2158
        %v2160 = vpop.f32.mrf.mxu0
        %v2161 = vadd.f32 %v1727, %v2160
        %2162 = vmatprep.mubr.bf16.mxu0 0
        %2163 = vmatmul.mubr.bf16.gmra.mxu0 %v1643
        %v2164 = vpop.f32.mrf.mxu0
        %v2165 = vadd.f32 %v1723, %v2164
        %v2166 = vpop.f32.mrf.mxu0
        %v2167 = vadd.f32 %v1727, %v2166
        %v2168 = vpop.f32.mrf.mxu0
        %v2169 = vadd.f32 %v1723, %v2168
        %v2170 = vpop.f32.mrf.mxu0
        %v2171 = vadd.f32 %v1727, %v2170
        %2172 = vmatprep.mubr.bf16.mxu0 0
        %2173 = vmatmul.mubr.bf16.gmra.mxu0 %v1644
        %v2174 = vpop.f32.mrf.mxu0
        %v2175 = vadd.f32 %v1723, %v2174
        %v2176 = vpop.f32.mrf.mxu0
        %v2177 = vadd.f32 %v1727, %v2176
        %v2178 = vpop.f32.mrf.mxu0
        %v2179 = vadd.f32 %v1723, %v2178
        %v2180 = vpop.f32.mrf.mxu0
        %v2181 = vadd.f32 %v1727, %v2180
        %2182 = vmatprep.mubr.bf16.mxu0 0
        %2183 = vmatmul.mubr.bf16.gmra.mxu0 %v1645
        %v2184 = vpop.f32.mrf.mxu0
        %v2185 = vadd.f32 %v1723, %v2184
        %v2186 = vpop.f32.mrf.mxu0
        %v2187 = vadd.f32 %v1727, %v2186
        %v2188 = vpop.f32.mrf.mxu0
        %v2189 = vadd.f32 %v1723, %v2188
        %v2190 = vpop.f32.mrf.mxu0
        %v2191 = vadd.f32 %v1727, %v2190
        %2192 = vmatprep.mubr.bf16.mxu0 0
        %2193 = vmatmul.mubr.bf16.gmra.mxu0 %v1646
        %v2194 = vpop.f32.mrf.mxu0
        %v2195 = vadd.f32 %v1723, %v2194
        %v2196 = vpop.f32.mrf.mxu0
        %v2197 = vadd.f32 %v1727, %v2196
        %v2198 = vpop.f32.mrf.mxu0
        %v2199 = vadd.f32 %v1723, %v2198
        %v2200 = vpop.f32.mrf.mxu0
        %v2201 = vadd.f32 %v1727, %v2200
        %2202 = vmatprep.mubr.bf16.mxu0 0
        %2203 = vmatmul.mubr.bf16.gmra.mxu0 %v1647
        %v2204 = vpop.f32.mrf.mxu0
        %v2205 = vadd.f32 %v1723, %v2204
        %v2206 = vpop.f32.mrf.mxu0
        %v2207 = vadd.f32 %v1727, %v2206
        %v2208 = vpop.f32.mrf.mxu0
        %v2209 = vadd.f32 %v1723, %v2208
        %v2210 = vpop.f32.mrf.mxu0
        %v2211 = vadd.f32 %v1727, %v2210
        %2212 = vmatprep.mubr.bf16.mxu0 0
        %2213 = vmatmul.mubr.bf16.gmra.mxu0 %v1648
        %v2214 = vpop.f32.mrf.mxu0
        %v2215 = vadd.f32 %v1723, %v2214
        %v2216 = vpop.f32.mrf.mxu0
        %v2217 = vadd.f32 %v1727, %v2216
        %v2218 = vpop.f32.mrf.mxu0
        %v2219 = vadd.f32 %v1723, %v2218
        %v2220 = vpop.f32.mrf.mxu0
        %v2221 = vadd.f32 %v1727, %v2220
        %2222 = vmatprep.mubr.bf16.mxu0 0
        %2223 = vmatmul.mubr.bf16.gmra.mxu0 %v1649
        %v2224 = vpop.f32.mrf.mxu0
        %v2225 = vadd.f32 %v1723, %v2224
        %v2226 = vpop.f32.mrf.mxu0
        %v2227 = vadd.f32 %v1727, %v2226
        %v2228 = vpop.f32.mrf.mxu0
        %v2229 = vadd.f32 %v1723, %v2228
        %v2230 = vpop.f32.mrf.mxu0
        %v2231 = vadd.f32 %v1727, %v2230
        %2232 = vmatprep.mubr.bf16.mxu0 0
        %2233 = vmatmul.mubr.bf16.gmra.mxu0 %v1650
        %v2234 = vpop.f32.mrf.mxu0
        %v2235 = vadd.f32 %v1723, %v2234
        %v2236 = vpop.f32.mrf.mxu0
        %v2237 = vadd.f32 %v1727, %v2236
        %v2238 = vpop.f32.mrf.mxu0
        %v2239 = vadd.f32 %v1723, %v2238
        %v2240 = vpop.f32.mrf.mxu0
        %v2241 = vadd.f32 %v1727, %v2240
        %2242 = vmatprep.mubr.bf16.mxu0 0
        %2243 = vmatmul.mubr.bf16.gmra.mxu0 %v1651
        %v2244 = vpop.f32.mrf.mxu0
        %v2245 = vadd.f32 %v1723, %v2244
        %v2246 = vpop.f32.mrf.mxu0
        %v2247 = vadd.f32 %v1727, %v2246
        %v2248 = vpop.f32.mrf.mxu0
        %v2249 = vadd.f32 %v1723, %v2248
        %v2250 = vpop.f32.mrf.mxu0
        %v2251 = vadd.f32 %v1727, %v2250
        %2252 = vmatprep.mubr.bf16.mxu0 0
        %2253 = vmatmul.mubr.bf16.gmra.mxu0 %v1652
        %v2254 = vpop.f32.mrf.mxu0
        %v2255 = vadd.f32 %v1723, %v2254
        %v2256 = vpop.f32.mrf.mxu0
        %v2257 = vadd.f32 %v1727, %v2256
        %v2258 = vpop.f32.mrf.mxu0
        %v2259 = vadd.f32 %v1723, %v2258
        %v2260 = vpop.f32.mrf.mxu0
        %v2261 = vadd.f32 %v1727, %v2260
        %2262 = vmatprep.mubr.bf16.mxu0 0
        %2263 = vmatmul.mubr.bf16.gmra.mxu0 %v1653
        %v2264 = vpop.f32.mrf.mxu0
        %v2265 = vadd.f32 %v1723, %v2264
        %v2266 = vpop.f32.mrf.mxu0
        %v2267 = vadd.f32 %v1727, %v2266
        %v2268 = vpop.f32.mrf.mxu0
        %v2269 = vadd.f32 %v1723, %v2268
        %v2270 = vpop.f32.mrf.mxu0
        %v2271 = vadd.f32 %v1727, %v2270
        %2272 = vdwg.mxu0
        %2273 = vmatprep.subr.bf16.mxu0 %v2011
        %2274 = vmatpush1.bf16.msra.mxu0 %v2010
        %2275 = vmatprep.subr.bf16.mxu0 %v2003
        %2276 = vmatpush1.bf16.msra.mxu0 %v2002
        %2277 = vmatprep.subr.bf16.mxu0 %v1995
        %2278 = vmatpush1.bf16.msra.mxu0 %v1994
        %2279 = vmatprep.subr.bf16.mxu0 %v1987
        %2280 = vmatpush1.bf16.msra.mxu0 %v1986
        %2281 = vmatprep.subr.bf16.mxu0 %v1979
        %2282 = vmatpush1.bf16.msra.mxu0 %v1978
        %2283 = vmatprep.subr.bf16.mxu0 %v1971
        %2284 = vmatpush1.bf16.msra.mxu0 %v1970
        %2285 = vmatprep.subr.bf16.mxu0 %v1963
        %2286 = vmatpush1.bf16.msra.mxu0 %v1962
        %2287 = vmatprep.subr.bf16.mxu0 %v1955
        %2288 = vmatpush1.bf16.msra.mxu0 %v1954
        %2289 = vmatprep.subr.bf16.mxu0 0
        %2290 = vmatpush2.bf16.msra.mxu0 0
        %2291 = vmatprep.subr.bf16.mxu0 0
        %2292 = vmatpush2.bf16.msra.mxu0 0
        %2293 = vmatprep.subr.bf16.mxu0 0
        %2294 = vmatpush2.bf16.msra.mxu0 0
        %2295 = vmatprep.subr.bf16.mxu0 0
        %2296 = vmatpush2.bf16.msra.mxu0 0
        %2297 = vmatprep.subr.bf16.mxu0 0
        %2298 = vmatpush2.bf16.msra.mxu0 0
        %2299 = vmatprep.subr.bf16.mxu0 0
        %2300 = vmatpush2.bf16.msra.mxu0 0
        %2301 = vmatprep.subr.bf16.mxu0 0
        %2302 = vmatpush2.bf16.msra.mxu0 0
        %2303 = vmatprep.subr.bf16.mxu0 0
        %2304 = vmatpush2.bf16.msra.mxu0 0
        %2305 = vmatprep.mubr.bf16.mxu0 0
        %2306 = vmatmul.mubr.bf16.gmra.mxu0 %v1638
        %v2307 = vpop.f32.mrf.mxu0
        %v2308 = vadd.f32 %v1731, %v2307
        %v2309 = vpop.f32.mrf.mxu0
        %v2310 = vadd.f32 %v1735, %v2309
        %v2311 = vpop.f32.mrf.mxu0
        %v2312 = vadd.f32 %v1731, %v2311
        %v2313 = vpop.f32.mrf.mxu0
        %v2314 = vadd.f32 %v1735, %v2313
        %2315 = vmatprep.mubr.bf16.mxu0 0
        %2316 = vmatmul.mubr.bf16.gmra.mxu0 %v1639
        %v2317 = vpop.f32.mrf.mxu0
        %v2318 = vadd.f32 %v1731, %v2317
        %v2319 = vpop.f32.mrf.mxu0
        %v2320 = vadd.f32 %v1735, %v2319
        %v2321 = vpop.f32.mrf.mxu0
        %v2322 = vadd.f32 %v1731, %v2321
        %v2323 = vpop.f32.mrf.mxu0
        %v2324 = vadd.f32 %v1735, %v2323
        %2325 = vmatprep.mubr.bf16.mxu0 0
        %2326 = vmatmul.mubr.bf16.gmra.mxu0 %v1640
        %v2327 = vpop.f32.mrf.mxu0
        %v2328 = vadd.f32 %v1731, %v2327
        %v2329 = vpop.f32.mrf.mxu0
        %v2330 = vadd.f32 %v1735, %v2329
        %v2331 = vpop.f32.mrf.mxu0
        %v2332 = vadd.f32 %v1731, %v2331
        %v2333 = vpop.f32.mrf.mxu0
        %v2334 = vadd.f32 %v1735, %v2333
        %2335 = vmatprep.mubr.bf16.mxu0 0
        %2336 = vmatmul.mubr.bf16.gmra.mxu0 %v1641
        %v2337 = vpop.f32.mrf.mxu0
        %v2338 = vadd.f32 %v1731, %v2337
        %v2339 = vpop.f32.mrf.mxu0
        %v2340 = vadd.f32 %v1735, %v2339
        %v2341 = vpop.f32.mrf.mxu0
        %v2342 = vadd.f32 %v1731, %v2341
        %v2343 = vpop.f32.mrf.mxu0
        %v2344 = vadd.f32 %v1735, %v2343
        %2345 = vmatprep.mubr.bf16.mxu0 0
        %2346 = vmatmul.mubr.bf16.gmra.mxu0 %v1642
        %v2347 = vpop.f32.mrf.mxu0
        %v2348 = vadd.f32 %v1731, %v2347
        %v2349 = vpop.f32.mrf.mxu0
        %v2350 = vadd.f32 %v1735, %v2349
        %v2351 = vpop.f32.mrf.mxu0
        %v2352 = vadd.f32 %v1731, %v2351
        %v2353 = vpop.f32.mrf.mxu0
        %v2354 = vadd.f32 %v1735, %v2353
        %2355 = vmatprep.mubr.bf16.mxu0 0
        %2356 = vmatmul.mubr.bf16.gmra.mxu0 %v1643
        %v2357 = vpop.f32.mrf.mxu0
        %v2358 = vadd.f32 %v1731, %v2357
        %v2359 = vpop.f32.mrf.mxu0
        %v2360 = vadd.f32 %v1735, %v2359
        %v2361 = vpop.f32.mrf.mxu0
        %v2362 = vadd.f32 %v1731, %v2361
        %v2363 = vpop.f32.mrf.mxu0
        %v2364 = vadd.f32 %v1735, %v2363
        %2365 = vmatprep.mubr.bf16.mxu0 0
        %2366 = vmatmul.mubr.bf16.gmra.mxu0 %v1644
        %v2367 = vpop.f32.mrf.mxu0
        %v2368 = vadd.f32 %v1731, %v2367
        %v2369 = vpop.f32.mrf.mxu0
        %v2370 = vadd.f32 %v1735, %v2369
        %v2371 = vpop.f32.mrf.mxu0
        %v2372 = vadd.f32 %v1731, %v2371
        %v2373 = vpop.f32.mrf.mxu0
        %v2374 = vadd.f32 %v1735, %v2373
        %2375 = vmatprep.mubr.bf16.mxu0 0
        %2376 = vmatmul.mubr.bf16.gmra.mxu0 %v1645
        %v2377 = vpop.f32.mrf.mxu0
        %v2378 = vadd.f32 %v1731, %v2377
        %v2379 = vpop.f32.mrf.mxu0
        %v2380 = vadd.f32 %v1735, %v2379
        %v2381 = vpop.f32.mrf.mxu0
        %v2382 = vadd.f32 %v1731, %v2381
        %v2383 = vpop.f32.mrf.mxu0
        %v2384 = vadd.f32 %v1735, %v2383
        %2385 = vmatprep.mubr.bf16.mxu0 0
        %2386 = vmatmul.mubr.bf16.gmra.mxu0 %v1646
        %v2387 = vpop.f32.mrf.mxu0
        %v2388 = vadd.f32 %v1731, %v2387
        %v2389 = vpop.f32.mrf.mxu0
        %v2390 = vadd.f32 %v1735, %v2389
        %v2391 = vpop.f32.mrf.mxu0
        %v2392 = vadd.f32 %v1731, %v2391
        %v2393 = vpop.f32.mrf.mxu0
        %v2394 = vadd.f32 %v1735, %v2393
        %2395 = vmatprep.mubr.bf16.mxu0 0
        %2396 = vmatmul.mubr.bf16.gmra.mxu0 %v1647
        %v2397 = vpop.f32.mrf.mxu0
        %v2398 = vadd.f32 %v1731, %v2397
        %v2399 = vpop.f32.mrf.mxu0
        %v2400 = vadd.f32 %v1735, %v2399
        %v2401 = vpop.f32.mrf.mxu0
        %v2402 = vadd.f32 %v1731, %v2401
        %v2403 = vpop.f32.mrf.mxu0
        %v2404 = vadd.f32 %v1735, %v2403
        %2405 = vmatprep.mubr.bf16.mxu0 0
        %2406 = vmatmul.mubr.bf16.gmra.mxu0 %v1648
        %v2407 = vpop.f32.mrf.mxu0
        %v2408 = vadd.f32 %v1731, %v2407
        %v2409 = vpop.f32.mrf.mxu0
        %v2410 = vadd.f32 %v1735, %v2409
        %v2411 = vpop.f32.mrf.mxu0
        %v2412 = vadd.f32 %v1731, %v2411
        %v2413 = vpop.f32.mrf.mxu0
        %v2414 = vadd.f32 %v1735, %v2413
        %2415 = vmatprep.mubr.bf16.mxu0 0
        %2416 = vmatmul.mubr.bf16.gmra.mxu0 %v1649
        %v2417 = vpop.f32.mrf.mxu0
        %v2418 = vadd.f32 %v1731, %v2417
        %v2419 = vpop.f32.mrf.mxu0
        %v2420 = vadd.f32 %v1735, %v2419
        %v2421 = vpop.f32.mrf.mxu0
        %v2422 = vadd.f32 %v1731, %v2421
        %v2423 = vpop.f32.mrf.mxu0
        %v2424 = vadd.f32 %v1735, %v2423
        %2425 = vmatprep.mubr.bf16.mxu0 0
        %2426 = vmatmul.mubr.bf16.gmra.mxu0 %v1650
        %v2427 = vpop.f32.mrf.mxu0
        %v2428 = vadd.f32 %v1731, %v2427
        %v2429 = vpop.f32.mrf.mxu0
        %v2430 = vadd.f32 %v1735, %v2429
        %v2431 = vpop.f32.mrf.mxu0
        %v2432 = vadd.f32 %v1731, %v2431
        %v2433 = vpop.f32.mrf.mxu0
        %v2434 = vadd.f32 %v1735, %v2433
        %2435 = vmatprep.mubr.bf16.mxu0 0
        %2436 = vmatmul.mubr.bf16.gmra.mxu0 %v1651
        %v2437 = vpop.f32.mrf.mxu0
        %v2438 = vadd.f32 %v1731, %v2437
        %v2439 = vpop.f32.mrf.mxu0
        %v2440 = vadd.f32 %v1735, %v2439
        %v2441 = vpop.f32.mrf.mxu0
        %v2442 = vadd.f32 %v1731, %v2441
        %v2443 = vpop.f32.mrf.mxu0
        %v2444 = vadd.f32 %v1735, %v2443
        %2445 = vmatprep.mubr.bf16.mxu0 0
        %2446 = vmatmul.mubr.bf16.gmra.mxu0 %v1652
        %v2447 = vpop.f32.mrf.mxu0
        %v2448 = vadd.f32 %v1731, %v2447
        %v2449 = vpop.f32.mrf.mxu0
        %v2450 = vadd.f32 %v1735, %v2449
        %v2451 = vpop.f32.mrf.mxu0
        %v2452 = vadd.f32 %v1731, %v2451
        %v2453 = vpop.f32.mrf.mxu0
        %v2454 = vadd.f32 %v1735, %v2453
        %2455 = vmatprep.mubr.bf16.mxu0 0
        %2456 = vmatmul.mubr.bf16.gmra.mxu0 %v1653
        %v2457 = vpop.f32.mrf.mxu0
        %v2458 = vadd.f32 %v1731, %v2457
        %v2459 = vpop.f32.mrf.mxu0
        %v2460 = vadd.f32 %v1735, %v2459
        %v2461 = vpop.f32.mrf.mxu0
        %v2462 = vadd.f32 %v1731, %v2461
        %v2463 = vpop.f32.mrf.mxu0
        %v2464 = vadd.f32 %v1735, %v2463
        %2465 = vdwg.mxu0
        %2466 = vmatprep.subr.bf16.mxu0 %v2013
        %2467 = vmatpush1.bf16.msra.mxu0 %v2012
        %2468 = vmatprep.subr.bf16.mxu0 %v2005
        %2469 = vmatpush1.bf16.msra.mxu0 %v2004
        %2470 = vmatprep.subr.bf16.mxu0 %v1997
        %2471 = vmatpush1.bf16.msra.mxu0 %v1996
        %2472 = vmatprep.subr.bf16.mxu0 %v1989
        %2473 = vmatpush1.bf16.msra.mxu0 %v1988
        %2474 = vmatprep.subr.bf16.mxu0 %v1981
        %2475 = vmatpush1.bf16.msra.mxu0 %v1980
        %2476 = vmatprep.subr.bf16.mxu0 %v1973
        %2477 = vmatpush1.bf16.msra.mxu0 %v1972
        %2478 = vmatprep.subr.bf16.mxu0 %v1965
        %2479 = vmatpush1.bf16.msra.mxu0 %v1964
        %2480 = vmatprep.subr.bf16.mxu0 %v1957
        %2481 = vmatpush1.bf16.msra.mxu0 %v1956
        %2482 = vmatprep.subr.bf16.mxu0 0
        %2483 = vmatpush2.bf16.msra.mxu0 0
        %2484 = vmatprep.subr.bf16.mxu0 0
        %2485 = vmatpush2.bf16.msra.mxu0 0
        %2486 = vmatprep.subr.bf16.mxu0 0
        %2487 = vmatpush2.bf16.msra.mxu0 0
        %2488 = vmatprep.subr.bf16.mxu0 0
        %2489 = vmatpush2.bf16.msra.mxu0 0
        %2490 = vmatprep.subr.bf16.mxu0 0
        %2491 = vmatpush2.bf16.msra.mxu0 0
        %2492 = vmatprep.subr.bf16.mxu0 0
        %2493 = vmatpush2.bf16.msra.mxu0 0
        %2494 = vmatprep.subr.bf16.mxu0 0
        %2495 = vmatpush2.bf16.msra.mxu0 0
        %2496 = vmatprep.subr.bf16.mxu0 0
        %2497 = vmatpush2.bf16.msra.mxu0 0
        %2498 = vmatprep.mubr.bf16.mxu0 0
        %2499 = vmatmul.mubr.bf16.gmra.mxu0 %v1638
        %v2500 = vpop.f32.mrf.mxu0
        %v2501 = vadd.f32 %v1739, %v2500
        %v2502 = vpop.f32.mrf.mxu0
        %v2503 = vadd.f32 %v1743, %v2502
        %v2504 = vpop.f32.mrf.mxu0
        %v2505 = vadd.f32 %v1739, %v2504
        %v2506 = vpop.f32.mrf.mxu0
        %v2507 = vadd.f32 %v1743, %v2506
        %2508 = vmatprep.mubr.bf16.mxu0 0
        %2509 = vmatmul.mubr.bf16.gmra.mxu0 %v1639
        %v2510 = vpop.f32.mrf.mxu0
        %v2511 = vadd.f32 %v1739, %v2510
        %v2512 = vpop.f32.mrf.mxu0
        %v2513 = vadd.f32 %v1743, %v2512
        %v2514 = vpop.f32.mrf.mxu0
        %v2515 = vadd.f32 %v1739, %v2514
        %v2516 = vpop.f32.mrf.mxu0
        %v2517 = vadd.f32 %v1743, %v2516
        %2518 = vmatprep.mubr.bf16.mxu0 0
        %2519 = vmatmul.mubr.bf16.gmra.mxu0 %v1640
        %v2520 = vpop.f32.mrf.mxu0
        %v2521 = vadd.f32 %v1739, %v2520
        %v2522 = vpop.f32.mrf.mxu0
        %v2523 = vadd.f32 %v1743, %v2522
        %v2524 = vpop.f32.mrf.mxu0
        %v2525 = vadd.f32 %v1739, %v2524
        %v2526 = vpop.f32.mrf.mxu0
        %v2527 = vadd.f32 %v1743, %v2526
        %2528 = vmatprep.mubr.bf16.mxu0 0
        %2529 = vmatmul.mubr.bf16.gmra.mxu0 %v1641
        %v2530 = vpop.f32.mrf.mxu0
        %v2531 = vadd.f32 %v1739, %v2530
        %v2532 = vpop.f32.mrf.mxu0
        %v2533 = vadd.f32 %v1743, %v2532
        %v2534 = vpop.f32.mrf.mxu0
        %v2535 = vadd.f32 %v1739, %v2534
        %v2536 = vpop.f32.mrf.mxu0
        %v2537 = vadd.f32 %v1743, %v2536
        %2538 = vmatprep.mubr.bf16.mxu0 0
        %2539 = vmatmul.mubr.bf16.gmra.mxu0 %v1642
        %v2540 = vpop.f32.mrf.mxu0
        %v2541 = vadd.f32 %v1739, %v2540
        %v2542 = vpop.f32.mrf.mxu0
        %v2543 = vadd.f32 %v1743, %v2542
        %v2544 = vpop.f32.mrf.mxu0
        %v2545 = vadd.f32 %v1739, %v2544
        %v2546 = vpop.f32.mrf.mxu0
        %v2547 = vadd.f32 %v1743, %v2546
        %2548 = vmatprep.mubr.bf16.mxu0 0
        %2549 = vmatmul.mubr.bf16.gmra.mxu0 %v1643
        %v2550 = vpop.f32.mrf.mxu0
        %v2551 = vadd.f32 %v1739, %v2550
        %v2552 = vpop.f32.mrf.mxu0
        %v2553 = vadd.f32 %v1743, %v2552
        %v2554 = vpop.f32.mrf.mxu0
        %v2555 = vadd.f32 %v1739, %v2554
        %v2556 = vpop.f32.mrf.mxu0
        %v2557 = vadd.f32 %v1743, %v2556
        %2558 = vmatprep.mubr.bf16.mxu0 0
        %2559 = vmatmul.mubr.bf16.gmra.mxu0 %v1644
        %v2560 = vpop.f32.mrf.mxu0
        %v2561 = vadd.f32 %v1739, %v2560
        %v2562 = vpop.f32.mrf.mxu0
        %v2563 = vadd.f32 %v1743, %v2562
        %v2564 = vpop.f32.mrf.mxu0
        %v2565 = vadd.f32 %v1739, %v2564
        %v2566 = vpop.f32.mrf.mxu0
        %v2567 = vadd.f32 %v1743, %v2566
        %2568 = vmatprep.mubr.bf16.mxu0 0
        %2569 = vmatmul.mubr.bf16.gmra.mxu0 %v1645
        %v2570 = vpop.f32.mrf.mxu0
        %v2571 = vadd.f32 %v1739, %v2570
        %v2572 = vpop.f32.mrf.mxu0
        %v2573 = vadd.f32 %v1743, %v2572
        %v2574 = vpop.f32.mrf.mxu0
        %v2575 = vadd.f32 %v1739, %v2574
        %v2576 = vpop.f32.mrf.mxu0
        %v2577 = vadd.f32 %v1743, %v2576
        %2578 = vmatprep.mubr.bf16.mxu0 0
        %2579 = vmatmul.mubr.bf16.gmra.mxu0 %v1646
        %v2580 = vpop.f32.mrf.mxu0
        %v2581 = vadd.f32 %v1739, %v2580
        %v2582 = vpop.f32.mrf.mxu0
        %v2583 = vadd.f32 %v1743, %v2582
        %v2584 = vpop.f32.mrf.mxu0
        %v2585 = vadd.f32 %v1739, %v2584
        %v2586 = vpop.f32.mrf.mxu0
        %v2587 = vadd.f32 %v1743, %v2586
        %2588 = vmatprep.mubr.bf16.mxu0 0
        %2589 = vmatmul.mubr.bf16.gmra.mxu0 %v1647
        %v2590 = vpop.f32.mrf.mxu0
        %v2591 = vadd.f32 %v1739, %v2590
        %v2592 = vpop.f32.mrf.mxu0
        %v2593 = vadd.f32 %v1743, %v2592
        %v2594 = vpop.f32.mrf.mxu0
        %v2595 = vadd.f32 %v1739, %v2594
        %v2596 = vpop.f32.mrf.mxu0
        %v2597 = vadd.f32 %v1743, %v2596
        %2598 = vmatprep.mubr.bf16.mxu0 0
        %2599 = vmatmul.mubr.bf16.gmra.mxu0 %v1648
        %v2600 = vpop.f32.mrf.mxu0
        %v2601 = vadd.f32 %v1739, %v2600
        %v2602 = vpop.f32.mrf.mxu0
        %v2603 = vadd.f32 %v1743, %v2602
        %v2604 = vpop.f32.mrf.mxu0
        %v2605 = vadd.f32 %v1739, %v2604
        %v2606 = vpop.f32.mrf.mxu0
        %v2607 = vadd.f32 %v1743, %v2606
        %2608 = vmatprep.mubr.bf16.mxu0 0
        %2609 = vmatmul.mubr.bf16.gmra.mxu0 %v1649
        %v2610 = vpop.f32.mrf.mxu0
        %v2611 = vadd.f32 %v1739, %v2610
        %v2612 = vpop.f32.mrf.mxu0
        %v2613 = vadd.f32 %v1743, %v2612
        %v2614 = vpop.f32.mrf.mxu0
        %v2615 = vadd.f32 %v1739, %v2614
        %v2616 = vpop.f32.mrf.mxu0
        %v2617 = vadd.f32 %v1743, %v2616
        %2618 = vmatprep.mubr.bf16.mxu0 0
        %2619 = vmatmul.mubr.bf16.gmra.mxu0 %v1650
        %v2620 = vpop.f32.mrf.mxu0
        %v2621 = vadd.f32 %v1739, %v2620
        %v2622 = vpop.f32.mrf.mxu0
        %v2623 = vadd.f32 %v1743, %v2622
        %v2624 = vpop.f32.mrf.mxu0
        %v2625 = vadd.f32 %v1739, %v2624
        %v2626 = vpop.f32.mrf.mxu0
        %v2627 = vadd.f32 %v1743, %v2626
        %2628 = vmatprep.mubr.bf16.mxu0 0
        %2629 = vmatmul.mubr.bf16.gmra.mxu0 %v1651
        %v2630 = vpop.f32.mrf.mxu0
        %v2631 = vadd.f32 %v1739, %v2630
        %v2632 = vpop.f32.mrf.mxu0
        %v2633 = vadd.f32 %v1743, %v2632
        %v2634 = vpop.f32.mrf.mxu0
        %v2635 = vadd.f32 %v1739, %v2634
        %v2636 = vpop.f32.mrf.mxu0
        %v2637 = vadd.f32 %v1743, %v2636
        %2638 = vmatprep.mubr.bf16.mxu0 0
        %2639 = vmatmul.mubr.bf16.gmra.mxu0 %v1652
        %v2640 = vpop.f32.mrf.mxu0
        %v2641 = vadd.f32 %v1739, %v2640
        %v2642 = vpop.f32.mrf.mxu0
        %v2643 = vadd.f32 %v1743, %v2642
        %v2644 = vpop.f32.mrf.mxu0
        %v2645 = vadd.f32 %v1739, %v2644
        %v2646 = vpop.f32.mrf.mxu0
        %v2647 = vadd.f32 %v1743, %v2646
        %2648 = vmatprep.mubr.bf16.mxu0 0
        %2649 = vmatmul.mubr.bf16.gmra.mxu0 %v1653
        %v2650 = vpop.f32.mrf.mxu0
        %v2651 = vadd.f32 %v1739, %v2650
        %v2652 = vpop.f32.mrf.mxu0
        %v2653 = vadd.f32 %v1743, %v2652
        %v2654 = vpop.f32.mrf.mxu0
        %v2655 = vadd.f32 %v1739, %v2654
        %v2656 = vpop.f32.mrf.mxu0
        %v2657 = vadd.f32 %v1743, %v2656
        %2658 = vdwg.mxu0
        %2659 = vmatprep.subr.bf16.mxu0 %v2015
        %2660 = vmatpush1.bf16.msra.mxu0 %v2014
        %2661 = vmatprep.subr.bf16.mxu0 %v2007
        %2662 = vmatpush1.bf16.msra.mxu0 %v2006
        %2663 = vmatprep.subr.bf16.mxu0 %v1999
        %2664 = vmatpush1.bf16.msra.mxu0 %v1998
        %2665 = vmatprep.subr.bf16.mxu0 %v1991
        %2666 = vmatpush1.bf16.msra.mxu0 %v1990
        %2667 = vmatprep.subr.bf16.mxu0 %v1983
        %2668 = vmatpush1.bf16.msra.mxu0 %v1982
        %2669 = vmatprep.subr.bf16.mxu0 %v1975
        %2670 = vmatpush1.bf16.msra.mxu0 %v1974
        %2671 = vmatprep.subr.bf16.mxu0 %v1967
        %2672 = vmatpush1.bf16.msra.mxu0 %v1966
        %2673 = vmatprep.subr.bf16.mxu0 %v1959
        %2674 = vmatpush1.bf16.msra.mxu0 %v1958
        %2675 = vmatprep.subr.bf16.mxu0 0
        %2676 = vmatpush2.bf16.msra.mxu0 0
        %2677 = vmatprep.subr.bf16.mxu0 0
        %2678 = vmatpush2.bf16.msra.mxu0 0
        %2679 = vmatprep.subr.bf16.mxu0 0
        %2680 = vmatpush2.bf16.msra.mxu0 0
        %2681 = vmatprep.subr.bf16.mxu0 0
        %2682 = vmatpush2.bf16.msra.mxu0 0
        %2683 = vmatprep.subr.bf16.mxu0 0
        %2684 = vmatpush2.bf16.msra.mxu0 0
        %2685 = vmatprep.subr.bf16.mxu0 0
        %2686 = vmatpush2.bf16.msra.mxu0 0
        %2687 = vmatprep.subr.bf16.mxu0 0
        %2688 = vmatpush2.bf16.msra.mxu0 0
        %2689 = vmatprep.subr.bf16.mxu0 0
        %2690 = vmatpush2.bf16.msra.mxu0 0
        %2691 = vmatprep.mubr.bf16.mxu0 0
        %2692 = vmatmul.mubr.bf16.gmra.mxu0 %v1638
        %v2693 = vpop.f32.mrf.mxu0
        %v2694 = vadd.f32 %v1747, %v2693
        %v2695 = vpop.f32.mrf.mxu0
        %v2696 = vadd.f32 %v1751, %v2695
        %v2697 = vpop.f32.mrf.mxu0
        %v2698 = vadd.f32 %v1747, %v2697
        %v2699 = vpop.f32.mrf.mxu0
        %v2700 = vadd.f32 %v1751, %v2699
        %2701 = vmatprep.mubr.bf16.mxu0 0
        %2702 = vmatmul.mubr.bf16.gmra.mxu0 %v1639
        %v2703 = vpop.f32.mrf.mxu0
        %v2704 = vadd.f32 %v1747, %v2703
        %v2705 = vpop.f32.mrf.mxu0
        %v2706 = vadd.f32 %v1751, %v2705
        %v2707 = vpop.f32.mrf.mxu0
        %v2708 = vadd.f32 %v1747, %v2707
        %v2709 = vpop.f32.mrf.mxu0
        %v2710 = vadd.f32 %v1751, %v2709
        %2711 = vmatprep.mubr.bf16.mxu0 0
        %2712 = vmatmul.mubr.bf16.gmra.mxu0 %v1640
        %v2713 = vpop.f32.mrf.mxu0
        %v2714 = vadd.f32 %v1747, %v2713
        %v2715 = vpop.f32.mrf.mxu0
        %v2716 = vadd.f32 %v1751, %v2715
        %v2717 = vpop.f32.mrf.mxu0
        %v2718 = vadd.f32 %v1747, %v2717
        %v2719 = vpop.f32.mrf.mxu0
        %v2720 = vadd.f32 %v1751, %v2719
        %2721 = vmatprep.mubr.bf16.mxu0 0
        %2722 = vmatmul.mubr.bf16.gmra.mxu0 %v1641
        %v2723 = vpop.f32.mrf.mxu0
        %v2724 = vadd.f32 %v1747, %v2723
        %v2725 = vpop.f32.mrf.mxu0
        %v2726 = vadd.f32 %v1751, %v2725
        %v2727 = vpop.f32.mrf.mxu0
        %v2728 = vadd.f32 %v1747, %v2727
        %v2729 = vpop.f32.mrf.mxu0
        %v2730 = vadd.f32 %v1751, %v2729
        %2731 = vmatprep.mubr.bf16.mxu0 0
        %2732 = vmatmul.mubr.bf16.gmra.mxu0 %v1642
        %v2733 = vpop.f32.mrf.mxu0
        %v2734 = vadd.f32 %v1747, %v2733
        %v2735 = vpop.f32.mrf.mxu0
        %v2736 = vadd.f32 %v1751, %v2735
        %v2737 = vpop.f32.mrf.mxu0
        %v2738 = vadd.f32 %v1747, %v2737
        %v2739 = vpop.f32.mrf.mxu0
        %v2740 = vadd.f32 %v1751, %v2739
        %2741 = vmatprep.mubr.bf16.mxu0 0
        %2742 = vmatmul.mubr.bf16.gmra.mxu0 %v1643
        %v2743 = vpop.f32.mrf.mxu0
        %v2744 = vadd.f32 %v1747, %v2743
        %v2745 = vpop.f32.mrf.mxu0
        %v2746 = vadd.f32 %v1751, %v2745
        %v2747 = vpop.f32.mrf.mxu0
        %v2748 = vadd.f32 %v1747, %v2747
        %v2749 = vpop.f32.mrf.mxu0
        %v2750 = vadd.f32 %v1751, %v2749
        %2751 = vmatprep.mubr.bf16.mxu0 0
        %2752 = vmatmul.mubr.bf16.gmra.mxu0 %v1644
        %v2753 = vpop.f32.mrf.mxu0
        %v2754 = vadd.f32 %v1747, %v2753
        %v2755 = vpop.f32.mrf.mxu0
        %v2756 = vadd.f32 %v1751, %v2755
        %v2757 = vpop.f32.mrf.mxu0
        %v2758 = vadd.f32 %v1747, %v2757
        %v2759 = vpop.f32.mrf.mxu0
        %v2760 = vadd.f32 %v1751, %v2759
        %2761 = vmatprep.mubr.bf16.mxu0 0
        %2762 = vmatmul.mubr.bf16.gmra.mxu0 %v1645
        %v2763 = vpop.f32.mrf.mxu0
        %v2764 = vadd.f32 %v1747, %v2763
        %v2765 = vpop.f32.mrf.mxu0
        %v2766 = vadd.f32 %v1751, %v2765
        %v2767 = vpop.f32.mrf.mxu0
        %v2768 = vadd.f32 %v1747, %v2767
        %v2769 = vpop.f32.mrf.mxu0
        %v2770 = vadd.f32 %v1751, %v2769
        %2771 = vmatprep.mubr.bf16.mxu0 0
        %2772 = vmatmul.mubr.bf16.gmra.mxu0 %v1646
        %v2773 = vpop.f32.mrf.mxu0
        %v2774 = vadd.f32 %v1747, %v2773
        %v2775 = vpop.f32.mrf.mxu0
        %v2776 = vadd.f32 %v1751, %v2775
        %v2777 = vpop.f32.mrf.mxu0
        %v2778 = vadd.f32 %v1747, %v2777
        %v2779 = vpop.f32.mrf.mxu0
        %v2780 = vadd.f32 %v1751, %v2779
        %2781 = vmatprep.mubr.bf16.mxu0 0
        %2782 = vmatmul.mubr.bf16.gmra.mxu0 %v1647
        %v2783 = vpop.f32.mrf.mxu0
        %v2784 = vadd.f32 %v1747, %v2783
        %v2785 = vpop.f32.mrf.mxu0
        %v2786 = vadd.f32 %v1751, %v2785
        %v2787 = vpop.f32.mrf.mxu0
        %v2788 = vadd.f32 %v1747, %v2787
        %v2789 = vpop.f32.mrf.mxu0
        %v2790 = vadd.f32 %v1751, %v2789
        %2791 = vmatprep.mubr.bf16.mxu0 0
        %2792 = vmatmul.mubr.bf16.gmra.mxu0 %v1648
        %v2793 = vpop.f32.mrf.mxu0
        %v2794 = vadd.f32 %v1747, %v2793
        %v2795 = vpop.f32.mrf.mxu0
        %v2796 = vadd.f32 %v1751, %v2795
        %v2797 = vpop.f32.mrf.mxu0
        %v2798 = vadd.f32 %v1747, %v2797
        %v2799 = vpop.f32.mrf.mxu0
        %v2800 = vadd.f32 %v1751, %v2799
        %2801 = vmatprep.mubr.bf16.mxu0 0
        %2802 = vmatmul.mubr.bf16.gmra.mxu0 %v1649
        %v2803 = vpop.f32.mrf.mxu0
        %v2804 = vadd.f32 %v1747, %v2803
        %v2805 = vpop.f32.mrf.mxu0
        %v2806 = vadd.f32 %v1751, %v2805
        %v2807 = vpop.f32.mrf.mxu0
        %v2808 = vadd.f32 %v1747, %v2807
        %v2809 = vpop.f32.mrf.mxu0
        %v2810 = vadd.f32 %v1751, %v2809
        %2811 = vmatprep.mubr.bf16.mxu0 0
        %2812 = vmatmul.mubr.bf16.gmra.mxu0 %v1650
        %v2813 = vpop.f32.mrf.mxu0
        %v2814 = vadd.f32 %v1747, %v2813
        %v2815 = vpop.f32.mrf.mxu0
        %v2816 = vadd.f32 %v1751, %v2815
        %v2817 = vpop.f32.mrf.mxu0
        %v2818 = vadd.f32 %v1747, %v2817
        %v2819 = vpop.f32.mrf.mxu0
        %v2820 = vadd.f32 %v1751, %v2819
        %2821 = vmatprep.mubr.bf16.mxu0 0
        %2822 = vmatmul.mubr.bf16.gmra.mxu0 %v1651
        %v2823 = vpop.f32.mrf.mxu0
        %v2824 = vadd.f32 %v1747, %v2823
        %v2825 = vpop.f32.mrf.mxu0
        %v2826 = vadd.f32 %v1751, %v2825
        %v2827 = vpop.f32.mrf.mxu0
        %v2828 = vadd.f32 %v1747, %v2827
        %v2829 = vpop.f32.mrf.mxu0
        %v2830 = vadd.f32 %v1751, %v2829
        %2831 = vmatprep.mubr.bf16.mxu0 0
        %2832 = vmatmul.mubr.bf16.gmra.mxu0 %v1652
        %v2833 = vpop.f32.mrf.mxu0
        %v2834 = vadd.f32 %v1747, %v2833
        %v2835 = vpop.f32.mrf.mxu0
        %v2836 = vadd.f32 %v1751, %v2835
        %v2837 = vpop.f32.mrf.mxu0
        %v2838 = vadd.f32 %v1747, %v2837
        %v2839 = vpop.f32.mrf.mxu0
        %v2840 = vadd.f32 %v1751, %v2839
        %2841 = vmatprep.mubr.bf16.mxu0 0
        %2842 = vmatmul.mubr.bf16.gmra.mxu0 %v1653
        %v2843 = vpop.f32.mrf.mxu0
        %v2844 = vadd.f32 %v1747, %v2843
        %v2845 = vpop.f32.mrf.mxu0
        %v2846 = vadd.f32 %v1751, %v2845
        %v2847 = vpop.f32.mrf.mxu0
        %v2848 = vadd.f32 %v1747, %v2847
        %v2849 = vpop.f32.mrf.mxu0
        %v2850 = vadd.f32 %v1751, %v2849
        %2851 = vdwg.mxu0
        %v2852 = vmax.f32 %v2115, 0.0
        %v2853 = vmax.f32 %v2117, 0.0
        %v2854 = vmax.f32 %v2308, 0.0
        %v2855 = vmax.f32 %v2310, 0.0
        %v2856 = vmax.f32 %v2501, 0.0
        %v2857 = vmax.f32 %v2503, 0.0
        %v2858 = vmax.f32 %v2694, 0.0
        %v2859 = vmax.f32 %v2696, 0.0
        %v2860 = vmax.f32 %v2119, 0.0
        %v2861 = vmax.f32 %v2121, 0.0
        %v2862 = vmax.f32 %v2312, 0.0
        %v2863 = vmax.f32 %v2314, 0.0
        %v2864 = vmax.f32 %v2505, 0.0
        %v2865 = vmax.f32 %v2507, 0.0
        %v2866 = vmax.f32 %v2698, 0.0
        %v2867 = vmax.f32 %v2700, 0.0
        %v2868 = vmax.f32 %v2125, 0.0
        %v2869 = vmax.f32 %v2127, 0.0
        %v2870 = vmax.f32 %v2318, 0.0
        %v2871 = vmax.f32 %v2320, 0.0
        %v2872 = vmax.f32 %v2511, 0.0
        %v2873 = vmax.f32 %v2513, 0.0
        %v2874 = vmax.f32 %v2704, 0.0
        %v2875 = vmax.f32 %v2706, 0.0
        %v2876 = vmax.f32 %v2129, 0.0
        %v2877 = vmax.f32 %v2131, 0.0
        %v2878 = vmax.f32 %v2322, 0.0
        %v2879 = vmax.f32 %v2324, 0.0
        %v2880 = vmax.f32 %v2515, 0.0
        %v2881 = vmax.f32 %v2517, 0.0
        %v2882 = vmax.f32 %v2708, 0.0
        %v2883 = vmax.f32 %v2710, 0.0
        %v2884 = vmax.f32 %v2135, 0.0
        %v2885 = vmax.f32 %v2137, 0.0
        %v2886 = vmax.f32 %v2328, 0.0
        %v2887 = vmax.f32 %v2330, 0.0
        %v2888 = vmax.f32 %v2521, 0.0
        %v2889 = vmax.f32 %v2523, 0.0
        %v2890 = vmax.f32 %v2714, 0.0
        %v2891 = vmax.f32 %v2716, 0.0
        %v2892 = vmax.f32 %v2139, 0.0
        %v2893 = vmax.f32 %v2141, 0.0
        %v2894 = vmax.f32 %v2332, 0.0
        %v2895 = vmax.f32 %v2334, 0.0
        %v2896 = vmax.f32 %v2525, 0.0
        %v2897 = vmax.f32 %v2527, 0.0
        %v2898 = vmax.f32 %v2718, 0.0
        %v2899 = vmax.f32 %v2720, 0.0
        %v2900 = vmax.f32 %v2145, 0.0
        %v2901 = vmax.f32 %v2147, 0.0
        %v2902 = vmax.f32 %v2338, 0.0
        %v2903 = vmax.f32 %v2340, 0.0
        %v2904 = vmax.f32 %v2531, 0.0
        %v2905 = vmax.f32 %v2533, 0.0
        %v2906 = vmax.f32 %v2724, 0.0
        %v2907 = vmax.f32 %v2726, 0.0
        %v2908 = vmax.f32 %v2149, 0.0
        %v2909 = vmax.f32 %v2151, 0.0
        %v2910 = vmax.f32 %v2342, 0.0
        %v2911 = vmax.f32 %v2344, 0.0
        %v2912 = vmax.f32 %v2535, 0.0
        %v2913 = vmax.f32 %v2537, 0.0
        %v2914 = vmax.f32 %v2728, 0.0
        %v2915 = vmax.f32 %v2730, 0.0
        %v2916 = vmax.f32 %v2155, 0.0
        %v2917 = vmax.f32 %v2157, 0.0
        %v2918 = vmax.f32 %v2348, 0.0
        %v2919 = vmax.f32 %v2350, 0.0
        %v2920 = vmax.f32 %v2541, 0.0
        %v2921 = vmax.f32 %v2543, 0.0
        %v2922 = vmax.f32 %v2734, 0.0
        %v2923 = vmax.f32 %v2736, 0.0
        %v2924 = vmax.f32 %v2159, 0.0
        %v2925 = vmax.f32 %v2161, 0.0
        %v2926 = vmax.f32 %v2352, 0.0
        %v2927 = vmax.f32 %v2354, 0.0
        %v2928 = vmax.f32 %v2545, 0.0
        %v2929 = vmax.f32 %v2547, 0.0
        %v2930 = vmax.f32 %v2738, 0.0
        %v2931 = vmax.f32 %v2740, 0.0
        %v2932 = vmax.f32 %v2165, 0.0
        %v2933 = vmax.f32 %v2167, 0.0
        %v2934 = vmax.f32 %v2358, 0.0
        %v2935 = vmax.f32 %v2360, 0.0
        %v2936 = vmax.f32 %v2551, 0.0
        %v2937 = vmax.f32 %v2553, 0.0
        %v2938 = vmax.f32 %v2744, 0.0
        %v2939 = vmax.f32 %v2746, 0.0
        %v2940 = vmax.f32 %v2169, 0.0
        %v2941 = vmax.f32 %v2171, 0.0
        %v2942 = vmax.f32 %v2362, 0.0
        %v2943 = vmax.f32 %v2364, 0.0
        %v2944 = vmax.f32 %v2555, 0.0
        %v2945 = vmax.f32 %v2557, 0.0
        %v2946 = vmax.f32 %v2748, 0.0
        %v2947 = vmax.f32 %v2750, 0.0
        %v2948 = vmax.f32 %v2175, 0.0
        %v2949 = vmax.f32 %v2177, 0.0
        %v2950 = vmax.f32 %v2368, 0.0
        %v2951 = vmax.f32 %v2370, 0.0
        %v2952 = vmax.f32 %v2561, 0.0
        %v2953 = vmax.f32 %v2563, 0.0
        %v2954 = vmax.f32 %v2754, 0.0
        %v2955 = vmax.f32 %v2756, 0.0
        %v2956 = vmax.f32 %v2179, 0.0
        %v2957 = vmax.f32 %v2181, 0.0
        %v2958 = vmax.f32 %v2372, 0.0
        %v2959 = vmax.f32 %v2374, 0.0
        %v2960 = vmax.f32 %v2565, 0.0
        %v2961 = vmax.f32 %v2567, 0.0
        %v2962 = vmax.f32 %v2758, 0.0
        %v2963 = vmax.f32 %v2760, 0.0
        %v2964 = vmax.f32 %v2185, 0.0
        %v2965 = vmax.f32 %v2187, 0.0
        %v2966 = vmax.f32 %v2378, 0.0
        %v2967 = vmax.f32 %v2380, 0.0
        %v2968 = vmax.f32 %v2571, 0.0
        %v2969 = vmax.f32 %v2573, 0.0
        %v2970 = vmax.f32 %v2764, 0.0
        %v2971 = vmax.f32 %v2766, 0.0
        %v2972 = vmax.f32 %v2189, 0.0
        %v2973 = vmax.f32 %v2191, 0.0
        %v2974 = vmax.f32 %v2382, 0.0
        %v2975 = vmax.f32 %v2384, 0.0
        %v2976 = vmax.f32 %v2575, 0.0
        %v2977 = vmax.f32 %v2577, 0.0
        %v2978 = vmax.f32 %v2768, 0.0
        %v2979 = vmax.f32 %v2770, 0.0
        %v2980 = vmax.f32 %v2195, 0.0
        %v2981 = vmax.f32 %v2197, 0.0
        %v2982 = vmax.f32 %v2388, 0.0
        %v2983 = vmax.f32 %v2390, 0.0
        %v2984 = vmax.f32 %v2581, 0.0
        %v2985 = vmax.f32 %v2583, 0.0
        %v2986 = vmax.f32 %v2774, 0.0
        %v2987 = vmax.f32 %v2776, 0.0
        %v2988 = vmax.f32 %v2199, 0.0
        %v2989 = vmax.f32 %v2201, 0.0
        %v2990 = vmax.f32 %v2392, 0.0
        %v2991 = vmax.f32 %v2394, 0.0
        %v2992 = vmax.f32 %v2585, 0.0
        %v2993 = vmax.f32 %v2587, 0.0
        %v2994 = vmax.f32 %v2778, 0.0
        %v2995 = vmax.f32 %v2780, 0.0
        %v2996 = vmax.f32 %v2205, 0.0
        %v2997 = vmax.f32 %v2207, 0.0
        %v2998 = vmax.f32 %v2398, 0.0
        %v2999 = vmax.f32 %v2400, 0.0
        %v3000 = vmax.f32 %v2591, 0.0
        %v3001 = vmax.f32 %v2593, 0.0
        %v3002 = vmax.f32 %v2784, 0.0
        %v3003 = vmax.f32 %v2786, 0.0
        %v3004 = vmax.f32 %v2209, 0.0
        %v3005 = vmax.f32 %v2211, 0.0
        %v3006 = vmax.f32 %v2402, 0.0
        %v3007 = vmax.f32 %v2404, 0.0
        %v3008 = vmax.f32 %v2595, 0.0
        %v3009 = vmax.f32 %v2597, 0.0
        %v3010 = vmax.f32 %v2788, 0.0
        %v3011 = vmax.f32 %v2790, 0.0
        %v3012 = vmax.f32 %v2215, 0.0
        %v3013 = vmax.f32 %v2217, 0.0
        %v3014 = vmax.f32 %v2408, 0.0
        %v3015 = vmax.f32 %v2410, 0.0
        %v3016 = vmax.f32 %v2601, 0.0
        %v3017 = vmax.f32 %v2603, 0.0
        %v3018 = vmax.f32 %v2794, 0.0
        %v3019 = vmax.f32 %v2796, 0.0
        %v3020 = vmax.f32 %v2219, 0.0
        %v3021 = vmax.f32 %v2221, 0.0
        %v3022 = vmax.f32 %v2412, 0.0
        %v3023 = vmax.f32 %v2414, 0.0
        %v3024 = vmax.f32 %v2605, 0.0
        %v3025 = vmax.f32 %v2607, 0.0
        %v3026 = vmax.f32 %v2798, 0.0
        %v3027 = vmax.f32 %v2800, 0.0
        %v3028 = vmax.f32 %v2225, 0.0
        %v3029 = vmax.f32 %v2227, 0.0
        %v3030 = vmax.f32 %v2418, 0.0
        %v3031 = vmax.f32 %v2420, 0.0
        %v3032 = vmax.f32 %v2611, 0.0
        %v3033 = vmax.f32 %v2613, 0.0
        %v3034 = vmax.f32 %v2804, 0.0
        %v3035 = vmax.f32 %v2806, 0.0
        %v3036 = vmax.f32 %v2229, 0.0
        %v3037 = vmax.f32 %v2231, 0.0
        %v3038 = vmax.f32 %v2422, 0.0
        %v3039 = vmax.f32 %v2424, 0.0
        %v3040 = vmax.f32 %v2615, 0.0
        %v3041 = vmax.f32 %v2617, 0.0
        %v3042 = vmax.f32 %v2808, 0.0
        %v3043 = vmax.f32 %v2810, 0.0
        %v3044 = vmax.f32 %v2235, 0.0
        %v3045 = vmax.f32 %v2237, 0.0
        %v3046 = vmax.f32 %v2428, 0.0
        %v3047 = vmax.f32 %v2430, 0.0
        %v3048 = vmax.f32 %v2621, 0.0
        %v3049 = vmax.f32 %v2623, 0.0
        %v3050 = vmax.f32 %v2814, 0.0
        %v3051 = vmax.f32 %v2816, 0.0
        %v3052 = vmax.f32 %v2239, 0.0
        %v3053 = vmax.f32 %v2241, 0.0
        %v3054 = vmax.f32 %v2432, 0.0
        %v3055 = vmax.f32 %v2434, 0.0
        %v3056 = vmax.f32 %v2625, 0.0
        %v3057 = vmax.f32 %v2627, 0.0
        %v3058 = vmax.f32 %v2818, 0.0
        %v3059 = vmax.f32 %v2820, 0.0
        %v3060 = vmax.f32 %v2245, 0.0
        %v3061 = vmax.f32 %v2247, 0.0
        %v3062 = vmax.f32 %v2438, 0.0
        %v3063 = vmax.f32 %v2440, 0.0
        %v3064 = vmax.f32 %v2631, 0.0
        %v3065 = vmax.f32 %v2633, 0.0
        %v3066 = vmax.f32 %v2824, 0.0
        %v3067 = vmax.f32 %v2826, 0.0
        %v3068 = vmax.f32 %v2249, 0.0
        %v3069 = vmax.f32 %v2251, 0.0
        %v3070 = vmax.f32 %v2442, 0.0
        %v3071 = vmax.f32 %v2444, 0.0
        %v3072 = vmax.f32 %v2635, 0.0
        %v3073 = vmax.f32 %v2637, 0.0
        %v3074 = vmax.f32 %v2828, 0.0
        %v3075 = vmax.f32 %v2830, 0.0
        %v3076 = vmax.f32 %v2255, 0.0
        %v3077 = vmax.f32 %v2257, 0.0
        %v3078 = vmax.f32 %v2448, 0.0
        %v3079 = vmax.f32 %v2450, 0.0
        %v3080 = vmax.f32 %v2641, 0.0
        %v3081 = vmax.f32 %v2643, 0.0
        %v3082 = vmax.f32 %v2834, 0.0
        %v3083 = vmax.f32 %v2836, 0.0
        %v3084 = vmax.f32 %v2259, 0.0
        %v3085 = vmax.f32 %v2261, 0.0
        %v3086 = vmax.f32 %v2452, 0.0
        %v3087 = vmax.f32 %v2454, 0.0
        %v3088 = vmax.f32 %v2645, 0.0
        %v3089 = vmax.f32 %v2647, 0.0
        %v3090 = vmax.f32 %v2838, 0.0
        %v3091 = vmax.f32 %v2840, 0.0
        %v3092 = vmax.f32 %v2265, 0.0
        %v3093 = vmax.f32 %v2267, 0.0
        %v3094 = vmax.f32 %v2458, 0.0
        %v3095 = vmax.f32 %v2460, 0.0
        %v3096 = vmax.f32 %v2651, 0.0
        %v3097 = vmax.f32 %v2653, 0.0
        %v3098 = vmax.f32 %v2844, 0.0
        %v3099 = vmax.f32 %v2846, 0.0
        %v3100 = vmax.f32 %v2269, 0.0
        %v3101 = vmax.f32 %v2271, 0.0
        %v3102 = vmax.f32 %v2462, 0.0
        %v3103 = vmax.f32 %v2464, 0.0
        %v3104 = vmax.f32 %v2655, 0.0
        %v3105 = vmax.f32 %v2657, 0.0
        %v3106 = vmax.f32 %v2848, 0.0
        %v3107 = vmax.f32 %v2850, 0.0
        %v3108 = vmax.f32 %v2852, %v2860
        %v3109 = vmax.f32 %v3108, %v2868
        %v3110 = vmax.f32 %v3109, %v2876
        %v3111 = vmax.f32 %v3110, %v2884
        %v3112 = vmax.f32 %v3111, %v2892
        %v3113 = vmax.f32 %v3112, %v2900
        %v3114 = vmax.f32 %v3113, %v2908
        %v3115 = vmax.f32 %v3114, %v2916
        %v3116 = vmax.f32 %v3115, %v2924
        %v3117 = vmax.f32 %v3116, %v2932
        %v3118 = vmax.f32 %v3117, %v2940
        %v3119 = vmax.f32 %v3118, %v2948
        %v3120 = vmax.f32 %v3119, %v2956
        %v3121 = vmax.f32 %v3120, %v2964
        %v3122 = vmax.f32 %v3121, %v2972
        %v3123 = vrot.slane %v3122, 4
        %v3124 = vmax.f32 %v3122, %v3123
        %v3125 = vrot.slane %v3124, 2
        %v3126 = vmax.f32 %v3124, %v3125
        %v3127 = vrot.slane %v3126, 1
        %v3128 = vmax.f32 %v3126, %v3127
        %v3129 = vmax.f32 %v2853, %v2861
        %v3130 = vmax.f32 %v3129, %v2869
        %v3131 = vmax.f32 %v3130, %v2877
        %v3132 = vmax.f32 %v3131, %v2885
        %v3133 = vmax.f32 %v3132, %v2893
        %v3134 = vmax.f32 %v3133, %v2901
        %v3135 = vmax.f32 %v3134, %v2909
        %v3136 = vmax.f32 %v3135, %v2917
        %v3137 = vmax.f32 %v3136, %v2925
        %v3138 = vmax.f32 %v3137, %v2933
        %v3139 = vmax.f32 %v3138, %v2941
        %v3140 = vmax.f32 %v3139, %v2949
        %v3141 = vmax.f32 %v3140, %v2957
        %v3142 = vmax.f32 %v3141, %v2965
        %v3143 = vmax.f32 %v3142, %v2973
        %v3144 = vrot.slane %v3143, 4
        %v3145 = vmax.f32 %v3143, %v3144
        %v3146 = vrot.slane %v3145, 2
        %v3147 = vmax.f32 %v3145, %v3146
        %v3148 = vrot.slane %v3147, 1
        %v3149 = vmax.f32 %v3147, %v3148
        %v3150 = vmax.f32 %v2854, %v2862
        %v3151 = vmax.f32 %v3150, %v2870
        %v3152 = vmax.f32 %v3151, %v2878
        %v3153 = vmax.f32 %v3152, %v2886
        %v3154 = vmax.f32 %v3153, %v2894
        %v3155 = vmax.f32 %v3154, %v2902
        %v3156 = vmax.f32 %v3155, %v2910
        %v3157 = vmax.f32 %v3156, %v2918
        %v3158 = vmax.f32 %v3157, %v2926
        %v3159 = vmax.f32 %v3158, %v2934
        %v3160 = vmax.f32 %v3159, %v2942
        %v3161 = vmax.f32 %v3160, %v2950
        %v3162 = vmax.f32 %v3161, %v2958
        %v3163 = vmax.f32 %v3162, %v2966
        %v3164 = vmax.f32 %v3163, %v2974
        %v3165 = vrot.slane %v3164, 4
        %v3166 = vmax.f32 %v3164, %v3165
        %v3167 = vrot.slane %v3166, 2
        %v3168 = vmax.f32 %v3166, %v3167
        %v3169 = vrot.slane %v3168, 1
        %v3170 = vmax.f32 %v3168, %v3169
        %v3171 = vmax.f32 %v2855, %v2863
        %v3172 = vmax.f32 %v3171, %v2871
        %v3173 = vmax.f32 %v3172, %v2879
        %v3174 = vmax.f32 %v3173, %v2887
        %v3175 = vmax.f32 %v3174, %v2895
        %v3176 = vmax.f32 %v3175, %v2903
        %v3177 = vmax.f32 %v3176, %v2911
        %v3178 = vmax.f32 %v3177, %v2919
        %v3179 = vmax.f32 %v3178, %v2927
        %v3180 = vmax.f32 %v3179, %v2935
        %v3181 = vmax.f32 %v3180, %v2943
        %v3182 = vmax.f32 %v3181, %v2951
        %v3183 = vmax.f32 %v3182, %v2959
        %v3184 = vmax.f32 %v3183, %v2967
        %v3185 = vmax.f32 %v3184, %v2975
        %v3186 = vrot.slane %v3185, 4
        %v3187 = vmax.f32 %v3185, %v3186
        %v3188 = vrot.slane %v3187, 2
        %v3189 = vmax.f32 %v3187, %v3188
        %v3190 = vrot.slane %v3189, 1
        %v3191 = vmax.f32 %v3189, %v3190
        %v3192 = vmax.f32 %v2856, %v2864
        %v3193 = vmax.f32 %v3192, %v2872
        %v3194 = vmax.f32 %v3193, %v2880
        %v3195 = vmax.f32 %v3194, %v2888
        %v3196 = vmax.f32 %v3195, %v2896
        %v3197 = vmax.f32 %v3196, %v2904
        %v3198 = vmax.f32 %v3197, %v2912
        %v3199 = vmax.f32 %v3198, %v2920
        %v3200 = vmax.f32 %v3199, %v2928
        %v3201 = vmax.f32 %v3200, %v2936
        %v3202 = vmax.f32 %v3201, %v2944
        %v3203 = vmax.f32 %v3202, %v2952
        %v3204 = vmax.f32 %v3203, %v2960
        %v3205 = vmax.f32 %v3204, %v2968
        %v3206 = vmax.f32 %v3205, %v2976
        %v3207 = vrot.slane %v3206, 4
        %v3208 = vmax.f32 %v3206, %v3207
        %v3209 = vrot.slane %v3208, 2
        %v3210 = vmax.f32 %v3208, %v3209
        %v3211 = vrot.slane %v3210, 1
        %v3212 = vmax.f32 %v3210, %v3211
        %v3213 = vmax.f32 %v2857, %v2865
        %v3214 = vmax.f32 %v3213, %v2873
        %v3215 = vmax.f32 %v3214, %v2881
        %v3216 = vmax.f32 %v3215, %v2889
        %v3217 = vmax.f32 %v3216, %v2897
        %v3218 = vmax.f32 %v3217, %v2905
        %v3219 = vmax.f32 %v3218, %v2913
        %v3220 = vmax.f32 %v3219, %v2921
        %v3221 = vmax.f32 %v3220, %v2929
        %v3222 = vmax.f32 %v3221, %v2937
        %v3223 = vmax.f32 %v3222, %v2945
        %v3224 = vmax.f32 %v3223, %v2953
        %v3225 = vmax.f32 %v3224, %v2961
        %v3226 = vmax.f32 %v3225, %v2969
        %v3227 = vmax.f32 %v3226, %v2977
        %v3228 = vrot.slane %v3227, 4
        %v3229 = vmax.f32 %v3227, %v3228
        %v3230 = vrot.slane %v3229, 2
        %v3231 = vmax.f32 %v3229, %v3230
        %v3232 = vrot.slane %v3231, 1
        %v3233 = vmax.f32 %v3231, %v3232
        %v3234 = vmax.f32 %v2858, %v2866
        %v3235 = vmax.f32 %v3234, %v2874
        %v3236 = vmax.f32 %v3235, %v2882
        %v3237 = vmax.f32 %v3236, %v2890
        %v3238 = vmax.f32 %v3237, %v2898
        %v3239 = vmax.f32 %v3238, %v2906
        %v3240 = vmax.f32 %v3239, %v2914
        %v3241 = vmax.f32 %v3240, %v2922
        %v3242 = vmax.f32 %v3241, %v2930
        %v3243 = vmax.f32 %v3242, %v2938
        %v3244 = vmax.f32 %v3243, %v2946
        %v3245 = vmax.f32 %v3244, %v2954
        %v3246 = vmax.f32 %v3245, %v2962
        %v3247 = vmax.f32 %v3246, %v2970
        %v3248 = vmax.f32 %v3247, %v2978
        %v3249 = vrot.slane %v3248, 4
        %v3250 = vmax.f32 %v3248, %v3249
        %v3251 = vrot.slane %v3250, 2
        %v3252 = vmax.f32 %v3250, %v3251
        %v3253 = vrot.slane %v3252, 1
        %v3254 = vmax.f32 %v3252, %v3253
        %v3255 = vmax.f32 %v2859, %v2867
        %v3256 = vmax.f32 %v3255, %v2875
        %v3257 = vmax.f32 %v3256, %v2883
        %v3258 = vmax.f32 %v3257, %v2891
        %v3259 = vmax.f32 %v3258, %v2899
        %v3260 = vmax.f32 %v3259, %v2907
        %v3261 = vmax.f32 %v3260, %v2915
        %v3262 = vmax.f32 %v3261, %v2923
        %v3263 = vmax.f32 %v3262, %v2931
        %v3264 = vmax.f32 %v3263, %v2939
        %v3265 = vmax.f32 %v3264, %v2947
        %v3266 = vmax.f32 %v3265, %v2955
        %v3267 = vmax.f32 %v3266, %v2963
        %v3268 = vmax.f32 %v3267, %v2971
        %v3269 = vmax.f32 %v3268, %v2979
        %v3270 = vrot.slane %v3269, 4
        %v3271 = vmax.f32 %v3269, %v3270
        %v3272 = vrot.slane %v3271, 2
        %v3273 = vmax.f32 %v3271, %v3272
        %v3274 = vrot.slane %v3273, 1
        %v3275 = vmax.f32 %v3273, %v3274
        %v3276 = vmax.f32 %v2980, %v2988
        %v3277 = vmax.f32 %v3276, %v2996
        %v3278 = vmax.f32 %v3277, %v3004
        %v3279 = vmax.f32 %v3278, %v3012
        %v3280 = vmax.f32 %v3279, %v3020
        %v3281 = vmax.f32 %v3280, %v3028
        %v3282 = vmax.f32 %v3281, %v3036
        %v3283 = vmax.f32 %v3282, %v3044
        %v3284 = vmax.f32 %v3283, %v3052
        %v3285 = vmax.f32 %v3284, %v3060
        %v3286 = vmax.f32 %v3285, %v3068
        %v3287 = vmax.f32 %v3286, %v3076
        %v3288 = vmax.f32 %v3287, %v3084
        %v3289 = vmax.f32 %v3288, %v3092
        %v3290 = vmax.f32 %v3289, %v3100
        %v3291 = vrot.slane %v3290, 4
        %v3292 = vmax.f32 %v3290, %v3291
        %v3293 = vrot.slane %v3292, 2
        %v3294 = vmax.f32 %v3292, %v3293
        %v3295 = vrot.slane %v3294, 1
        %v3296 = vmax.f32 %v3294, %v3295
        %v3297 = vmax.f32 %v2981, %v2989
        %v3298 = vmax.f32 %v3297, %v2997
        %v3299 = vmax.f32 %v3298, %v3005
        %v3300 = vmax.f32 %v3299, %v3013
        %v3301 = vmax.f32 %v3300, %v3021
        %v3302 = vmax.f32 %v3301, %v3029
        %v3303 = vmax.f32 %v3302, %v3037
        %v3304 = vmax.f32 %v3303, %v3045
        %v3305 = vmax.f32 %v3304, %v3053
        %v3306 = vmax.f32 %v3305, %v3061
        %v3307 = vmax.f32 %v3306, %v3069
        %v3308 = vmax.f32 %v3307, %v3077
        %v3309 = vmax.f32 %v3308, %v3085
        %v3310 = vmax.f32 %v3309, %v3093
        %v3311 = vmax.f32 %v3310, %v3101
        %v3312 = vrot.slane %v3311, 4
        %v3313 = vmax.f32 %v3311, %v3312
        %v3314 = vrot.slane %v3313, 2
        %v3315 = vmax.f32 %v3313, %v3314
        %v3316 = vrot.slane %v3315, 1
        %v3317 = vmax.f32 %v3315, %v3316
        %v3318 = vmax.f32 %v2982, %v2990
        %v3319 = vmax.f32 %v3318, %v2998
        %v3320 = vmax.f32 %v3319, %v3006
        %v3321 = vmax.f32 %v3320, %v3014
        %v3322 = vmax.f32 %v3321, %v3022
        %v3323 = vmax.f32 %v3322, %v3030
        %v3324 = vmax.f32 %v3323, %v3038
        %v3325 = vmax.f32 %v3324, %v3046
        %v3326 = vmax.f32 %v3325, %v3054
        %v3327 = vmax.f32 %v3326, %v3062
        %v3328 = vmax.f32 %v3327, %v3070
        %v3329 = vmax.f32 %v3328, %v3078
        %v3330 = vmax.f32 %v3329, %v3086
        %v3331 = vmax.f32 %v3330, %v3094
        %v3332 = vmax.f32 %v3331, %v3102
        %v3333 = vrot.slane %v3332, 4
        %v3334 = vmax.f32 %v3332, %v3333
        %v3335 = vrot.slane %v3334, 2
        %v3336 = vmax.f32 %v3334, %v3335
        %v3337 = vrot.slane %v3336, 1
        %v3338 = vmax.f32 %v3336, %v3337
        %v3339 = vmax.f32 %v2983, %v2991
        %v3340 = vmax.f32 %v3339, %v2999
        %v3341 = vmax.f32 %v3340, %v3007
        %v3342 = vmax.f32 %v3341, %v3015
        %v3343 = vmax.f32 %v3342, %v3023
        %v3344 = vmax.f32 %v3343, %v3031
        %v3345 = vmax.f32 %v3344, %v3039
        %v3346 = vmax.f32 %v3345, %v3047
        %v3347 = vmax.f32 %v3346, %v3055
        %v3348 = vmax.f32 %v3347, %v3063
        %v3349 = vmax.f32 %v3348, %v3071
        %v3350 = vmax.f32 %v3349, %v3079
        %v3351 = vmax.f32 %v3350, %v3087
        %v3352 = vmax.f32 %v3351, %v3095
        %v3353 = vmax.f32 %v3352, %v3103
        %v3354 = vrot.slane %v3353, 4
        %v3355 = vmax.f32 %v3353, %v3354
        %v3356 = vrot.slane %v3355, 2
        %v3357 = vmax.f32 %v3355, %v3356
        %v3358 = vrot.slane %v3357, 1
        %v3359 = vmax.f32 %v3357, %v3358
        %v3360 = vmax.f32 %v2984, %v2992
        %v3361 = vmax.f32 %v3360, %v3000
        %v3362 = vmax.f32 %v3361, %v3008
        %v3363 = vmax.f32 %v3362, %v3016
        %v3364 = vmax.f32 %v3363, %v3024
        %v3365 = vmax.f32 %v3364, %v3032
        %v3366 = vmax.f32 %v3365, %v3040
        %v3367 = vmax.f32 %v3366, %v3048
        %v3368 = vmax.f32 %v3367, %v3056
        %v3369 = vmax.f32 %v3368, %v3064
        %v3370 = vmax.f32 %v3369, %v3072
        %v3371 = vmax.f32 %v3370, %v3080
        %v3372 = vmax.f32 %v3371, %v3088
        %v3373 = vmax.f32 %v3372, %v3096
        %v3374 = vmax.f32 %v3373, %v3104
        %v3375 = vrot.slane %v3374, 4
        %v3376 = vmax.f32 %v3374, %v3375
        %v3377 = vrot.slane %v3376, 2
        %v3378 = vmax.f32 %v3376, %v3377
        %v3379 = vrot.slane %v3378, 1
        %v3380 = vmax.f32 %v3378, %v3379
        %v3381 = vmax.f32 %v2985, %v2993
        %v3382 = vmax.f32 %v3381, %v3001
        %v3383 = vmax.f32 %v3382, %v3009
        %v3384 = vmax.f32 %v3383, %v3017
        %v3385 = vmax.f32 %v3384, %v3025
        %v3386 = vmax.f32 %v3385, %v3033
        %v3387 = vmax.f32 %v3386, %v3041
        %v3388 = vmax.f32 %v3387, %v3049
        %v3389 = vmax.f32 %v3388, %v3057
        %v3390 = vmax.f32 %v3389, %v3065
        %v3391 = vmax.f32 %v3390, %v3073
        %v3392 = vmax.f32 %v3391, %v3081
        %v3393 = vmax.f32 %v3392, %v3089
        %v3394 = vmax.f32 %v3393, %v3097
        %v3395 = vmax.f32 %v3394, %v3105
        %v3396 = vrot.slane %v3395, 4
        %v3397 = vmax.f32 %v3395, %v3396
        %v3398 = vrot.slane %v3397, 2
        %v3399 = vmax.f32 %v3397, %v3398
        %v3400 = vrot.slane %v3399, 1
        %v3401 = vmax.f32 %v3399, %v3400
        %v3402 = vmax.f32 %v2986, %v2994
        %v3403 = vmax.f32 %v3402, %v3002
        %v3404 = vmax.f32 %v3403, %v3010
        %v3405 = vmax.f32 %v3404, %v3018
        %v3406 = vmax.f32 %v3405, %v3026
        %v3407 = vmax.f32 %v3406, %v3034
        %v3408 = vmax.f32 %v3407, %v3042
        %v3409 = vmax.f32 %v3408, %v3050
        %v3410 = vmax.f32 %v3409, %v3058
        %v3411 = vmax.f32 %v3410, %v3066
        %v3412 = vmax.f32 %v3411, %v3074
        %v3413 = vmax.f32 %v3412, %v3082
        %v3414 = vmax.f32 %v3413, %v3090
        %v3415 = vmax.f32 %v3414, %v3098
        %v3416 = vmax.f32 %v3415, %v3106
        %v3417 = vrot.slane %v3416, 4
        %v3418 = vmax.f32 %v3416, %v3417
        %v3419 = vrot.slane %v3418, 2
        %v3420 = vmax.f32 %v3418, %v3419
        %v3421 = vrot.slane %v3420, 1
        %v3422 = vmax.f32 %v3420, %v3421
        %v3423 = vmax.f32 %v2987, %v2995
        %v3424 = vmax.f32 %v3423, %v3003
        %v3425 = vmax.f32 %v3424, %v3011
        %v3426 = vmax.f32 %v3425, %v3019
        %v3427 = vmax.f32 %v3426, %v3027
        %v3428 = vmax.f32 %v3427, %v3035
        %v3429 = vmax.f32 %v3428, %v3043
        %v3430 = vmax.f32 %v3429, %v3051
        %v3431 = vmax.f32 %v3430, %v3059
        %v3432 = vmax.f32 %v3431, %v3067
        %v3433 = vmax.f32 %v3432, %v3075
        %v3434 = vmax.f32 %v3433, %v3083
        %v3435 = vmax.f32 %v3434, %v3091
        %v3436 = vmax.f32 %v3435, %v3099
        %v3437 = vmax.f32 %v3436, %v3107
        %v3438 = vrot.slane %v3437, 4
        %v3439 = vmax.f32 %v3437, %v3438
        %v3440 = vrot.slane %v3439, 2
        %v3441 = vmax.f32 %v3439, %v3440
        %v3442 = vrot.slane %v3441, 1
        %v3443 = vmax.f32 %v3441, %v3442
        %v3444 = vld [vmem:[#allocation2] sm:$0xff]
        %v3445 = vld [vmem:[#allocation2 + $0x8] sm:$0xff]
        %v3462 = vcombine.low %v3128, %v3149
        %v3463 = vcombine.low %v3170, %v3191
        %v3465 = vunpack.c.l.s4 1983009808
        %v3466 = vunpack.c.0.s8 %v3465
        %v3467 = vlaneseq
        %v3468 = vshrl.u32 %v3467, 7
        %v3469 = vsub.s32 %v3466, %v3468
        %v3470 = vrot.slane %v3462, %v3469
        %v3472 = vunpack.c.l.s4 1983009808
        %v3473 = vunpack.c.0.s8 %v3472
        %v3474 = vlaneseq
        %v3475 = vshrl.u32 %v3474, 7
        %v3476 = vsub.s32 %v3473, %v3475
        %v3477 = vrot.slane %v3463, %v3476
        %v3478 = vcombine.low %v3470, %v3477
        %v3479 = vcombine.low %v3212, %v3233
        %v3480 = vcombine.low %v3254, %v3275
        %v3482 = vunpack.c.l.s4 1983009808
        %v3483 = vunpack.c.0.s8 %v3482
        %v3484 = vlaneseq
        %v3485 = vshrl.u32 %v3484, 7
        %v3486 = vsub.s32 %v3483, %v3485
        %v3487 = vrot.slane %v3479, %v3486
        %v3489 = vunpack.c.l.s4 1983009808
        %v3490 = vunpack.c.0.s8 %v3489
        %v3491 = vlaneseq
        %v3492 = vshrl.u32 %v3491, 7
        %v3493 = vsub.s32 %v3490, %v3492
        %v3494 = vrot.slane %v3480, %v3493
        %v3495 = vcombine.low %v3487, %v3494
        %v3496 = vcombine.low %v3296, %v3317
        %v3497 = vcombine.low %v3338, %v3359
        %v3499 = vunpack.c.l.s4 1983009808
        %v3500 = vunpack.c.0.s8 %v3499
        %v3501 = vlaneseq
        %v3502 = vshrl.u32 %v3501, 7
        %v3503 = vsub.s32 %v3500, %v3502
        %v3504 = vrot.slane %v3496, %v3503
        %v3506 = vunpack.c.l.s4 1983009808
        %v3507 = vunpack.c.0.s8 %v3506
        %v3508 = vlaneseq
        %v3509 = vshrl.u32 %v3508, 7
        %v3510 = vsub.s32 %v3507, %v3509
        %v3511 = vrot.slane %v3497, %v3510
        %v3512 = vcombine.low %v3504, %v3511
        %v3513 = vcombine.low %v3380, %v3401
        %v3514 = vcombine.low %v3422, %v3443
        %v3516 = vunpack.c.l.s4 1983009808
        %v3517 = vunpack.c.0.s8 %v3516
        %v3518 = vlaneseq
        %v3519 = vshrl.u32 %v3518, 7
        %v3520 = vsub.s32 %v3517, %v3519
        %v3521 = vrot.slane %v3513, %v3520
        %v3523 = vunpack.c.l.s4 1983009808
        %v3524 = vunpack.c.0.s8 %v3523
        %v3525 = vlaneseq
        %v3526 = vshrl.u32 %v3525, 7
        %v3527 = vsub.s32 %v3524, %v3526
        %v3528 = vrot.slane %v3514, %v3527
        %v3529 = vcombine.low %v3521, %v3528
        %vm3530 = vcmask 1044484
        %v3531 = vsel %vm3530, %v3478, %v3478
        %vm3532 = vcmask 1046534
        %v3533 = vsel %vm3532, %v3478, %v3531
        %v3534 = vrot.slane %v3512, 7
        %vm3535 = vcmask 1041409
        %v3536 = vsel %vm3535, %v3534, %v3533
        %vm3537 = vcmask 1043459
        %v3538 = vsel %vm3537, %v3534, %v3536
        %vm3539 = vcmask 1045509
        %v3540 = vsel %vm3539, %v3534, %v3538
        %vm3541 = vcmask 1047559
        %v3542 = vsel %vm3541, %v3534, %v3540
        %v3543 = vsel %vm3530, %v3495, %v3495
        %v3544 = vsel %vm3532, %v3495, %v3543
        %v3545 = vrot.slane %v3529, 7
        %v3546 = vsel %vm3535, %v3545, %v3544
        %v3547 = vsel %vm3537, %v3545, %v3546
        %v3548 = vsel %vm3539, %v3545, %v3547
        %v3549 = vsel %vm3541, %v3545, %v3548
        %v3552 = vmax.f32 %v3444, %v3542
        %v3553 = vmax.f32 %v3445, %v3549
        %3554 = vst [vmem:[#allocation2] sm:$0xff] %v3552
        %3555 = vst [vmem:[#allocation2 + $0x8] sm:$0xff] %v3553
        %p3556 = scmp.eq.s32.totalorder %s32, 2
        // Predicated region
        $region123: #{tpu_custom_call.1} parent=105 // pred_check
          %p3557 = pneg %p3556
        $region124: #{tpu_custom_call.1} parent=105 // pred_check_branch
          %3559 = sbr.rel (%p3557) target = $region126
        $region125: #{tpu_custom_call.1} parent=105 // pred_region
          %v3560 = vld [vmem:[#allocation2] sm:$0xff]
          %v3561 = vld [vmem:[#allocation2 + $0x8] sm:$0xff]
          %v3564 = vcombine.high %v3560, %v3560
          %v3566 = vunpack.c.l.s4 1983009808
          %v3567 = vunpack.c.0.s8 %v3566
          %v3568 = vlaneseq
          %v3569 = vshrl.u32 %v3568, 7
          %v3570 = vsub.s32 %v3567, %v3569
          %v3571 = vrot.slane %v3560, %v3570
          %v3573 = vunpack.c.l.s4 1983009808
          %v3574 = vunpack.c.0.s8 %v3573
          %v3575 = vlaneseq
          %v3576 = vshrl.u32 %v3575, 7
          %v3577 = vsub.s32 %v3574, %v3576
          %v3578 = vrot.slane %v3564, %v3577
          %v3579 = vcombine.high %v3571, %v3571
          %v3580 = vcombine.high %v3578, %v3578
          %v3581 = vcombine.high %v3561, %v3561
          %v3583 = vunpack.c.l.s4 1983009808
          %v3584 = vunpack.c.0.s8 %v3583
          %v3585 = vlaneseq
          %v3586 = vshrl.u32 %v3585, 7
          %v3587 = vsub.s32 %v3584, %v3586
          %v3588 = vrot.slane %v3561, %v3587
          %v3590 = vunpack.c.l.s4 1983009808
          %v3591 = vunpack.c.0.s8 %v3590
          %v3592 = vlaneseq
          %v3593 = vshrl.u32 %v3592, 7
          %v3594 = vsub.s32 %v3591, %v3593
          %v3595 = vrot.slane %v3581, %v3594
          %v3596 = vcombine.high %v3588, %v3588
          %v3597 = vcombine.high %v3595, %v3595
          %v3606 = vpack.c.bf16 %v3571, %v3571
          %v3607 = vpack.c.bf16 %v3579, %v3579
          %v3608 = vpack.c.bf16 %v3578, %v3578
          %v3609 = vpack.c.bf16 %v3580, %v3580
          %v3610 = vpack.c.bf16 %v3588, %v3588
          %v3611 = vpack.c.bf16 %v3596, %v3596
          %v3612 = vpack.c.bf16 %v3595, %v3595
          %v3613 = vpack.c.bf16 %v3597, %v3597
          %v3614 = vld [vmem:[#allocation4] sm:$0xff]
          %v3615 = vld [vmem:[#allocation4 + $0x8] sm:$0xff]
          %v3616 = vld [vmem:[#allocation4 + $0x10] sm:$0xff]
          %v3617 = vld [vmem:[#allocation4 + $0x18] sm:$0xff]
          %v3618 = vld [vmem:[#allocation4 + $0x20] sm:$0xff]
          %v3619 = vld [vmem:[#allocation4 + $0x28] sm:$0xff]
          %v3620 = vld [vmem:[#allocation4 + $0x30] sm:$0xff]
          %v3621 = vld [vmem:[#allocation4 + $0x38] sm:$0xff]
          %v3622 = vld [vmem:[#allocation4 + $0x40] sm:$0xff]
          %v3623 = vld [vmem:[#allocation4 + $0x48] sm:$0xff]
          %v3624 = vld [vmem:[#allocation4 + $0x50] sm:$0xff]
          %v3625 = vld [vmem:[#allocation4 + $0x58] sm:$0xff]
          %v3626 = vld [vmem:[#allocation4 + $0x60] sm:$0xff]
          %v3627 = vld [vmem:[#allocation4 + $0x68] sm:$0xff]
          %v3628 = vld [vmem:[#allocation4 + $0x70] sm:$0xff]
          %v3629 = vld [vmem:[#allocation4 + $0x78] sm:$0xff]
          %v3630 = vld [vmem:[#allocation4 + $0x80] sm:$0xff]
          %v3631 = vld [vmem:[#allocation4 + $0x88] sm:$0xff]
          %v3632 = vld [vmem:[#allocation4 + $0x90] sm:$0xff]
          %v3633 = vld [vmem:[#allocation4 + $0x98] sm:$0xff]
          %v3634 = vld [vmem:[#allocation4 + $0xa0] sm:$0xff]
          %v3635 = vld [vmem:[#allocation4 + $0xa8] sm:$0xff]
          %v3636 = vld [vmem:[#allocation4 + $0xb0] sm:$0xff]
          %v3637 = vld [vmem:[#allocation4 + $0xb8] sm:$0xff]
          %v3638 = vld [vmem:[#allocation4 + $0xc0] sm:$0xff]
          %v3639 = vld [vmem:[#allocation4 + $0xc8] sm:$0xff]
          %v3640 = vld [vmem:[#allocation4 + $0xd0] sm:$0xff]
          %v3641 = vld [vmem:[#allocation4 + $0xd8] sm:$0xff]
          %v3642 = vld [vmem:[#allocation4 + $0xe0] sm:$0xff]
          %v3643 = vld [vmem:[#allocation4 + $0xe8] sm:$0xff]
          %v3644 = vld [vmem:[#allocation4 + $0xf0] sm:$0xff]
          %v3645 = vld [vmem:[#allocation4 + $0xf8] sm:$0xff]
          %v3646 = vld [vmem:[#allocation4 + $0x100] sm:$0xff]
          %v3647 = vld [vmem:[#allocation4 + $0x108] sm:$0xff]
          %v3648 = vld [vmem:[#allocation4 + $0x110] sm:$0xff]
          %v3649 = vld [vmem:[#allocation4 + $0x118] sm:$0xff]
          %v3650 = vld [vmem:[#allocation4 + $0x120] sm:$0xff]
          %v3651 = vld [vmem:[#allocation4 + $0x128] sm:$0xff]
          %v3652 = vld [vmem:[#allocation4 + $0x130] sm:$0xff]
          %v3653 = vld [vmem:[#allocation4 + $0x138] sm:$0xff]
          %v3654 = vld [vmem:[#allocation4 + $0x140] sm:$0xff]
          %v3655 = vld [vmem:[#allocation4 + $0x148] sm:$0xff]
          %v3656 = vld [vmem:[#allocation4 + $0x150] sm:$0xff]
          %v3657 = vld [vmem:[#allocation4 + $0x158] sm:$0xff]
          %v3658 = vld [vmem:[#allocation4 + $0x160] sm:$0xff]
          %v3659 = vld [vmem:[#allocation4 + $0x168] sm:$0xff]
          %v3660 = vld [vmem:[#allocation4 + $0x170] sm:$0xff]
          %v3661 = vld [vmem:[#allocation4 + $0x178] sm:$0xff]
          %v3662 = vld [vmem:[#allocation4 + $0x180] sm:$0xff]
          %v3663 = vld [vmem:[#allocation4 + $0x188] sm:$0xff]
          %v3664 = vld [vmem:[#allocation4 + $0x190] sm:$0xff]
          %v3665 = vld [vmem:[#allocation4 + $0x198] sm:$0xff]
          %v3666 = vld [vmem:[#allocation4 + $0x1a0] sm:$0xff]
          %v3667 = vld [vmem:[#allocation4 + $0x1a8] sm:$0xff]
          %v3668 = vld [vmem:[#allocation4 + $0x1b0] sm:$0xff]
          %v3669 = vld [vmem:[#allocation4 + $0x1b8] sm:$0xff]
          %v3670 = vld [vmem:[#allocation4 + $0x1c0] sm:$0xff]
          %v3671 = vld [vmem:[#allocation4 + $0x1c8] sm:$0xff]
          %v3672 = vld [vmem:[#allocation4 + $0x1d0] sm:$0xff]
          %v3673 = vld [vmem:[#allocation4 + $0x1d8] sm:$0xff]
          %v3674 = vld [vmem:[#allocation4 + $0x1e0] sm:$0xff]
          %v3675 = vld [vmem:[#allocation4 + $0x1e8] sm:$0xff]
          %v3676 = vld [vmem:[#allocation4 + $0x1f0] sm:$0xff]
          %v3677 = vld [vmem:[#allocation4 + $0x1f8] sm:$0xff]
          %v3678 = vld [vmem:[#allocation4 + $0x200] sm:$0xff]
          %v3679 = vld [vmem:[#allocation4 + $0x208] sm:$0xff]
          %v3680 = vld [vmem:[#allocation4 + $0x210] sm:$0xff]
          %v3681 = vld [vmem:[#allocation4 + $0x218] sm:$0xff]
          %v3682 = vld [vmem:[#allocation4 + $0x220] sm:$0xff]
          %v3683 = vld [vmem:[#allocation4 + $0x228] sm:$0xff]
          %v3684 = vld [vmem:[#allocation4 + $0x230] sm:$0xff]
          %v3685 = vld [vmem:[#allocation4 + $0x238] sm:$0xff]
          %v3686 = vld [vmem:[#allocation4 + $0x240] sm:$0xff]
          %v3687 = vld [vmem:[#allocation4 + $0x248] sm:$0xff]
          %v3688 = vld [vmem:[#allocation4 + $0x250] sm:$0xff]
          %v3689 = vld [vmem:[#allocation4 + $0x258] sm:$0xff]
          %v3690 = vld [vmem:[#allocation4 + $0x260] sm:$0xff]
          %v3691 = vld [vmem:[#allocation4 + $0x268] sm:$0xff]
          %v3692 = vld [vmem:[#allocation4 + $0x270] sm:$0xff]
          %v3693 = vld [vmem:[#allocation4 + $0x278] sm:$0xff]
          %v3694 = vld [vmem:[#allocation4 + $0x280] sm:$0xff]
          %v3695 = vld [vmem:[#allocation4 + $0x288] sm:$0xff]
          %v3696 = vld [vmem:[#allocation4 + $0x290] sm:$0xff]
          %v3697 = vld [vmem:[#allocation4 + $0x298] sm:$0xff]
          %v3698 = vld [vmem:[#allocation4 + $0x2a0] sm:$0xff]
          %v3699 = vld [vmem:[#allocation4 + $0x2a8] sm:$0xff]
          %v3700 = vld [vmem:[#allocation4 + $0x2b0] sm:$0xff]
          %v3701 = vld [vmem:[#allocation4 + $0x2b8] sm:$0xff]
          %v3702 = vld [vmem:[#allocation4 + $0x2c0] sm:$0xff]
          %v3703 = vld [vmem:[#allocation4 + $0x2c8] sm:$0xff]
          %v3704 = vld [vmem:[#allocation4 + $0x2d0] sm:$0xff]
          %v3705 = vld [vmem:[#allocation4 + $0x2d8] sm:$0xff]
          %v3706 = vld [vmem:[#allocation4 + $0x2e0] sm:$0xff]
          %v3707 = vld [vmem:[#allocation4 + $0x2e8] sm:$0xff]
          %v3708 = vld [vmem:[#allocation4 + $0x2f0] sm:$0xff]
          %v3709 = vld [vmem:[#allocation4 + $0x2f8] sm:$0xff]
          %v3710 = vld [vmem:[#allocation4 + $0x300] sm:$0xff]
          %v3711 = vld [vmem:[#allocation4 + $0x308] sm:$0xff]
          %v3712 = vld [vmem:[#allocation4 + $0x310] sm:$0xff]
          %v3713 = vld [vmem:[#allocation4 + $0x318] sm:$0xff]
          %v3714 = vld [vmem:[#allocation4 + $0x320] sm:$0xff]
          %v3715 = vld [vmem:[#allocation4 + $0x328] sm:$0xff]
          %v3716 = vld [vmem:[#allocation4 + $0x330] sm:$0xff]
          %v3717 = vld [vmem:[#allocation4 + $0x338] sm:$0xff]
          %v3718 = vld [vmem:[#allocation4 + $0x340] sm:$0xff]
          %v3719 = vld [vmem:[#allocation4 + $0x348] sm:$0xff]
          %v3720 = vld [vmem:[#allocation4 + $0x350] sm:$0xff]
          %v3721 = vld [vmem:[#allocation4 + $0x358] sm:$0xff]
          %v3722 = vld [vmem:[#allocation4 + $0x360] sm:$0xff]
          %v3723 = vld [vmem:[#allocation4 + $0x368] sm:$0xff]
          %v3724 = vld [vmem:[#allocation4 + $0x370] sm:$0xff]
          %v3725 = vld [vmem:[#allocation4 + $0x378] sm:$0xff]
          %v3726 = vld [vmem:[#allocation4 + $0x380] sm:$0xff]
          %v3727 = vld [vmem:[#allocation4 + $0x388] sm:$0xff]
          %v3728 = vld [vmem:[#allocation4 + $0x390] sm:$0xff]
          %v3729 = vld [vmem:[#allocation4 + $0x398] sm:$0xff]
          %v3730 = vld [vmem:[#allocation4 + $0x3a0] sm:$0xff]
          %v3731 = vld [vmem:[#allocation4 + $0x3a8] sm:$0xff]
          %v3732 = vld [vmem:[#allocation4 + $0x3b0] sm:$0xff]
          %v3733 = vld [vmem:[#allocation4 + $0x3b8] sm:$0xff]
          %v3734 = vld [vmem:[#allocation4 + $0x3c0] sm:$0xff]
          %v3735 = vld [vmem:[#allocation4 + $0x3c8] sm:$0xff]
          %v3736 = vld [vmem:[#allocation4 + $0x3d0] sm:$0xff]
          %v3737 = vld [vmem:[#allocation4 + $0x3d8] sm:$0xff]
          %v3738 = vld [vmem:[#allocation4 + $0x3e0] sm:$0xff]
          %v3739 = vld [vmem:[#allocation4 + $0x3e8] sm:$0xff]
          %v3740 = vld [vmem:[#allocation4 + $0x3f0] sm:$0xff]
          %v3741 = vld [vmem:[#allocation4 + $0x3f8] sm:$0xff]
          %v3742 = vld [vmem:[#allocation4 + $0x400] sm:$0xff]
          %v3743 = vld [vmem:[#allocation4 + $0x408] sm:$0xff]
          %v3744 = vld [vmem:[#allocation4 + $0x410] sm:$0xff]
          %v3745 = vld [vmem:[#allocation4 + $0x418] sm:$0xff]
          %v3746 = vld [vmem:[#allocation4 + $0x420] sm:$0xff]
          %v3747 = vld [vmem:[#allocation4 + $0x428] sm:$0xff]
          %v3748 = vld [vmem:[#allocation4 + $0x430] sm:$0xff]
          %v3749 = vld [vmem:[#allocation4 + $0x438] sm:$0xff]
          %v3750 = vld [vmem:[#allocation4 + $0x440] sm:$0xff]
          %v3751 = vld [vmem:[#allocation4 + $0x448] sm:$0xff]
          %v3752 = vld [vmem:[#allocation4 + $0x450] sm:$0xff]
          %v3753 = vld [vmem:[#allocation4 + $0x458] sm:$0xff]
          %v3754 = vld [vmem:[#allocation4 + $0x460] sm:$0xff]
          %v3755 = vld [vmem:[#allocation4 + $0x468] sm:$0xff]
          %v3756 = vld [vmem:[#allocation4 + $0x470] sm:$0xff]
          %v3757 = vld [vmem:[#allocation4 + $0x478] sm:$0xff]
          %v3758 = vld [vmem:[#allocation4 + $0x480] sm:$0xff]
          %v3759 = vld [vmem:[#allocation4 + $0x488] sm:$0xff]
          %v3760 = vld [vmem:[#allocation4 + $0x490] sm:$0xff]
          %v3761 = vld [vmem:[#allocation4 + $0x498] sm:$0xff]
          %v3762 = vld [vmem:[#allocation4 + $0x4a0] sm:$0xff]
          %v3763 = vld [vmem:[#allocation4 + $0x4a8] sm:$0xff]
          %v3764 = vld [vmem:[#allocation4 + $0x4b0] sm:$0xff]
          %v3765 = vld [vmem:[#allocation4 + $0x4b8] sm:$0xff]
          %v3766 = vld [vmem:[#allocation4 + $0x4c0] sm:$0xff]
          %v3767 = vld [vmem:[#allocation4 + $0x4c8] sm:$0xff]
          %v3768 = vld [vmem:[#allocation4 + $0x4d0] sm:$0xff]
          %v3769 = vld [vmem:[#allocation4 + $0x4d8] sm:$0xff]
          %v3770 = vld [vmem:[#allocation4 + $0x4e0] sm:$0xff]
          %v3771 = vld [vmem:[#allocation4 + $0x4e8] sm:$0xff]
          %v3772 = vld [vmem:[#allocation4 + $0x4f0] sm:$0xff]
          %v3773 = vld [vmem:[#allocation4 + $0x4f8] sm:$0xff]
          %v3774 = vld [vmem:[#allocation4 + $0x500] sm:$0xff]
          %v3775 = vld [vmem:[#allocation4 + $0x508] sm:$0xff]
          %v3776 = vld [vmem:[#allocation4 + $0x510] sm:$0xff]
          %v3777 = vld [vmem:[#allocation4 + $0x518] sm:$0xff]
          %v3778 = vld [vmem:[#allocation4 + $0x520] sm:$0xff]
          %v3779 = vld [vmem:[#allocation4 + $0x528] sm:$0xff]
          %v3780 = vld [vmem:[#allocation4 + $0x530] sm:$0xff]
          %v3781 = vld [vmem:[#allocation4 + $0x538] sm:$0xff]
          %v3782 = vld [vmem:[#allocation4 + $0x540] sm:$0xff]
          %v3783 = vld [vmem:[#allocation4 + $0x548] sm:$0xff]
          %v3784 = vld [vmem:[#allocation4 + $0x550] sm:$0xff]
          %v3785 = vld [vmem:[#allocation4 + $0x558] sm:$0xff]
          %v3786 = vld [vmem:[#allocation4 + $0x560] sm:$0xff]
          %v3787 = vld [vmem:[#allocation4 + $0x568] sm:$0xff]
          %v3788 = vld [vmem:[#allocation4 + $0x570] sm:$0xff]
          %v3789 = vld [vmem:[#allocation4 + $0x578] sm:$0xff]
          %v3790 = vld [vmem:[#allocation4 + $0x580] sm:$0xff]
          %v3791 = vld [vmem:[#allocation4 + $0x588] sm:$0xff]
          %v3792 = vld [vmem:[#allocation4 + $0x590] sm:$0xff]
          %v3793 = vld [vmem:[#allocation4 + $0x598] sm:$0xff]
          %v3794 = vld [vmem:[#allocation4 + $0x5a0] sm:$0xff]
          %v3795 = vld [vmem:[#allocation4 + $0x5a8] sm:$0xff]
          %v3796 = vld [vmem:[#allocation4 + $0x5b0] sm:$0xff]
          %v3797 = vld [vmem:[#allocation4 + $0x5b8] sm:$0xff]
          %v3798 = vld [vmem:[#allocation4 + $0x5c0] sm:$0xff]
          %v3799 = vld [vmem:[#allocation4 + $0x5c8] sm:$0xff]
          %v3800 = vld [vmem:[#allocation4 + $0x5d0] sm:$0xff]
          %v3801 = vld [vmem:[#allocation4 + $0x5d8] sm:$0xff]
          %v3802 = vld [vmem:[#allocation4 + $0x5e0] sm:$0xff]
          %v3803 = vld [vmem:[#allocation4 + $0x5e8] sm:$0xff]
          %v3804 = vld [vmem:[#allocation4 + $0x5f0] sm:$0xff]
          %v3805 = vld [vmem:[#allocation4 + $0x5f8] sm:$0xff]
          %v3806 = vld [vmem:[#allocation4 + $0x600] sm:$0xff]
          %v3807 = vld [vmem:[#allocation4 + $0x608] sm:$0xff]
          %v3808 = vld [vmem:[#allocation4 + $0x610] sm:$0xff]
          %v3809 = vld [vmem:[#allocation4 + $0x618] sm:$0xff]
          %v3810 = vld [vmem:[#allocation4 + $0x620] sm:$0xff]
          %v3811 = vld [vmem:[#allocation4 + $0x628] sm:$0xff]
          %v3812 = vld [vmem:[#allocation4 + $0x630] sm:$0xff]
          %v3813 = vld [vmem:[#allocation4 + $0x638] sm:$0xff]
          %v3814 = vld [vmem:[#allocation4 + $0x640] sm:$0xff]
          %v3815 = vld [vmem:[#allocation4 + $0x648] sm:$0xff]
          %v3816 = vld [vmem:[#allocation4 + $0x650] sm:$0xff]
          %v3817 = vld [vmem:[#allocation4 + $0x658] sm:$0xff]
          %v3818 = vld [vmem:[#allocation4 + $0x660] sm:$0xff]
          %v3819 = vld [vmem:[#allocation4 + $0x668] sm:$0xff]
          %v3820 = vld [vmem:[#allocation4 + $0x670] sm:$0xff]
          %v3821 = vld [vmem:[#allocation4 + $0x678] sm:$0xff]
          %v3822 = vld [vmem:[#allocation4 + $0x680] sm:$0xff]
          %v3823 = vld [vmem:[#allocation4 + $0x688] sm:$0xff]
          %v3824 = vld [vmem:[#allocation4 + $0x690] sm:$0xff]
          %v3825 = vld [vmem:[#allocation4 + $0x698] sm:$0xff]
          %v3826 = vld [vmem:[#allocation4 + $0x6a0] sm:$0xff]
          %v3827 = vld [vmem:[#allocation4 + $0x6a8] sm:$0xff]
          %v3828 = vld [vmem:[#allocation4 + $0x6b0] sm:$0xff]
          %v3829 = vld [vmem:[#allocation4 + $0x6b8] sm:$0xff]
          %v3830 = vld [vmem:[#allocation4 + $0x6c0] sm:$0xff]
          %v3831 = vld [vmem:[#allocation4 + $0x6c8] sm:$0xff]
          %v3832 = vld [vmem:[#allocation4 + $0x6d0] sm:$0xff]
          %v3833 = vld [vmem:[#allocation4 + $0x6d8] sm:$0xff]
          %v3834 = vld [vmem:[#allocation4 + $0x6e0] sm:$0xff]
          %v3835 = vld [vmem:[#allocation4 + $0x6e8] sm:$0xff]
          %v3836 = vld [vmem:[#allocation4 + $0x6f0] sm:$0xff]
          %v3837 = vld [vmem:[#allocation4 + $0x6f8] sm:$0xff]
          %v3838 = vld [vmem:[#allocation4 + $0x700] sm:$0xff]
          %v3839 = vld [vmem:[#allocation4 + $0x708] sm:$0xff]
          %v3840 = vld [vmem:[#allocation4 + $0x710] sm:$0xff]
          %v3841 = vld [vmem:[#allocation4 + $0x718] sm:$0xff]
          %v3842 = vld [vmem:[#allocation4 + $0x720] sm:$0xff]
          %v3843 = vld [vmem:[#allocation4 + $0x728] sm:$0xff]
          %v3844 = vld [vmem:[#allocation4 + $0x730] sm:$0xff]
          %v3845 = vld [vmem:[#allocation4 + $0x738] sm:$0xff]
          %v3846 = vld [vmem:[#allocation4 + $0x740] sm:$0xff]
          %v3847 = vld [vmem:[#allocation4 + $0x748] sm:$0xff]
          %v3848 = vld [vmem:[#allocation4 + $0x750] sm:$0xff]
          %v3849 = vld [vmem:[#allocation4 + $0x758] sm:$0xff]
          %v3850 = vld [vmem:[#allocation4 + $0x760] sm:$0xff]
          %v3851 = vld [vmem:[#allocation4 + $0x768] sm:$0xff]
          %v3852 = vld [vmem:[#allocation4 + $0x770] sm:$0xff]
          %v3853 = vld [vmem:[#allocation4 + $0x778] sm:$0xff]
          %v3854 = vld [vmem:[#allocation4 + $0x780] sm:$0xff]
          %v3855 = vld [vmem:[#allocation4 + $0x788] sm:$0xff]
          %v3856 = vld [vmem:[#allocation4 + $0x790] sm:$0xff]
          %v3857 = vld [vmem:[#allocation4 + $0x798] sm:$0xff]
          %v3858 = vld [vmem:[#allocation4 + $0x7a0] sm:$0xff]
          %v3859 = vld [vmem:[#allocation4 + $0x7a8] sm:$0xff]
          %v3860 = vld [vmem:[#allocation4 + $0x7b0] sm:$0xff]
          %v3861 = vld [vmem:[#allocation4 + $0x7b8] sm:$0xff]
          %v3862 = vld [vmem:[#allocation4 + $0x7c0] sm:$0xff]
          %v3863 = vld [vmem:[#allocation4 + $0x7c8] sm:$0xff]
          %v3864 = vld [vmem:[#allocation4 + $0x7d0] sm:$0xff]
          %v3865 = vld [vmem:[#allocation4 + $0x7d8] sm:$0xff]
          %v3866 = vld [vmem:[#allocation4 + $0x7e0] sm:$0xff]
          %v3867 = vld [vmem:[#allocation4 + $0x7e8] sm:$0xff]
          %v3868 = vld [vmem:[#allocation4 + $0x7f0] sm:$0xff]
          %v3869 = vld [vmem:[#allocation4 + $0x7f8] sm:$0xff]
          %v3870 = vld [vmem:[%s8] sm:$0xf]
          %v3872 = vlaneseq
          %v3873 = vshrl.u32 %v3872, 7
          %v3874 = vsub.s32 0, %v3873
          %v3875 = vrot.slane %v3870, %v3874
          %v3876 = vlaneseq
          %v3877 = vshrl.u32 %v3876, 7
          %v3878 = vsub.s32 1, %v3877
          %v3879 = vrot.slane %v3870, %v3878
          %v3880 = vlaneseq
          %v3881 = vshrl.u32 %v3880, 7
          %v3882 = vsub.s32 2, %v3881
          %v3883 = vrot.slane %v3870, %v3882
          %v3884 = vlaneseq
          %v3885 = vshrl.u32 %v3884, 7
          %v3886 = vsub.s32 3, %v3885
          %v3887 = vrot.slane %v3870, %v3886
          %v4148 = vunpack.c.l.b16 %v3614
          %v4149 = vunpack.c.h.b16 %v3614
          %v4150 = vunpack.c.l.b16 %v3615
          %v4151 = vunpack.c.h.b16 %v3615
          %v4152 = vunpack.c.l.b16 %v3616
          %v4153 = vunpack.c.h.b16 %v3616
          %v4154 = vunpack.c.l.b16 %v3617
          %v4155 = vunpack.c.h.b16 %v3617
          %v4156 = vunpack.c.l.b16 %v3618
          %v4157 = vunpack.c.h.b16 %v3618
          %v4158 = vunpack.c.l.b16 %v3619
          %v4159 = vunpack.c.h.b16 %v3619
          %v4160 = vunpack.c.l.b16 %v3620
          %v4161 = vunpack.c.h.b16 %v3620
          %v4162 = vunpack.c.l.b16 %v3621
          %v4163 = vunpack.c.h.b16 %v3621
          %v4164 = vunpack.c.l.b16 %v3622
          %v4165 = vunpack.c.h.b16 %v3622
          %v4166 = vunpack.c.l.b16 %v3623
          %v4167 = vunpack.c.h.b16 %v3623
          %v4168 = vunpack.c.l.b16 %v3624
          %v4169 = vunpack.c.h.b16 %v3624
          %v4170 = vunpack.c.l.b16 %v3625
          %v4171 = vunpack.c.h.b16 %v3625
          %v4172 = vunpack.c.l.b16 %v3626
          %v4173 = vunpack.c.h.b16 %v3626
          %v4174 = vunpack.c.l.b16 %v3627
          %v4175 = vunpack.c.h.b16 %v3627
          %v4176 = vunpack.c.l.b16 %v3628
          %v4177 = vunpack.c.h.b16 %v3628
          %v4178 = vunpack.c.l.b16 %v3629
          %v4179 = vunpack.c.h.b16 %v3629
          %v4180 = vunpack.c.l.b16 %v3630
          %v4181 = vunpack.c.h.b16 %v3630
          %v4182 = vunpack.c.l.b16 %v3631
          %v4183 = vunpack.c.h.b16 %v3631
          %v4184 = vunpack.c.l.b16 %v3632
          %v4185 = vunpack.c.h.b16 %v3632
          %v4186 = vunpack.c.l.b16 %v3633
          %v4187 = vunpack.c.h.b16 %v3633
          %v4188 = vunpack.c.l.b16 %v3634
          %v4189 = vunpack.c.h.b16 %v3634
          %v4190 = vunpack.c.l.b16 %v3635
          %v4191 = vunpack.c.h.b16 %v3635
          %v4192 = vunpack.c.l.b16 %v3636
          %v4193 = vunpack.c.h.b16 %v3636
          %v4194 = vunpack.c.l.b16 %v3637
          %v4195 = vunpack.c.h.b16 %v3637
          %v4196 = vunpack.c.l.b16 %v3638
          %v4197 = vunpack.c.h.b16 %v3638
          %v4198 = vunpack.c.l.b16 %v3639
          %v4199 = vunpack.c.h.b16 %v3639
          %v4200 = vunpack.c.l.b16 %v3640
          %v4201 = vunpack.c.h.b16 %v3640
          %v4202 = vunpack.c.l.b16 %v3641
          %v4203 = vunpack.c.h.b16 %v3641
          %v4204 = vunpack.c.l.b16 %v3642
          %v4205 = vunpack.c.h.b16 %v3642
          %v4206 = vunpack.c.l.b16 %v3643
          %v4207 = vunpack.c.h.b16 %v3643
          %v4208 = vunpack.c.l.b16 %v3644
          %v4209 = vunpack.c.h.b16 %v3644
          %v4210 = vunpack.c.l.b16 %v3645
          %v4211 = vunpack.c.h.b16 %v3645
          %v4212 = vunpack.c.l.b16 %v3646
          %v4213 = vunpack.c.h.b16 %v3646
          %v4214 = vunpack.c.l.b16 %v3647
          %v4215 = vunpack.c.h.b16 %v3647
          %v4216 = vunpack.c.l.b16 %v3648
          %v4217 = vunpack.c.h.b16 %v3648
          %v4218 = vunpack.c.l.b16 %v3649
          %v4219 = vunpack.c.h.b16 %v3649
          %v4220 = vunpack.c.l.b16 %v3650
          %v4221 = vunpack.c.h.b16 %v3650
          %v4222 = vunpack.c.l.b16 %v3651
          %v4223 = vunpack.c.h.b16 %v3651
          %v4224 = vunpack.c.l.b16 %v3652
          %v4225 = vunpack.c.h.b16 %v3652
          %v4226 = vunpack.c.l.b16 %v3653
          %v4227 = vunpack.c.h.b16 %v3653
          %v4228 = vunpack.c.l.b16 %v3654
          %v4229 = vunpack.c.h.b16 %v3654
          %v4230 = vunpack.c.l.b16 %v3655
          %v4231 = vunpack.c.h.b16 %v3655
          %v4232 = vunpack.c.l.b16 %v3656
          %v4233 = vunpack.c.h.b16 %v3656
          %v4234 = vunpack.c.l.b16 %v3657
          %v4235 = vunpack.c.h.b16 %v3657
          %v4236 = vunpack.c.l.b16 %v3658
          %v4237 = vunpack.c.h.b16 %v3658
          %v4238 = vunpack.c.l.b16 %v3659
          %v4239 = vunpack.c.h.b16 %v3659
          %v4240 = vunpack.c.l.b16 %v3660
          %v4241 = vunpack.c.h.b16 %v3660
          %v4242 = vunpack.c.l.b16 %v3661
          %v4243 = vunpack.c.h.b16 %v3661
          %v4244 = vunpack.c.l.b16 %v3662
          %v4245 = vunpack.c.h.b16 %v3662
          %v4246 = vunpack.c.l.b16 %v3663
          %v4247 = vunpack.c.h.b16 %v3663
          %v4248 = vunpack.c.l.b16 %v3664
          %v4249 = vunpack.c.h.b16 %v3664
          %v4250 = vunpack.c.l.b16 %v3665
          %v4251 = vunpack.c.h.b16 %v3665
          %v4252 = vunpack.c.l.b16 %v3666
          %v4253 = vunpack.c.h.b16 %v3666
          %v4254 = vunpack.c.l.b16 %v3667
          %v4255 = vunpack.c.h.b16 %v3667
          %v4256 = vunpack.c.l.b16 %v3668
          %v4257 = vunpack.c.h.b16 %v3668
          %v4258 = vunpack.c.l.b16 %v3669
          %v4259 = vunpack.c.h.b16 %v3669
          %v4260 = vunpack.c.l.b16 %v3670
          %v4261 = vunpack.c.h.b16 %v3670
          %v4262 = vunpack.c.l.b16 %v3671
          %v4263 = vunpack.c.h.b16 %v3671
          %v4264 = vunpack.c.l.b16 %v3672
          %v4265 = vunpack.c.h.b16 %v3672
          %v4266 = vunpack.c.l.b16 %v3673
          %v4267 = vunpack.c.h.b16 %v3673
          %v4268 = vunpack.c.l.b16 %v3674
          %v4269 = vunpack.c.h.b16 %v3674
          %v4270 = vunpack.c.l.b16 %v3675
          %v4271 = vunpack.c.h.b16 %v3675
          %v4272 = vunpack.c.l.b16 %v3676
          %v4273 = vunpack.c.h.b16 %v3676
          %v4274 = vunpack.c.l.b16 %v3677
          %v4275 = vunpack.c.h.b16 %v3677
          %v4276 = vunpack.c.l.b16 %v3678
          %v4277 = vunpack.c.h.b16 %v3678
          %v4278 = vunpack.c.l.b16 %v3679
          %v4279 = vunpack.c.h.b16 %v3679
          %v4280 = vunpack.c.l.b16 %v3680
          %v4281 = vunpack.c.h.b16 %v3680
          %v4282 = vunpack.c.l.b16 %v3681
          %v4283 = vunpack.c.h.b16 %v3681
          %v4284 = vunpack.c.l.b16 %v3682
          %v4285 = vunpack.c.h.b16 %v3682
          %v4286 = vunpack.c.l.b16 %v3683
          %v4287 = vunpack.c.h.b16 %v3683
          %v4288 = vunpack.c.l.b16 %v3684
          %v4289 = vunpack.c.h.b16 %v3684
          %v4290 = vunpack.c.l.b16 %v3685
          %v4291 = vunpack.c.h.b16 %v3685
          %v4292 = vunpack.c.l.b16 %v3686
          %v4293 = vunpack.c.h.b16 %v3686
          %v4294 = vunpack.c.l.b16 %v3687
          %v4295 = vunpack.c.h.b16 %v3687
          %v4296 = vunpack.c.l.b16 %v3688
          %v4297 = vunpack.c.h.b16 %v3688
          %v4298 = vunpack.c.l.b16 %v3689
          %v4299 = vunpack.c.h.b16 %v3689
          %v4300 = vunpack.c.l.b16 %v3690
          %v4301 = vunpack.c.h.b16 %v3690
          %v4302 = vunpack.c.l.b16 %v3691
          %v4303 = vunpack.c.h.b16 %v3691
          %v4304 = vunpack.c.l.b16 %v3692
          %v4305 = vunpack.c.h.b16 %v3692
          %v4306 = vunpack.c.l.b16 %v3693
          %v4307 = vunpack.c.h.b16 %v3693
          %v4308 = vunpack.c.l.b16 %v3694
          %v4309 = vunpack.c.h.b16 %v3694
          %v4310 = vunpack.c.l.b16 %v3695
          %v4311 = vunpack.c.h.b16 %v3695
          %v4312 = vunpack.c.l.b16 %v3696
          %v4313 = vunpack.c.h.b16 %v3696
          %v4314 = vunpack.c.l.b16 %v3697
          %v4315 = vunpack.c.h.b16 %v3697
          %v4316 = vunpack.c.l.b16 %v3698
          %v4317 = vunpack.c.h.b16 %v3698
          %v4318 = vunpack.c.l.b16 %v3699
          %v4319 = vunpack.c.h.b16 %v3699
          %v4320 = vunpack.c.l.b16 %v3700
          %v4321 = vunpack.c.h.b16 %v3700
          %v4322 = vunpack.c.l.b16 %v3701
          %v4323 = vunpack.c.h.b16 %v3701
          %v4324 = vunpack.c.l.b16 %v3702
          %v4325 = vunpack.c.h.b16 %v3702
          %v4326 = vunpack.c.l.b16 %v3703
          %v4327 = vunpack.c.h.b16 %v3703
          %v4328 = vunpack.c.l.b16 %v3704
          %v4329 = vunpack.c.h.b16 %v3704
          %v4330 = vunpack.c.l.b16 %v3705
          %v4331 = vunpack.c.h.b16 %v3705
          %v4332 = vunpack.c.l.b16 %v3706
          %v4333 = vunpack.c.h.b16 %v3706
          %v4334 = vunpack.c.l.b16 %v3707
          %v4335 = vunpack.c.h.b16 %v3707
          %v4336 = vunpack.c.l.b16 %v3708
          %v4337 = vunpack.c.h.b16 %v3708
          %v4338 = vunpack.c.l.b16 %v3709
          %v4339 = vunpack.c.h.b16 %v3709
          %v4340 = vunpack.c.l.b16 %v3710
          %v4341 = vunpack.c.h.b16 %v3710
          %v4342 = vunpack.c.l.b16 %v3711
          %v4343 = vunpack.c.h.b16 %v3711
          %v4344 = vunpack.c.l.b16 %v3712
          %v4345 = vunpack.c.h.b16 %v3712
          %v4346 = vunpack.c.l.b16 %v3713
          %v4347 = vunpack.c.h.b16 %v3713
          %v4348 = vunpack.c.l.b16 %v3714
          %v4349 = vunpack.c.h.b16 %v3714
          %v4350 = vunpack.c.l.b16 %v3715
          %v4351 = vunpack.c.h.b16 %v3715
          %v4352 = vunpack.c.l.b16 %v3716
          %v4353 = vunpack.c.h.b16 %v3716
          %v4354 = vunpack.c.l.b16 %v3717
          %v4355 = vunpack.c.h.b16 %v3717
          %v4356 = vunpack.c.l.b16 %v3718
          %v4357 = vunpack.c.h.b16 %v3718
          %v4358 = vunpack.c.l.b16 %v3719
          %v4359 = vunpack.c.h.b16 %v3719
          %v4360 = vunpack.c.l.b16 %v3720
          %v4361 = vunpack.c.h.b16 %v3720
          %v4362 = vunpack.c.l.b16 %v3721
          %v4363 = vunpack.c.h.b16 %v3721
          %v4364 = vunpack.c.l.b16 %v3722
          %v4365 = vunpack.c.h.b16 %v3722
          %v4366 = vunpack.c.l.b16 %v3723
          %v4367 = vunpack.c.h.b16 %v3723
          %v4368 = vunpack.c.l.b16 %v3724
          %v4369 = vunpack.c.h.b16 %v3724
          %v4370 = vunpack.c.l.b16 %v3725
          %v4371 = vunpack.c.h.b16 %v3725
          %v4372 = vunpack.c.l.b16 %v3726
          %v4373 = vunpack.c.h.b16 %v3726
          %v4374 = vunpack.c.l.b16 %v3727
          %v4375 = vunpack.c.h.b16 %v3727
          %v4376 = vunpack.c.l.b16 %v3728
          %v4377 = vunpack.c.h.b16 %v3728
          %v4378 = vunpack.c.l.b16 %v3729
          %v4379 = vunpack.c.h.b16 %v3729
          %v4380 = vunpack.c.l.b16 %v3730
          %v4381 = vunpack.c.h.b16 %v3730
          %v4382 = vunpack.c.l.b16 %v3731
          %v4383 = vunpack.c.h.b16 %v3731
          %v4384 = vunpack.c.l.b16 %v3732
          %v4385 = vunpack.c.h.b16 %v3732
          %v4386 = vunpack.c.l.b16 %v3733
          %v4387 = vunpack.c.h.b16 %v3733
          %v4388 = vunpack.c.l.b16 %v3734
          %v4389 = vunpack.c.h.b16 %v3734
          %v4390 = vunpack.c.l.b16 %v3735
          %v4391 = vunpack.c.h.b16 %v3735
          %v4392 = vunpack.c.l.b16 %v3736
          %v4393 = vunpack.c.h.b16 %v3736
          %v4394 = vunpack.c.l.b16 %v3737
          %v4395 = vunpack.c.h.b16 %v3737
          %v4396 = vunpack.c.l.b16 %v3738
          %v4397 = vunpack.c.h.b16 %v3738
          %v4398 = vunpack.c.l.b16 %v3739
          %v4399 = vunpack.c.h.b16 %v3739
          %v4400 = vunpack.c.l.b16 %v3740
          %v4401 = vunpack.c.h.b16 %v3740
          %v4402 = vunpack.c.l.b16 %v3741
          %v4403 = vunpack.c.h.b16 %v3741
          %v4404 = vunpack.c.l.b16 %v3742
          %v4405 = vunpack.c.h.b16 %v3742
          %v4406 = vunpack.c.l.b16 %v3743
          %v4407 = vunpack.c.h.b16 %v3743
          %v4408 = vunpack.c.l.b16 %v3744
          %v4409 = vunpack.c.h.b16 %v3744
          %v4410 = vunpack.c.l.b16 %v3745
          %v4411 = vunpack.c.h.b16 %v3745
          %v4412 = vunpack.c.l.b16 %v3746
          %v4413 = vunpack.c.h.b16 %v3746
          %v4414 = vunpack.c.l.b16 %v3747
          %v4415 = vunpack.c.h.b16 %v3747
          %v4416 = vunpack.c.l.b16 %v3748
          %v4417 = vunpack.c.h.b16 %v3748
          %v4418 = vunpack.c.l.b16 %v3749
          %v4419 = vunpack.c.h.b16 %v3749
          %v4420 = vunpack.c.l.b16 %v3750
          %v4421 = vunpack.c.h.b16 %v3750
          %v4422 = vunpack.c.l.b16 %v3751
          %v4423 = vunpack.c.h.b16 %v3751
          %v4424 = vunpack.c.l.b16 %v3752
          %v4425 = vunpack.c.h.b16 %v3752
          %v4426 = vunpack.c.l.b16 %v3753
          %v4427 = vunpack.c.h.b16 %v3753
          %v4428 = vunpack.c.l.b16 %v3754
          %v4429 = vunpack.c.h.b16 %v3754
          %v4430 = vunpack.c.l.b16 %v3755
          %v4431 = vunpack.c.h.b16 %v3755
          %v4432 = vunpack.c.l.b16 %v3756
          %v4433 = vunpack.c.h.b16 %v3756
          %v4434 = vunpack.c.l.b16 %v3757
          %v4435 = vunpack.c.h.b16 %v3757
          %v4436 = vunpack.c.l.b16 %v3758
          %v4437 = vunpack.c.h.b16 %v3758
          %v4438 = vunpack.c.l.b16 %v3759
          %v4439 = vunpack.c.h.b16 %v3759
          %v4440 = vunpack.c.l.b16 %v3760
          %v4441 = vunpack.c.h.b16 %v3760
          %v4442 = vunpack.c.l.b16 %v3761
          %v4443 = vunpack.c.h.b16 %v3761
          %v4444 = vunpack.c.l.b16 %v3762
          %v4445 = vunpack.c.h.b16 %v3762
          %v4446 = vunpack.c.l.b16 %v3763
          %v4447 = vunpack.c.h.b16 %v3763
          %v4448 = vunpack.c.l.b16 %v3764
          %v4449 = vunpack.c.h.b16 %v3764
          %v4450 = vunpack.c.l.b16 %v3765
          %v4451 = vunpack.c.h.b16 %v3765
          %v4452 = vunpack.c.l.b16 %v3766
          %v4453 = vunpack.c.h.b16 %v3766
          %v4454 = vunpack.c.l.b16 %v3767
          %v4455 = vunpack.c.h.b16 %v3767
          %v4456 = vunpack.c.l.b16 %v3768
          %v4457 = vunpack.c.h.b16 %v3768
          %v4458 = vunpack.c.l.b16 %v3769
          %v4459 = vunpack.c.h.b16 %v3769
          %v4460 = vunpack.c.l.b16 %v3770
          %v4461 = vunpack.c.h.b16 %v3770
          %v4462 = vunpack.c.l.b16 %v3771
          %v4463 = vunpack.c.h.b16 %v3771
          %v4464 = vunpack.c.l.b16 %v3772
          %v4465 = vunpack.c.h.b16 %v3772
          %v4466 = vunpack.c.l.b16 %v3773
          %v4467 = vunpack.c.h.b16 %v3773
          %v4468 = vunpack.c.l.b16 %v3774
          %v4469 = vunpack.c.h.b16 %v3774
          %v4470 = vunpack.c.l.b16 %v3775
          %v4471 = vunpack.c.h.b16 %v3775
          %v4472 = vunpack.c.l.b16 %v3776
          %v4473 = vunpack.c.h.b16 %v3776
          %v4474 = vunpack.c.l.b16 %v3777
          %v4475 = vunpack.c.h.b16 %v3777
          %v4476 = vunpack.c.l.b16 %v3778
          %v4477 = vunpack.c.h.b16 %v3778
          %v4478 = vunpack.c.l.b16 %v3779
          %v4479 = vunpack.c.h.b16 %v3779
          %v4480 = vunpack.c.l.b16 %v3780
          %v4481 = vunpack.c.h.b16 %v3780
          %v4482 = vunpack.c.l.b16 %v3781
          %v4483 = vunpack.c.h.b16 %v3781
          %v4484 = vunpack.c.l.b16 %v3782
          %v4485 = vunpack.c.h.b16 %v3782
          %v4486 = vunpack.c.l.b16 %v3783
          %v4487 = vunpack.c.h.b16 %v3783
          %v4488 = vunpack.c.l.b16 %v3784
          %v4489 = vunpack.c.h.b16 %v3784
          %v4490 = vunpack.c.l.b16 %v3785
          %v4491 = vunpack.c.h.b16 %v3785
          %v4492 = vunpack.c.l.b16 %v3786
          %v4493 = vunpack.c.h.b16 %v3786
          %v4494 = vunpack.c.l.b16 %v3787
          %v4495 = vunpack.c.h.b16 %v3787
          %v4496 = vunpack.c.l.b16 %v3788
          %v4497 = vunpack.c.h.b16 %v3788
          %v4498 = vunpack.c.l.b16 %v3789
          %v4499 = vunpack.c.h.b16 %v3789
          %v4500 = vunpack.c.l.b16 %v3790
          %v4501 = vunpack.c.h.b16 %v3790
          %v4502 = vunpack.c.l.b16 %v3791
          %v4503 = vunpack.c.h.b16 %v3791
          %v4504 = vunpack.c.l.b16 %v3792
          %v4505 = vunpack.c.h.b16 %v3792
          %v4506 = vunpack.c.l.b16 %v3793
          %v4507 = vunpack.c.h.b16 %v3793
          %v4508 = vunpack.c.l.b16 %v3794
          %v4509 = vunpack.c.h.b16 %v3794
          %v4510 = vunpack.c.l.b16 %v3795
          %v4511 = vunpack.c.h.b16 %v3795
          %v4512 = vunpack.c.l.b16 %v3796
          %v4513 = vunpack.c.h.b16 %v3796
          %v4514 = vunpack.c.l.b16 %v3797
          %v4515 = vunpack.c.h.b16 %v3797
          %v4516 = vunpack.c.l.b16 %v3798
          %v4517 = vunpack.c.h.b16 %v3798
          %v4518 = vunpack.c.l.b16 %v3799
          %v4519 = vunpack.c.h.b16 %v3799
          %v4520 = vunpack.c.l.b16 %v3800
          %v4521 = vunpack.c.h.b16 %v3800
          %v4522 = vunpack.c.l.b16 %v3801
          %v4523 = vunpack.c.h.b16 %v3801
          %v4524 = vunpack.c.l.b16 %v3802
          %v4525 = vunpack.c.h.b16 %v3802
          %v4526 = vunpack.c.l.b16 %v3803
          %v4527 = vunpack.c.h.b16 %v3803
          %v4528 = vunpack.c.l.b16 %v3804
          %v4529 = vunpack.c.h.b16 %v3804
          %v4530 = vunpack.c.l.b16 %v3805
          %v4531 = vunpack.c.h.b16 %v3805
          %v4532 = vunpack.c.l.b16 %v3806
          %v4533 = vunpack.c.h.b16 %v3806
          %v4534 = vunpack.c.l.b16 %v3807
          %v4535 = vunpack.c.h.b16 %v3807
          %v4536 = vunpack.c.l.b16 %v3808
          %v4537 = vunpack.c.h.b16 %v3808
          %v4538 = vunpack.c.l.b16 %v3809
          %v4539 = vunpack.c.h.b16 %v3809
          %v4540 = vunpack.c.l.b16 %v3810
          %v4541 = vunpack.c.h.b16 %v3810
          %v4542 = vunpack.c.l.b16 %v3811
          %v4543 = vunpack.c.h.b16 %v3811
          %v4544 = vunpack.c.l.b16 %v3812
          %v4545 = vunpack.c.h.b16 %v3812
          %v4546 = vunpack.c.l.b16 %v3813
          %v4547 = vunpack.c.h.b16 %v3813
          %v4548 = vunpack.c.l.b16 %v3814
          %v4549 = vunpack.c.h.b16 %v3814
          %v4550 = vunpack.c.l.b16 %v3815
          %v4551 = vunpack.c.h.b16 %v3815
          %v4552 = vunpack.c.l.b16 %v3816
          %v4553 = vunpack.c.h.b16 %v3816
          %v4554 = vunpack.c.l.b16 %v3817
          %v4555 = vunpack.c.h.b16 %v3817
          %v4556 = vunpack.c.l.b16 %v3818
          %v4557 = vunpack.c.h.b16 %v3818
          %v4558 = vunpack.c.l.b16 %v3819
          %v4559 = vunpack.c.h.b16 %v3819
          %v4560 = vunpack.c.l.b16 %v3820
          %v4561 = vunpack.c.h.b16 %v3820
          %v4562 = vunpack.c.l.b16 %v3821
          %v4563 = vunpack.c.h.b16 %v3821
          %v4564 = vunpack.c.l.b16 %v3822
          %v4565 = vunpack.c.h.b16 %v3822
          %v4566 = vunpack.c.l.b16 %v3823
          %v4567 = vunpack.c.h.b16 %v3823
          %v4568 = vunpack.c.l.b16 %v3824
          %v4569 = vunpack.c.h.b16 %v3824
          %v4570 = vunpack.c.l.b16 %v3825
          %v4571 = vunpack.c.h.b16 %v3825
          %v4572 = vunpack.c.l.b16 %v3826
          %v4573 = vunpack.c.h.b16 %v3826
          %v4574 = vunpack.c.l.b16 %v3827
          %v4575 = vunpack.c.h.b16 %v3827
          %v4576 = vunpack.c.l.b16 %v3828
          %v4577 = vunpack.c.h.b16 %v3828
          %v4578 = vunpack.c.l.b16 %v3829
          %v4579 = vunpack.c.h.b16 %v3829
          %v4580 = vunpack.c.l.b16 %v3830
          %v4581 = vunpack.c.h.b16 %v3830
          %v4582 = vunpack.c.l.b16 %v3831
          %v4583 = vunpack.c.h.b16 %v3831
          %v4584 = vunpack.c.l.b16 %v3832
          %v4585 = vunpack.c.h.b16 %v3832
          %v4586 = vunpack.c.l.b16 %v3833
          %v4587 = vunpack.c.h.b16 %v3833
          %v4588 = vunpack.c.l.b16 %v3834
          %v4589 = vunpack.c.h.b16 %v3834
          %v4590 = vunpack.c.l.b16 %v3835
          %v4591 = vunpack.c.h.b16 %v3835
          %v4592 = vunpack.c.l.b16 %v3836
          %v4593 = vunpack.c.h.b16 %v3836
          %v4594 = vunpack.c.l.b16 %v3837
          %v4595 = vunpack.c.h.b16 %v3837
          %v4596 = vunpack.c.l.b16 %v3838
          %v4597 = vunpack.c.h.b16 %v3838
          %v4598 = vunpack.c.l.b16 %v3839
          %v4599 = vunpack.c.h.b16 %v3839
          %v4600 = vunpack.c.l.b16 %v3840
          %v4601 = vunpack.c.h.b16 %v3840
          %v4602 = vunpack.c.l.b16 %v3841
          %v4603 = vunpack.c.h.b16 %v3841
          %v4604 = vunpack.c.l.b16 %v3842
          %v4605 = vunpack.c.h.b16 %v3842
          %v4606 = vunpack.c.l.b16 %v3843
          %v4607 = vunpack.c.h.b16 %v3843
          %v4608 = vunpack.c.l.b16 %v3844
          %v4609 = vunpack.c.h.b16 %v3844
          %v4610 = vunpack.c.l.b16 %v3845
          %v4611 = vunpack.c.h.b16 %v3845
          %v4612 = vunpack.c.l.b16 %v3846
          %v4613 = vunpack.c.h.b16 %v3846
          %v4614 = vunpack.c.l.b16 %v3847
          %v4615 = vunpack.c.h.b16 %v3847
          %v4616 = vunpack.c.l.b16 %v3848
          %v4617 = vunpack.c.h.b16 %v3848
          %v4618 = vunpack.c.l.b16 %v3849
          %v4619 = vunpack.c.h.b16 %v3849
          %v4620 = vunpack.c.l.b16 %v3850
          %v4621 = vunpack.c.h.b16 %v3850
          %v4622 = vunpack.c.l.b16 %v3851
          %v4623 = vunpack.c.h.b16 %v3851
          %v4624 = vunpack.c.l.b16 %v3852
          %v4625 = vunpack.c.h.b16 %v3852
          %v4626 = vunpack.c.l.b16 %v3853
          %v4627 = vunpack.c.h.b16 %v3853
          %v4628 = vunpack.c.l.b16 %v3854
          %v4629 = vunpack.c.h.b16 %v3854
          %v4630 = vunpack.c.l.b16 %v3855
          %v4631 = vunpack.c.h.b16 %v3855
          %v4632 = vunpack.c.l.b16 %v3856
          %v4633 = vunpack.c.h.b16 %v3856
          %v4634 = vunpack.c.l.b16 %v3857
          %v4635 = vunpack.c.h.b16 %v3857
          %v4636 = vunpack.c.l.b16 %v3858
          %v4637 = vunpack.c.h.b16 %v3858
          %v4638 = vunpack.c.l.b16 %v3859
          %v4639 = vunpack.c.h.b16 %v3859
          %v4640 = vunpack.c.l.b16 %v3860
          %v4641 = vunpack.c.h.b16 %v3860
          %v4642 = vunpack.c.l.b16 %v3861
          %v4643 = vunpack.c.h.b16 %v3861
          %v4644 = vunpack.c.l.b16 %v3862
          %v4645 = vunpack.c.h.b16 %v3862
          %v4646 = vunpack.c.l.b16 %v3863
          %v4647 = vunpack.c.h.b16 %v3863
          %v4648 = vunpack.c.l.b16 %v3864
          %v4649 = vunpack.c.h.b16 %v3864
          %v4650 = vunpack.c.l.b16 %v3865
          %v4651 = vunpack.c.h.b16 %v3865
          %v4652 = vunpack.c.l.b16 %v3866
          %v4653 = vunpack.c.h.b16 %v3866
          %v4654 = vunpack.c.l.b16 %v3867
          %v4655 = vunpack.c.h.b16 %v3867
          %v4656 = vunpack.c.l.b16 %v3868
          %v4657 = vunpack.c.h.b16 %v3868
          %v4658 = vunpack.c.l.b16 %v3869
          %v4659 = vunpack.c.h.b16 %v3869
          %v4660 = vpack.c.b16 %v4152, %v4148
          %v4661 = vpack.c.b16 %v4153, %v4149
          %v4662 = vpack.c.b16 %v4154, %v4150
          %v4663 = vpack.c.b16 %v4155, %v4151
          %v4664 = vpack.c.b16 %v4160, %v4156
          %v4665 = vpack.c.b16 %v4161, %v4157
          %v4666 = vpack.c.b16 %v4162, %v4158
          %v4667 = vpack.c.b16 %v4163, %v4159
          %v4668 = vpack.c.b16 %v4168, %v4164
          %v4669 = vpack.c.b16 %v4169, %v4165
          %v4670 = vpack.c.b16 %v4170, %v4166
          %v4671 = vpack.c.b16 %v4171, %v4167
          %v4672 = vpack.c.b16 %v4176, %v4172
          %v4673 = vpack.c.b16 %v4177, %v4173
          %v4674 = vpack.c.b16 %v4178, %v4174
          %v4675 = vpack.c.b16 %v4179, %v4175
          %v4676 = vpack.c.b16 %v4184, %v4180
          %v4677 = vpack.c.b16 %v4185, %v4181
          %v4678 = vpack.c.b16 %v4186, %v4182
          %v4679 = vpack.c.b16 %v4187, %v4183
          %v4680 = vpack.c.b16 %v4192, %v4188
          %v4681 = vpack.c.b16 %v4193, %v4189
          %v4682 = vpack.c.b16 %v4194, %v4190
          %v4683 = vpack.c.b16 %v4195, %v4191
          %v4684 = vpack.c.b16 %v4200, %v4196
          %v4685 = vpack.c.b16 %v4201, %v4197
          %v4686 = vpack.c.b16 %v4202, %v4198
          %v4687 = vpack.c.b16 %v4203, %v4199
          %v4688 = vpack.c.b16 %v4208, %v4204
          %v4689 = vpack.c.b16 %v4209, %v4205
          %v4690 = vpack.c.b16 %v4210, %v4206
          %v4691 = vpack.c.b16 %v4211, %v4207
          %v4692 = vpack.c.b16 %v4216, %v4212
          %v4693 = vpack.c.b16 %v4217, %v4213
          %v4694 = vpack.c.b16 %v4218, %v4214
          %v4695 = vpack.c.b16 %v4219, %v4215
          %v4696 = vpack.c.b16 %v4224, %v4220
          %v4697 = vpack.c.b16 %v4225, %v4221
          %v4698 = vpack.c.b16 %v4226, %v4222
          %v4699 = vpack.c.b16 %v4227, %v4223
          %v4700 = vpack.c.b16 %v4232, %v4228
          %v4701 = vpack.c.b16 %v4233, %v4229
          %v4702 = vpack.c.b16 %v4234, %v4230
          %v4703 = vpack.c.b16 %v4235, %v4231
          %v4704 = vpack.c.b16 %v4240, %v4236
          %v4705 = vpack.c.b16 %v4241, %v4237
          %v4706 = vpack.c.b16 %v4242, %v4238
          %v4707 = vpack.c.b16 %v4243, %v4239
          %v4708 = vpack.c.b16 %v4248, %v4244
          %v4709 = vpack.c.b16 %v4249, %v4245
          %v4710 = vpack.c.b16 %v4250, %v4246
          %v4711 = vpack.c.b16 %v4251, %v4247
          %v4712 = vpack.c.b16 %v4256, %v4252
          %v4713 = vpack.c.b16 %v4257, %v4253
          %v4714 = vpack.c.b16 %v4258, %v4254
          %v4715 = vpack.c.b16 %v4259, %v4255
          %v4716 = vpack.c.b16 %v4264, %v4260
          %v4717 = vpack.c.b16 %v4265, %v4261
          %v4718 = vpack.c.b16 %v4266, %v4262
          %v4719 = vpack.c.b16 %v4267, %v4263
          %v4720 = vpack.c.b16 %v4272, %v4268
          %v4721 = vpack.c.b16 %v4273, %v4269
          %v4722 = vpack.c.b16 %v4274, %v4270
          %v4723 = vpack.c.b16 %v4275, %v4271
          %v4724 = vpack.c.b16 %v4280, %v4276
          %v4725 = vpack.c.b16 %v4281, %v4277
          %v4726 = vpack.c.b16 %v4282, %v4278
          %v4727 = vpack.c.b16 %v4283, %v4279
          %v4728 = vpack.c.b16 %v4288, %v4284
          %v4729 = vpack.c.b16 %v4289, %v4285
          %v4730 = vpack.c.b16 %v4290, %v4286
          %v4731 = vpack.c.b16 %v4291, %v4287
          %v4732 = vpack.c.b16 %v4296, %v4292
          %v4733 = vpack.c.b16 %v4297, %v4293
          %v4734 = vpack.c.b16 %v4298, %v4294
          %v4735 = vpack.c.b16 %v4299, %v4295
          %v4736 = vpack.c.b16 %v4304, %v4300
          %v4737 = vpack.c.b16 %v4305, %v4301
          %v4738 = vpack.c.b16 %v4306, %v4302
          %v4739 = vpack.c.b16 %v4307, %v4303
          %v4740 = vpack.c.b16 %v4312, %v4308
          %v4741 = vpack.c.b16 %v4313, %v4309
          %v4742 = vpack.c.b16 %v4314, %v4310
          %v4743 = vpack.c.b16 %v4315, %v4311
          %v4744 = vpack.c.b16 %v4320, %v4316
          %v4745 = vpack.c.b16 %v4321, %v4317
          %v4746 = vpack.c.b16 %v4322, %v4318
          %v4747 = vpack.c.b16 %v4323, %v4319
          %v4748 = vpack.c.b16 %v4328, %v4324
          %v4749 = vpack.c.b16 %v4329, %v4325
          %v4750 = vpack.c.b16 %v4330, %v4326
          %v4751 = vpack.c.b16 %v4331, %v4327
          %v4752 = vpack.c.b16 %v4336, %v4332
          %v4753 = vpack.c.b16 %v4337, %v4333
          %v4754 = vpack.c.b16 %v4338, %v4334
          %v4755 = vpack.c.b16 %v4339, %v4335
          %v4756 = vpack.c.b16 %v4344, %v4340
          %v4757 = vpack.c.b16 %v4345, %v4341
          %v4758 = vpack.c.b16 %v4346, %v4342
          %v4759 = vpack.c.b16 %v4347, %v4343
          %v4760 = vpack.c.b16 %v4352, %v4348
          %v4761 = vpack.c.b16 %v4353, %v4349
          %v4762 = vpack.c.b16 %v4354, %v4350
          %v4763 = vpack.c.b16 %v4355, %v4351
          %v4764 = vpack.c.b16 %v4360, %v4356
          %v4765 = vpack.c.b16 %v4361, %v4357
          %v4766 = vpack.c.b16 %v4362, %v4358
          %v4767 = vpack.c.b16 %v4363, %v4359
          %v4768 = vpack.c.b16 %v4368, %v4364
          %v4769 = vpack.c.b16 %v4369, %v4365
          %v4770 = vpack.c.b16 %v4370, %v4366
          %v4771 = vpack.c.b16 %v4371, %v4367
          %v4772 = vpack.c.b16 %v4376, %v4372
          %v4773 = vpack.c.b16 %v4377, %v4373
          %v4774 = vpack.c.b16 %v4378, %v4374
          %v4775 = vpack.c.b16 %v4379, %v4375
          %v4776 = vpack.c.b16 %v4384, %v4380
          %v4777 = vpack.c.b16 %v4385, %v4381
          %v4778 = vpack.c.b16 %v4386, %v4382
          %v4779 = vpack.c.b16 %v4387, %v4383
          %v4780 = vpack.c.b16 %v4392, %v4388
          %v4781 = vpack.c.b16 %v4393, %v4389
          %v4782 = vpack.c.b16 %v4394, %v4390
          %v4783 = vpack.c.b16 %v4395, %v4391
          %v4784 = vpack.c.b16 %v4400, %v4396
          %v4785 = vpack.c.b16 %v4401, %v4397
          %v4786 = vpack.c.b16 %v4402, %v4398
          %v4787 = vpack.c.b16 %v4403, %v4399
          %v4788 = vpack.c.b16 %v4408, %v4404
          %v4789 = vpack.c.b16 %v4409, %v4405
          %v4790 = vpack.c.b16 %v4410, %v4406
          %v4791 = vpack.c.b16 %v4411, %v4407
          %v4792 = vpack.c.b16 %v4416, %v4412
          %v4793 = vpack.c.b16 %v4417, %v4413
          %v4794 = vpack.c.b16 %v4418, %v4414
          %v4795 = vpack.c.b16 %v4419, %v4415
          %v4796 = vpack.c.b16 %v4424, %v4420
          %v4797 = vpack.c.b16 %v4425, %v4421
          %v4798 = vpack.c.b16 %v4426, %v4422
          %v4799 = vpack.c.b16 %v4427, %v4423
          %v4800 = vpack.c.b16 %v4432, %v4428
          %v4801 = vpack.c.b16 %v4433, %v4429
          %v4802 = vpack.c.b16 %v4434, %v4430
          %v4803 = vpack.c.b16 %v4435, %v4431
          %v4804 = vpack.c.b16 %v4440, %v4436
          %v4805 = vpack.c.b16 %v4441, %v4437
          %v4806 = vpack.c.b16 %v4442, %v4438
          %v4807 = vpack.c.b16 %v4443, %v4439
          %v4808 = vpack.c.b16 %v4448, %v4444
          %v4809 = vpack.c.b16 %v4449, %v4445
          %v4810 = vpack.c.b16 %v4450, %v4446
          %v4811 = vpack.c.b16 %v4451, %v4447
          %v4812 = vpack.c.b16 %v4456, %v4452
          %v4813 = vpack.c.b16 %v4457, %v4453
          %v4814 = vpack.c.b16 %v4458, %v4454
          %v4815 = vpack.c.b16 %v4459, %v4455
          %v4816 = vpack.c.b16 %v4464, %v4460
          %v4817 = vpack.c.b16 %v4465, %v4461
          %v4818 = vpack.c.b16 %v4466, %v4462
          %v4819 = vpack.c.b16 %v4467, %v4463
          %v4820 = vpack.c.b16 %v4472, %v4468
          %v4821 = vpack.c.b16 %v4473, %v4469
          %v4822 = vpack.c.b16 %v4474, %v4470
          %v4823 = vpack.c.b16 %v4475, %v4471
          %v4824 = vpack.c.b16 %v4480, %v4476
          %v4825 = vpack.c.b16 %v4481, %v4477
          %v4826 = vpack.c.b16 %v4482, %v4478
          %v4827 = vpack.c.b16 %v4483, %v4479
          %v4828 = vpack.c.b16 %v4488, %v4484
          %v4829 = vpack.c.b16 %v4489, %v4485
          %v4830 = vpack.c.b16 %v4490, %v4486
          %v4831 = vpack.c.b16 %v4491, %v4487
          %v4832 = vpack.c.b16 %v4496, %v4492
          %v4833 = vpack.c.b16 %v4497, %v4493
          %v4834 = vpack.c.b16 %v4498, %v4494
          %v4835 = vpack.c.b16 %v4499, %v4495
          %v4836 = vpack.c.b16 %v4504, %v4500
          %v4837 = vpack.c.b16 %v4505, %v4501
          %v4838 = vpack.c.b16 %v4506, %v4502
          %v4839 = vpack.c.b16 %v4507, %v4503
          %v4840 = vpack.c.b16 %v4512, %v4508
          %v4841 = vpack.c.b16 %v4513, %v4509
          %v4842 = vpack.c.b16 %v4514, %v4510
          %v4843 = vpack.c.b16 %v4515, %v4511
          %v4844 = vpack.c.b16 %v4520, %v4516
          %v4845 = vpack.c.b16 %v4521, %v4517
          %v4846 = vpack.c.b16 %v4522, %v4518
          %v4847 = vpack.c.b16 %v4523, %v4519
          %v4848 = vpack.c.b16 %v4528, %v4524
          %v4849 = vpack.c.b16 %v4529, %v4525
          %v4850 = vpack.c.b16 %v4530, %v4526
          %v4851 = vpack.c.b16 %v4531, %v4527
          %v4852 = vpack.c.b16 %v4536, %v4532
          %v4853 = vpack.c.b16 %v4537, %v4533
          %v4854 = vpack.c.b16 %v4538, %v4534
          %v4855 = vpack.c.b16 %v4539, %v4535
          %v4856 = vpack.c.b16 %v4544, %v4540
          %v4857 = vpack.c.b16 %v4545, %v4541
          %v4858 = vpack.c.b16 %v4546, %v4542
          %v4859 = vpack.c.b16 %v4547, %v4543
          %v4860 = vpack.c.b16 %v4552, %v4548
          %v4861 = vpack.c.b16 %v4553, %v4549
          %v4862 = vpack.c.b16 %v4554, %v4550
          %v4863 = vpack.c.b16 %v4555, %v4551
          %v4864 = vpack.c.b16 %v4560, %v4556
          %v4865 = vpack.c.b16 %v4561, %v4557
          %v4866 = vpack.c.b16 %v4562, %v4558
          %v4867 = vpack.c.b16 %v4563, %v4559
          %v4868 = vpack.c.b16 %v4568, %v4564
          %v4869 = vpack.c.b16 %v4569, %v4565
          %v4870 = vpack.c.b16 %v4570, %v4566
          %v4871 = vpack.c.b16 %v4571, %v4567
          %v4872 = vpack.c.b16 %v4576, %v4572
          %v4873 = vpack.c.b16 %v4577, %v4573
          %v4874 = vpack.c.b16 %v4578, %v4574
          %v4875 = vpack.c.b16 %v4579, %v4575
          %v4876 = vpack.c.b16 %v4584, %v4580
          %v4877 = vpack.c.b16 %v4585, %v4581
          %v4878 = vpack.c.b16 %v4586, %v4582
          %v4879 = vpack.c.b16 %v4587, %v4583
          %v4880 = vpack.c.b16 %v4592, %v4588
          %v4881 = vpack.c.b16 %v4593, %v4589
          %v4882 = vpack.c.b16 %v4594, %v4590
          %v4883 = vpack.c.b16 %v4595, %v4591
          %v4884 = vpack.c.b16 %v4600, %v4596
          %v4885 = vpack.c.b16 %v4601, %v4597
          %v4886 = vpack.c.b16 %v4602, %v4598
          %v4887 = vpack.c.b16 %v4603, %v4599
          %v4888 = vpack.c.b16 %v4608, %v4604
          %v4889 = vpack.c.b16 %v4609, %v4605
          %v4890 = vpack.c.b16 %v4610, %v4606
          %v4891 = vpack.c.b16 %v4611, %v4607
          %v4892 = vpack.c.b16 %v4616, %v4612
          %v4893 = vpack.c.b16 %v4617, %v4613
          %v4894 = vpack.c.b16 %v4618, %v4614
          %v4895 = vpack.c.b16 %v4619, %v4615
          %v4896 = vpack.c.b16 %v4624, %v4620
          %v4897 = vpack.c.b16 %v4625, %v4621
          %v4898 = vpack.c.b16 %v4626, %v4622
          %v4899 = vpack.c.b16 %v4627, %v4623
          %v4900 = vpack.c.b16 %v4632, %v4628
          %v4901 = vpack.c.b16 %v4633, %v4629
          %v4902 = vpack.c.b16 %v4634, %v4630
          %v4903 = vpack.c.b16 %v4635, %v4631
          %v4904 = vpack.c.b16 %v4640, %v4636
          %v4905 = vpack.c.b16 %v4641, %v4637
          %v4906 = vpack.c.b16 %v4642, %v4638
          %v4907 = vpack.c.b16 %v4643, %v4639
          %v4908 = vpack.c.b16 %v4648, %v4644
          %v4909 = vpack.c.b16 %v4649, %v4645
          %v4910 = vpack.c.b16 %v4650, %v4646
          %v4911 = vpack.c.b16 %v4651, %v4647
          %v4912 = vpack.c.b16 %v4656, %v4652
          %v4913 = vpack.c.b16 %v4657, %v4653
          %v4914 = vpack.c.b16 %v4658, %v4654
          %v4915 = vpack.c.b16 %v4659, %v4655
          %5172 = vmatprep.subr.bf16.mxu0 %v4689
          %5173 = vmatpush1.bf16.msra.mxu0 %v4688
          %5174 = vmatprep.subr.bf16.mxu0 %v4685
          %5175 = vmatpush1.bf16.msra.mxu0 %v4684
          %5176 = vmatprep.subr.bf16.mxu0 %v4681
          %5177 = vmatpush1.bf16.msra.mxu0 %v4680
          %5178 = vmatprep.subr.bf16.mxu0 %v4677
          %5179 = vmatpush1.bf16.msra.mxu0 %v4676
          %5180 = vmatprep.subr.bf16.mxu0 %v4673
          %5181 = vmatpush1.bf16.msra.mxu0 %v4672
          %5182 = vmatprep.subr.bf16.mxu0 %v4669
          %5183 = vmatpush1.bf16.msra.mxu0 %v4668
          %5184 = vmatprep.subr.bf16.mxu0 %v4665
          %5185 = vmatpush1.bf16.msra.mxu0 %v4664
          %5186 = vmatprep.subr.bf16.mxu0 %v4661
          %5187 = vmatpush1.bf16.msra.mxu0 %v4660
          %5188 = vmatprep.subr.bf16.mxu0 %v4721
          %5189 = vmatpush2.bf16.msra.mxu0 %v4720
          %5190 = vmatprep.subr.bf16.mxu0 %v4717
          %5191 = vmatpush2.bf16.msra.mxu0 %v4716
          %5192 = vmatprep.subr.bf16.mxu0 %v4713
          %5193 = vmatpush2.bf16.msra.mxu0 %v4712
          %5194 = vmatprep.subr.bf16.mxu0 %v4709
          %5195 = vmatpush2.bf16.msra.mxu0 %v4708
          %5196 = vmatprep.subr.bf16.mxu0 %v4705
          %5197 = vmatpush2.bf16.msra.mxu0 %v4704
          %5198 = vmatprep.subr.bf16.mxu0 %v4701
          %5199 = vmatpush2.bf16.msra.mxu0 %v4700
          %5200 = vmatprep.subr.bf16.mxu0 %v4697
          %5201 = vmatpush2.bf16.msra.mxu0 %v4696
          %5202 = vmatprep.subr.bf16.mxu0 %v4693
          %5203 = vmatpush2.bf16.msra.mxu0 %v4692
          %5204 = vmatprep.mubr.bf16.mxu0 %v3607
          %5205 = vmatmul.mubr.bf16.gmra.mxu0 %v3606
          %v5206 = vpop.f32.mrf.mxu0
          %v5207 = vadd.f32 %v3875, %v5206
          %v5208 = vpop.f32.mrf.mxu0
          %v5209 = vadd.f32 %v3879, %v5208
          %v5210 = vpop.f32.mrf.mxu0
          %v5211 = vpop.f32.mrf.mxu0
          %5212 = vdwg.mxu0
          %5213 = vmatprep.subr.bf16.mxu0 %v4753
          %5214 = vmatpush1.bf16.msra.mxu0 %v4752
          %5215 = vmatprep.subr.bf16.mxu0 %v4749
          %5216 = vmatpush1.bf16.msra.mxu0 %v4748
          %5217 = vmatprep.subr.bf16.mxu0 %v4745
          %5218 = vmatpush1.bf16.msra.mxu0 %v4744
          %5219 = vmatprep.subr.bf16.mxu0 %v4741
          %5220 = vmatpush1.bf16.msra.mxu0 %v4740
          %5221 = vmatprep.subr.bf16.mxu0 %v4737
          %5222 = vmatpush1.bf16.msra.mxu0 %v4736
          %5223 = vmatprep.subr.bf16.mxu0 %v4733
          %5224 = vmatpush1.bf16.msra.mxu0 %v4732
          %5225 = vmatprep.subr.bf16.mxu0 %v4729
          %5226 = vmatpush1.bf16.msra.mxu0 %v4728
          %5227 = vmatprep.subr.bf16.mxu0 %v4725
          %5228 = vmatpush1.bf16.msra.mxu0 %v4724
          %5229 = vmatprep.subr.bf16.mxu0 %v4785
          %5230 = vmatpush2.bf16.msra.mxu0 %v4784
          %5231 = vmatprep.subr.bf16.mxu0 %v4781
          %5232 = vmatpush2.bf16.msra.mxu0 %v4780
          %5233 = vmatprep.subr.bf16.mxu0 %v4777
          %5234 = vmatpush2.bf16.msra.mxu0 %v4776
          %5235 = vmatprep.subr.bf16.mxu0 %v4773
          %5236 = vmatpush2.bf16.msra.mxu0 %v4772
          %5237 = vmatprep.subr.bf16.mxu0 %v4769
          %5238 = vmatpush2.bf16.msra.mxu0 %v4768
          %5239 = vmatprep.subr.bf16.mxu0 %v4765
          %5240 = vmatpush2.bf16.msra.mxu0 %v4764
          %5241 = vmatprep.subr.bf16.mxu0 %v4761
          %5242 = vmatpush2.bf16.msra.mxu0 %v4760
          %5243 = vmatprep.subr.bf16.mxu0 %v4757
          %5244 = vmatpush2.bf16.msra.mxu0 %v4756
          %5245 = vmatprep.mubr.bf16.mxu0 %v3609
          %5246 = vmatmul.mubr.bf16.gmra.mxu0 %v3608
          %v5247 = vpop.f32.mrf.mxu0
          %v5248 = vadd.f32 %v5207, %v5247
          %v5249 = vpop.f32.mrf.mxu0
          %v5250 = vadd.f32 %v5209, %v5249
          %v5251 = vpop.f32.mrf.mxu0
          %v5252 = vpop.f32.mrf.mxu0
          %5253 = vdwg.mxu0
          %5254 = vmatprep.subr.bf16.mxu0 %v4817
          %5255 = vmatpush1.bf16.msra.mxu0 %v4816
          %5256 = vmatprep.subr.bf16.mxu0 %v4813
          %5257 = vmatpush1.bf16.msra.mxu0 %v4812
          %5258 = vmatprep.subr.bf16.mxu0 %v4809
          %5259 = vmatpush1.bf16.msra.mxu0 %v4808
          %5260 = vmatprep.subr.bf16.mxu0 %v4805
          %5261 = vmatpush1.bf16.msra.mxu0 %v4804
          %5262 = vmatprep.subr.bf16.mxu0 %v4801
          %5263 = vmatpush1.bf16.msra.mxu0 %v4800
          %5264 = vmatprep.subr.bf16.mxu0 %v4797
          %5265 = vmatpush1.bf16.msra.mxu0 %v4796
          %5266 = vmatprep.subr.bf16.mxu0 %v4793
          %5267 = vmatpush1.bf16.msra.mxu0 %v4792
          %5268 = vmatprep.subr.bf16.mxu0 %v4789
          %5269 = vmatpush1.bf16.msra.mxu0 %v4788
          %5270 = vmatprep.subr.bf16.mxu0 %v4849
          %5271 = vmatpush2.bf16.msra.mxu0 %v4848
          %5272 = vmatprep.subr.bf16.mxu0 %v4845
          %5273 = vmatpush2.bf16.msra.mxu0 %v4844
          %5274 = vmatprep.subr.bf16.mxu0 %v4841
          %5275 = vmatpush2.bf16.msra.mxu0 %v4840
          %5276 = vmatprep.subr.bf16.mxu0 %v4837
          %5277 = vmatpush2.bf16.msra.mxu0 %v4836
          %5278 = vmatprep.subr.bf16.mxu0 %v4833
          %5279 = vmatpush2.bf16.msra.mxu0 %v4832
          %5280 = vmatprep.subr.bf16.mxu0 %v4829
          %5281 = vmatpush2.bf16.msra.mxu0 %v4828
          %5282 = vmatprep.subr.bf16.mxu0 %v4825
          %5283 = vmatpush2.bf16.msra.mxu0 %v4824
          %5284 = vmatprep.subr.bf16.mxu0 %v4821
          %5285 = vmatpush2.bf16.msra.mxu0 %v4820
          %5286 = vmatprep.mubr.bf16.mxu0 %v3611
          %5287 = vmatmul.mubr.bf16.gmra.mxu0 %v3610
          %v5288 = vpop.f32.mrf.mxu0
          %v5289 = vadd.f32 %v5248, %v5288
          %v5290 = vpop.f32.mrf.mxu0
          %v5291 = vadd.f32 %v5250, %v5290
          %v5292 = vpop.f32.mrf.mxu0
          %v5293 = vpop.f32.mrf.mxu0
          %5294 = vdwg.mxu0
          %5295 = vmatprep.subr.bf16.mxu0 %v4881
          %5296 = vmatpush1.bf16.msra.mxu0 %v4880
          %5297 = vmatprep.subr.bf16.mxu0 %v4877
          %5298 = vmatpush1.bf16.msra.mxu0 %v4876
          %5299 = vmatprep.subr.bf16.mxu0 %v4873
          %5300 = vmatpush1.bf16.msra.mxu0 %v4872
          %5301 = vmatprep.subr.bf16.mxu0 %v4869
          %5302 = vmatpush1.bf16.msra.mxu0 %v4868
          %5303 = vmatprep.subr.bf16.mxu0 %v4865
          %5304 = vmatpush1.bf16.msra.mxu0 %v4864
          %5305 = vmatprep.subr.bf16.mxu0 %v4861
          %5306 = vmatpush1.bf16.msra.mxu0 %v4860
          %5307 = vmatprep.subr.bf16.mxu0 %v4857
          %5308 = vmatpush1.bf16.msra.mxu0 %v4856
          %5309 = vmatprep.subr.bf16.mxu0 %v4853
          %5310 = vmatpush1.bf16.msra.mxu0 %v4852
          %5311 = vmatprep.subr.bf16.mxu0 %v4913
          %5312 = vmatpush2.bf16.msra.mxu0 %v4912
          %5313 = vmatprep.subr.bf16.mxu0 %v4909
          %5314 = vmatpush2.bf16.msra.mxu0 %v4908
          %5315 = vmatprep.subr.bf16.mxu0 %v4905
          %5316 = vmatpush2.bf16.msra.mxu0 %v4904
          %5317 = vmatprep.subr.bf16.mxu0 %v4901
          %5318 = vmatpush2.bf16.msra.mxu0 %v4900
          %5319 = vmatprep.subr.bf16.mxu0 %v4897
          %5320 = vmatpush2.bf16.msra.mxu0 %v4896
          %5321 = vmatprep.subr.bf16.mxu0 %v4893
          %5322 = vmatpush2.bf16.msra.mxu0 %v4892
          %5323 = vmatprep.subr.bf16.mxu0 %v4889
          %5324 = vmatpush2.bf16.msra.mxu0 %v4888
          %5325 = vmatprep.subr.bf16.mxu0 %v4885
          %5326 = vmatpush2.bf16.msra.mxu0 %v4884
          %5327 = vmatprep.mubr.bf16.mxu0 %v3613
          %5328 = vmatmul.mubr.bf16.gmra.mxu0 %v3612
          %v5329 = vpop.f32.mrf.mxu0
          %v5330 = vadd.f32 %v5289, %v5329
          %v5331 = vpop.f32.mrf.mxu0
          %v5332 = vadd.f32 %v5291, %v5331
          %v5333 = vpop.f32.mrf.mxu0
          %v5334 = vpop.f32.mrf.mxu0
          %5335 = vdwg.mxu0
          %5336 = vmatprep.subr.bf16.mxu0 %v4691
          %5337 = vmatpush1.bf16.msra.mxu0 %v4690
          %5338 = vmatprep.subr.bf16.mxu0 %v4687
          %5339 = vmatpush1.bf16.msra.mxu0 %v4686
          %5340 = vmatprep.subr.bf16.mxu0 %v4683
          %5341 = vmatpush1.bf16.msra.mxu0 %v4682
          %5342 = vmatprep.subr.bf16.mxu0 %v4679
          %5343 = vmatpush1.bf16.msra.mxu0 %v4678
          %5344 = vmatprep.subr.bf16.mxu0 %v4675
          %5345 = vmatpush1.bf16.msra.mxu0 %v4674
          %5346 = vmatprep.subr.bf16.mxu0 %v4671
          %5347 = vmatpush1.bf16.msra.mxu0 %v4670
          %5348 = vmatprep.subr.bf16.mxu0 %v4667
          %5349 = vmatpush1.bf16.msra.mxu0 %v4666
          %5350 = vmatprep.subr.bf16.mxu0 %v4663
          %5351 = vmatpush1.bf16.msra.mxu0 %v4662
          %5352 = vmatprep.subr.bf16.mxu0 %v4723
          %5353 = vmatpush2.bf16.msra.mxu0 %v4722
          %5354 = vmatprep.subr.bf16.mxu0 %v4719
          %5355 = vmatpush2.bf16.msra.mxu0 %v4718
          %5356 = vmatprep.subr.bf16.mxu0 %v4715
          %5357 = vmatpush2.bf16.msra.mxu0 %v4714
          %5358 = vmatprep.subr.bf16.mxu0 %v4711
          %5359 = vmatpush2.bf16.msra.mxu0 %v4710
          %5360 = vmatprep.subr.bf16.mxu0 %v4707
          %5361 = vmatpush2.bf16.msra.mxu0 %v4706
          %5362 = vmatprep.subr.bf16.mxu0 %v4703
          %5363 = vmatpush2.bf16.msra.mxu0 %v4702
          %5364 = vmatprep.subr.bf16.mxu0 %v4699
          %5365 = vmatpush2.bf16.msra.mxu0 %v4698
          %5366 = vmatprep.subr.bf16.mxu0 %v4695
          %5367 = vmatpush2.bf16.msra.mxu0 %v4694
          %5368 = vmatprep.mubr.bf16.mxu0 %v3607
          %5369 = vmatmul.mubr.bf16.gmra.mxu0 %v3606
          %v5370 = vpop.f32.mrf.mxu0
          %v5371 = vadd.f32 %v3883, %v5370
          %v5372 = vpop.f32.mrf.mxu0
          %v5373 = vadd.f32 %v3887, %v5372
          %v5374 = vpop.f32.mrf.mxu0
          %v5375 = vpop.f32.mrf.mxu0
          %5376 = vdwg.mxu0
          %5377 = vmatprep.subr.bf16.mxu0 %v4755
          %5378 = vmatpush1.bf16.msra.mxu0 %v4754
          %5379 = vmatprep.subr.bf16.mxu0 %v4751
          %5380 = vmatpush1.bf16.msra.mxu0 %v4750
          %5381 = vmatprep.subr.bf16.mxu0 %v4747
          %5382 = vmatpush1.bf16.msra.mxu0 %v4746
          %5383 = vmatprep.subr.bf16.mxu0 %v4743
          %5384 = vmatpush1.bf16.msra.mxu0 %v4742
          %5385 = vmatprep.subr.bf16.mxu0 %v4739
          %5386 = vmatpush1.bf16.msra.mxu0 %v4738
          %5387 = vmatprep.subr.bf16.mxu0 %v4735
          %5388 = vmatpush1.bf16.msra.mxu0 %v4734
          %5389 = vmatprep.subr.bf16.mxu0 %v4731
          %5390 = vmatpush1.bf16.msra.mxu0 %v4730
          %5391 = vmatprep.subr.bf16.mxu0 %v4727
          %5392 = vmatpush1.bf16.msra.mxu0 %v4726
          %5393 = vmatprep.subr.bf16.mxu0 %v4787
          %5394 = vmatpush2.bf16.msra.mxu0 %v4786
          %5395 = vmatprep.subr.bf16.mxu0 %v4783
          %5396 = vmatpush2.bf16.msra.mxu0 %v4782
          %5397 = vmatprep.subr.bf16.mxu0 %v4779
          %5398 = vmatpush2.bf16.msra.mxu0 %v4778
          %5399 = vmatprep.subr.bf16.mxu0 %v4775
          %5400 = vmatpush2.bf16.msra.mxu0 %v4774
          %5401 = vmatprep.subr.bf16.mxu0 %v4771
          %5402 = vmatpush2.bf16.msra.mxu0 %v4770
          %5403 = vmatprep.subr.bf16.mxu0 %v4767
          %5404 = vmatpush2.bf16.msra.mxu0 %v4766
          %5405 = vmatprep.subr.bf16.mxu0 %v4763
          %5406 = vmatpush2.bf16.msra.mxu0 %v4762
          %5407 = vmatprep.subr.bf16.mxu0 %v4759
          %5408 = vmatpush2.bf16.msra.mxu0 %v4758
          %5409 = vmatprep.mubr.bf16.mxu0 %v3609
          %5410 = vmatmul.mubr.bf16.gmra.mxu0 %v3608
          %v5411 = vpop.f32.mrf.mxu0
          %v5412 = vadd.f32 %v5371, %v5411
          %v5413 = vpop.f32.mrf.mxu0
          %v5414 = vadd.f32 %v5373, %v5413
          %v5415 = vpop.f32.mrf.mxu0
          %v5416 = vpop.f32.mrf.mxu0
          %5417 = vdwg.mxu0
          %5418 = vmatprep.subr.bf16.mxu0 %v4819
          %5419 = vmatpush1.bf16.msra.mxu0 %v4818
          %5420 = vmatprep.subr.bf16.mxu0 %v4815
          %5421 = vmatpush1.bf16.msra.mxu0 %v4814
          %5422 = vmatprep.subr.bf16.mxu0 %v4811
          %5423 = vmatpush1.bf16.msra.mxu0 %v4810
          %5424 = vmatprep.subr.bf16.mxu0 %v4807
          %5425 = vmatpush1.bf16.msra.mxu0 %v4806
          %5426 = vmatprep.subr.bf16.mxu0 %v4803
          %5427 = vmatpush1.bf16.msra.mxu0 %v4802
          %5428 = vmatprep.subr.bf16.mxu0 %v4799
          %5429 = vmatpush1.bf16.msra.mxu0 %v4798
          %5430 = vmatprep.subr.bf16.mxu0 %v4795
          %5431 = vmatpush1.bf16.msra.mxu0 %v4794
          %5432 = vmatprep.subr.bf16.mxu0 %v4791
          %5433 = vmatpush1.bf16.msra.mxu0 %v4790
          %5434 = vmatprep.subr.bf16.mxu0 %v4851
          %5435 = vmatpush2.bf16.msra.mxu0 %v4850
          %5436 = vmatprep.subr.bf16.mxu0 %v4847
          %5437 = vmatpush2.bf16.msra.mxu0 %v4846
          %5438 = vmatprep.subr.bf16.mxu0 %v4843
          %5439 = vmatpush2.bf16.msra.mxu0 %v4842
          %5440 = vmatprep.subr.bf16.mxu0 %v4839
          %5441 = vmatpush2.bf16.msra.mxu0 %v4838
          %5442 = vmatprep.subr.bf16.mxu0 %v4835
          %5443 = vmatpush2.bf16.msra.mxu0 %v4834
          %5444 = vmatprep.subr.bf16.mxu0 %v4831
          %5445 = vmatpush2.bf16.msra.mxu0 %v4830
          %5446 = vmatprep.subr.bf16.mxu0 %v4827
          %5447 = vmatpush2.bf16.msra.mxu0 %v4826
          %5448 = vmatprep.subr.bf16.mxu0 %v4823
          %5449 = vmatpush2.bf16.msra.mxu0 %v4822
          %5450 = vmatprep.mubr.bf16.mxu0 %v3611
          %5451 = vmatmul.mubr.bf16.gmra.mxu0 %v3610
          %v5452 = vpop.f32.mrf.mxu0
          %v5453 = vadd.f32 %v5412, %v5452
          %v5454 = vpop.f32.mrf.mxu0
          %v5455 = vadd.f32 %v5414, %v5454
          %v5456 = vpop.f32.mrf.mxu0
          %v5457 = vpop.f32.mrf.mxu0
          %5458 = vdwg.mxu0
          %5459 = vmatprep.subr.bf16.mxu0 %v4883
          %5460 = vmatpush1.bf16.msra.mxu0 %v4882
          %5461 = vmatprep.subr.bf16.mxu0 %v4879
          %5462 = vmatpush1.bf16.msra.mxu0 %v4878
          %5463 = vmatprep.subr.bf16.mxu0 %v4875
          %5464 = vmatpush1.bf16.msra.mxu0 %v4874
          %5465 = vmatprep.subr.bf16.mxu0 %v4871
          %5466 = vmatpush1.bf16.msra.mxu0 %v4870
          %5467 = vmatprep.subr.bf16.mxu0 %v4867
          %5468 = vmatpush1.bf16.msra.mxu0 %v4866
          %5469 = vmatprep.subr.bf16.mxu0 %v4863
          %5470 = vmatpush1.bf16.msra.mxu0 %v4862
          %5471 = vmatprep.subr.bf16.mxu0 %v4859
          %5472 = vmatpush1.bf16.msra.mxu0 %v4858
          %5473 = vmatprep.subr.bf16.mxu0 %v4855
          %5474 = vmatpush1.bf16.msra.mxu0 %v4854
          %5475 = vmatprep.subr.bf16.mxu0 %v4915
          %5476 = vmatpush2.bf16.msra.mxu0 %v4914
          %5477 = vmatprep.subr.bf16.mxu0 %v4911
          %5478 = vmatpush2.bf16.msra.mxu0 %v4910
          %5479 = vmatprep.subr.bf16.mxu0 %v4907
          %5480 = vmatpush2.bf16.msra.mxu0 %v4906
          %5481 = vmatprep.subr.bf16.mxu0 %v4903
          %5482 = vmatpush2.bf16.msra.mxu0 %v4902
          %5483 = vmatprep.subr.bf16.mxu0 %v4899
          %5484 = vmatpush2.bf16.msra.mxu0 %v4898
          %5485 = vmatprep.subr.bf16.mxu0 %v4895
          %5486 = vmatpush2.bf16.msra.mxu0 %v4894
          %5487 = vmatprep.subr.bf16.mxu0 %v4891
          %5488 = vmatpush2.bf16.msra.mxu0 %v4890
          %5489 = vmatprep.subr.bf16.mxu0 %v4887
          %5490 = vmatpush2.bf16.msra.mxu0 %v4886
          %5491 = vmatprep.mubr.bf16.mxu0 %v3613
          %5492 = vmatmul.mubr.bf16.gmra.mxu0 %v3612
          %v5493 = vpop.f32.mrf.mxu0
          %v5494 = vadd.f32 %v5453, %v5493
          %v5495 = vpop.f32.mrf.mxu0
          %v5496 = vadd.f32 %v5455, %v5495
          %v5497 = vpop.f32.mrf.mxu0
          %v5498 = vpop.f32.mrf.mxu0
          %5499 = vdwg.mxu0
          %v5500 = vmax.f32 %v5330, 0.0
          %v5501 = vmax.f32 %v5332, 0.0
          %v5502 = vmax.f32 %v5494, 0.0
          %v5503 = vmax.f32 %v5496, 0.0
          %v5504 = vpack.c.bf16 %v5500, %v5500
          %v5505 = vpack.c.bf16 %v5501, %v5501
          %v5506 = vpack.c.bf16 %v5502, %v5502
          %v5507 = vpack.c.bf16 %v5503, %v5503
          %v5508 = vld [vmem:[#allocation7] sm:$0xff]
          %v5509 = vld [vmem:[#allocation7 + $0x8] sm:$0xff]
          %v5510 = vld [vmem:[#allocation7 + $0x10] sm:$0xff]
          %v5511 = vld [vmem:[#allocation7 + $0x18] sm:$0xff]
          %v5512 = vld [vmem:[#allocation7 + $0x20] sm:$0xff]
          %v5513 = vld [vmem:[#allocation7 + $0x28] sm:$0xff]
          %v5514 = vld [vmem:[#allocation7 + $0x30] sm:$0xff]
          %v5515 = vld [vmem:[#allocation7 + $0x38] sm:$0xff]
          %v5516 = vld [vmem:[#allocation7 + $0x40] sm:$0xff]
          %v5517 = vld [vmem:[#allocation7 + $0x48] sm:$0xff]
          %v5518 = vld [vmem:[#allocation7 + $0x50] sm:$0xff]
          %v5519 = vld [vmem:[#allocation7 + $0x58] sm:$0xff]
          %v5520 = vld [vmem:[#allocation7 + $0x60] sm:$0xff]
          %v5521 = vld [vmem:[#allocation7 + $0x68] sm:$0xff]
          %v5522 = vld [vmem:[#allocation7 + $0x70] sm:$0xff]
          %v5523 = vld [vmem:[#allocation7 + $0x78] sm:$0xff]
          %v5524 = vld [vmem:[#allocation7 + $0x80] sm:$0xff]
          %v5525 = vld [vmem:[#allocation7 + $0x88] sm:$0xff]
          %v5526 = vld [vmem:[#allocation7 + $0x90] sm:$0xff]
          %v5527 = vld [vmem:[#allocation7 + $0x98] sm:$0xff]
          %v5528 = vld [vmem:[#allocation7 + $0xa0] sm:$0xff]
          %v5529 = vld [vmem:[#allocation7 + $0xa8] sm:$0xff]
          %v5530 = vld [vmem:[#allocation7 + $0xb0] sm:$0xff]
          %v5531 = vld [vmem:[#allocation7 + $0xb8] sm:$0xff]
          %v5532 = vld [vmem:[#allocation7 + $0xc0] sm:$0xff]
          %v5533 = vld [vmem:[#allocation7 + $0xc8] sm:$0xff]
          %v5534 = vld [vmem:[#allocation7 + $0xd0] sm:$0xff]
          %v5535 = vld [vmem:[#allocation7 + $0xd8] sm:$0xff]
          %v5536 = vld [vmem:[#allocation7 + $0xe0] sm:$0xff]
          %v5537 = vld [vmem:[#allocation7 + $0xe8] sm:$0xff]
          %v5538 = vld [vmem:[#allocation7 + $0xf0] sm:$0xff]
          %v5539 = vld [vmem:[#allocation7 + $0xf8] sm:$0xff]
          %v5540 = vld [vmem:[#allocation7 + $0x100] sm:$0xff]
          %v5541 = vld [vmem:[#allocation7 + $0x108] sm:$0xff]
          %v5542 = vld [vmem:[#allocation7 + $0x110] sm:$0xff]
          %v5543 = vld [vmem:[#allocation7 + $0x118] sm:$0xff]
          %v5544 = vld [vmem:[#allocation7 + $0x120] sm:$0xff]
          %v5545 = vld [vmem:[#allocation7 + $0x128] sm:$0xff]
          %v5546 = vld [vmem:[#allocation7 + $0x130] sm:$0xff]
          %v5547 = vld [vmem:[#allocation7 + $0x138] sm:$0xff]
          %v5548 = vld [vmem:[#allocation7 + $0x140] sm:$0xff]
          %v5549 = vld [vmem:[#allocation7 + $0x148] sm:$0xff]
          %v5550 = vld [vmem:[#allocation7 + $0x150] sm:$0xff]
          %v5551 = vld [vmem:[#allocation7 + $0x158] sm:$0xff]
          %v5552 = vld [vmem:[#allocation7 + $0x160] sm:$0xff]
          %v5553 = vld [vmem:[#allocation7 + $0x168] sm:$0xff]
          %v5554 = vld [vmem:[#allocation7 + $0x170] sm:$0xff]
          %v5555 = vld [vmem:[#allocation7 + $0x178] sm:$0xff]
          %v5556 = vld [vmem:[#allocation7 + $0x180] sm:$0xff]
          %v5557 = vld [vmem:[#allocation7 + $0x188] sm:$0xff]
          %v5558 = vld [vmem:[#allocation7 + $0x190] sm:$0xff]
          %v5559 = vld [vmem:[#allocation7 + $0x198] sm:$0xff]
          %v5560 = vld [vmem:[#allocation7 + $0x1a0] sm:$0xff]
          %v5561 = vld [vmem:[#allocation7 + $0x1a8] sm:$0xff]
          %v5562 = vld [vmem:[#allocation7 + $0x1b0] sm:$0xff]
          %v5563 = vld [vmem:[#allocation7 + $0x1b8] sm:$0xff]
          %v5564 = vld [vmem:[#allocation7 + $0x1c0] sm:$0xff]
          %v5565 = vld [vmem:[#allocation7 + $0x1c8] sm:$0xff]
          %v5566 = vld [vmem:[#allocation7 + $0x1d0] sm:$0xff]
          %v5567 = vld [vmem:[#allocation7 + $0x1d8] sm:$0xff]
          %v5568 = vld [vmem:[#allocation7 + $0x1e0] sm:$0xff]
          %v5569 = vld [vmem:[#allocation7 + $0x1e8] sm:$0xff]
          %v5570 = vld [vmem:[#allocation7 + $0x1f0] sm:$0xff]
          %v5571 = vld [vmem:[#allocation7 + $0x1f8] sm:$0xff]
          %v5572 = vld [vmem:[%s10] sm:$0x3]
          %v5574 = vlaneseq
          %v5575 = vshrl.u32 %v5574, 7
          %v5576 = vsub.s32 0, %v5575
          %v5577 = vrot.slane %v5572, %v5576
          %v5578 = vlaneseq
          %v5579 = vshrl.u32 %v5578, 7
          %v5580 = vsub.s32 1, %v5579
          %v5581 = vrot.slane %v5572, %v5580
          %v5648 = vunpack.c.l.b16 %v5508
          %v5649 = vunpack.c.h.b16 %v5508
          %v5650 = vunpack.c.l.b16 %v5509
          %v5651 = vunpack.c.h.b16 %v5509
          %v5652 = vunpack.c.l.b16 %v5510
          %v5653 = vunpack.c.h.b16 %v5510
          %v5654 = vunpack.c.l.b16 %v5511
          %v5655 = vunpack.c.h.b16 %v5511
          %v5656 = vunpack.c.l.b16 %v5512
          %v5657 = vunpack.c.h.b16 %v5512
          %v5658 = vunpack.c.l.b16 %v5513
          %v5659 = vunpack.c.h.b16 %v5513
          %v5660 = vunpack.c.l.b16 %v5514
          %v5661 = vunpack.c.h.b16 %v5514
          %v5662 = vunpack.c.l.b16 %v5515
          %v5663 = vunpack.c.h.b16 %v5515
          %v5664 = vunpack.c.l.b16 %v5516
          %v5665 = vunpack.c.h.b16 %v5516
          %v5666 = vunpack.c.l.b16 %v5517
          %v5667 = vunpack.c.h.b16 %v5517
          %v5668 = vunpack.c.l.b16 %v5518
          %v5669 = vunpack.c.h.b16 %v5518
          %v5670 = vunpack.c.l.b16 %v5519
          %v5671 = vunpack.c.h.b16 %v5519
          %v5672 = vunpack.c.l.b16 %v5520
          %v5673 = vunpack.c.h.b16 %v5520
          %v5674 = vunpack.c.l.b16 %v5521
          %v5675 = vunpack.c.h.b16 %v5521
          %v5676 = vunpack.c.l.b16 %v5522
          %v5677 = vunpack.c.h.b16 %v5522
          %v5678 = vunpack.c.l.b16 %v5523
          %v5679 = vunpack.c.h.b16 %v5523
          %v5680 = vunpack.c.l.b16 %v5524
          %v5681 = vunpack.c.h.b16 %v5524
          %v5682 = vunpack.c.l.b16 %v5525
          %v5683 = vunpack.c.h.b16 %v5525
          %v5684 = vunpack.c.l.b16 %v5526
          %v5685 = vunpack.c.h.b16 %v5526
          %v5686 = vunpack.c.l.b16 %v5527
          %v5687 = vunpack.c.h.b16 %v5527
          %v5688 = vunpack.c.l.b16 %v5528
          %v5689 = vunpack.c.h.b16 %v5528
          %v5690 = vunpack.c.l.b16 %v5529
          %v5691 = vunpack.c.h.b16 %v5529
          %v5692 = vunpack.c.l.b16 %v5530
          %v5693 = vunpack.c.h.b16 %v5530
          %v5694 = vunpack.c.l.b16 %v5531
          %v5695 = vunpack.c.h.b16 %v5531
          %v5696 = vunpack.c.l.b16 %v5532
          %v5697 = vunpack.c.h.b16 %v5532
          %v5698 = vunpack.c.l.b16 %v5533
          %v5699 = vunpack.c.h.b16 %v5533
          %v5700 = vunpack.c.l.b16 %v5534
          %v5701 = vunpack.c.h.b16 %v5534
          %v5702 = vunpack.c.l.b16 %v5535
          %v5703 = vunpack.c.h.b16 %v5535
          %v5704 = vunpack.c.l.b16 %v5536
          %v5705 = vunpack.c.h.b16 %v5536
          %v5706 = vunpack.c.l.b16 %v5537
          %v5707 = vunpack.c.h.b16 %v5537
          %v5708 = vunpack.c.l.b16 %v5538
          %v5709 = vunpack.c.h.b16 %v5538
          %v5710 = vunpack.c.l.b16 %v5539
          %v5711 = vunpack.c.h.b16 %v5539
          %v5712 = vunpack.c.l.b16 %v5540
          %v5713 = vunpack.c.h.b16 %v5540
          %v5714 = vunpack.c.l.b16 %v5541
          %v5715 = vunpack.c.h.b16 %v5541
          %v5716 = vunpack.c.l.b16 %v5542
          %v5717 = vunpack.c.h.b16 %v5542
          %v5718 = vunpack.c.l.b16 %v5543
          %v5719 = vunpack.c.h.b16 %v5543
          %v5720 = vunpack.c.l.b16 %v5544
          %v5721 = vunpack.c.h.b16 %v5544
          %v5722 = vunpack.c.l.b16 %v5545
          %v5723 = vunpack.c.h.b16 %v5545
          %v5724 = vunpack.c.l.b16 %v5546
          %v5725 = vunpack.c.h.b16 %v5546
          %v5726 = vunpack.c.l.b16 %v5547
          %v5727 = vunpack.c.h.b16 %v5547
          %v5728 = vunpack.c.l.b16 %v5548
          %v5729 = vunpack.c.h.b16 %v5548
          %v5730 = vunpack.c.l.b16 %v5549
          %v5731 = vunpack.c.h.b16 %v5549
          %v5732 = vunpack.c.l.b16 %v5550
          %v5733 = vunpack.c.h.b16 %v5550
          %v5734 = vunpack.c.l.b16 %v5551
          %v5735 = vunpack.c.h.b16 %v5551
          %v5736 = vunpack.c.l.b16 %v5552
          %v5737 = vunpack.c.h.b16 %v5552
          %v5738 = vunpack.c.l.b16 %v5553
          %v5739 = vunpack.c.h.b16 %v5553
          %v5740 = vunpack.c.l.b16 %v5554
          %v5741 = vunpack.c.h.b16 %v5554
          %v5742 = vunpack.c.l.b16 %v5555
          %v5743 = vunpack.c.h.b16 %v5555
          %v5744 = vunpack.c.l.b16 %v5556
          %v5745 = vunpack.c.h.b16 %v5556
          %v5746 = vunpack.c.l.b16 %v5557
          %v5747 = vunpack.c.h.b16 %v5557
          %v5748 = vunpack.c.l.b16 %v5558
          %v5749 = vunpack.c.h.b16 %v5558
          %v5750 = vunpack.c.l.b16 %v5559
          %v5751 = vunpack.c.h.b16 %v5559
          %v5752 = vunpack.c.l.b16 %v5560
          %v5753 = vunpack.c.h.b16 %v5560
          %v5754 = vunpack.c.l.b16 %v5561
          %v5755 = vunpack.c.h.b16 %v5561
          %v5756 = vunpack.c.l.b16 %v5562
          %v5757 = vunpack.c.h.b16 %v5562
          %v5758 = vunpack.c.l.b16 %v5563
          %v5759 = vunpack.c.h.b16 %v5563
          %v5760 = vunpack.c.l.b16 %v5564
          %v5761 = vunpack.c.h.b16 %v5564
          %v5762 = vunpack.c.l.b16 %v5565
          %v5763 = vunpack.c.h.b16 %v5565
          %v5764 = vunpack.c.l.b16 %v5566
          %v5765 = vunpack.c.h.b16 %v5566
          %v5766 = vunpack.c.l.b16 %v5567
          %v5767 = vunpack.c.h.b16 %v5567
          %v5768 = vunpack.c.l.b16 %v5568
          %v5769 = vunpack.c.h.b16 %v5568
          %v5770 = vunpack.c.l.b16 %v5569
          %v5771 = vunpack.c.h.b16 %v5569
          %v5772 = vunpack.c.l.b16 %v5570
          %v5773 = vunpack.c.h.b16 %v5570
          %v5774 = vunpack.c.l.b16 %v5571
          %v5775 = vunpack.c.h.b16 %v5571
          %v5776 = vpack.c.b16 %v5650, %v5648
          %v5777 = vpack.c.b16 %v5651, %v5649
          %v5778 = vpack.c.b16 %v5654, %v5652
          %v5779 = vpack.c.b16 %v5655, %v5653
          %v5780 = vpack.c.b16 %v5658, %v5656
          %v5781 = vpack.c.b16 %v5659, %v5657
          %v5782 = vpack.c.b16 %v5662, %v5660
          %v5783 = vpack.c.b16 %v5663, %v5661
          %v5784 = vpack.c.b16 %v5666, %v5664
          %v5785 = vpack.c.b16 %v5667, %v5665
          %v5786 = vpack.c.b16 %v5670, %v5668
          %v5787 = vpack.c.b16 %v5671, %v5669
          %v5788 = vpack.c.b16 %v5674, %v5672
          %v5789 = vpack.c.b16 %v5675, %v5673
          %v5790 = vpack.c.b16 %v5678, %v5676
          %v5791 = vpack.c.b16 %v5679, %v5677
          %v5792 = vpack.c.b16 %v5682, %v5680
          %v5793 = vpack.c.b16 %v5683, %v5681
          %v5794 = vpack.c.b16 %v5686, %v5684
          %v5795 = vpack.c.b16 %v5687, %v5685
          %v5796 = vpack.c.b16 %v5690, %v5688
          %v5797 = vpack.c.b16 %v5691, %v5689
          %v5798 = vpack.c.b16 %v5694, %v5692
          %v5799 = vpack.c.b16 %v5695, %v5693
          %v5800 = vpack.c.b16 %v5698, %v5696
          %v5801 = vpack.c.b16 %v5699, %v5697
          %v5802 = vpack.c.b16 %v5702, %v5700
          %v5803 = vpack.c.b16 %v5703, %v5701
          %v5804 = vpack.c.b16 %v5706, %v5704
          %v5805 = vpack.c.b16 %v5707, %v5705
          %v5806 = vpack.c.b16 %v5710, %v5708
          %v5807 = vpack.c.b16 %v5711, %v5709
          %v5808 = vpack.c.b16 %v5714, %v5712
          %v5809 = vpack.c.b16 %v5715, %v5713
          %v5810 = vpack.c.b16 %v5718, %v5716
          %v5811 = vpack.c.b16 %v5719, %v5717
          %v5812 = vpack.c.b16 %v5722, %v5720
          %v5813 = vpack.c.b16 %v5723, %v5721
          %v5814 = vpack.c.b16 %v5726, %v5724
          %v5815 = vpack.c.b16 %v5727, %v5725
          %v5816 = vpack.c.b16 %v5730, %v5728
          %v5817 = vpack.c.b16 %v5731, %v5729
          %v5818 = vpack.c.b16 %v5734, %v5732
          %v5819 = vpack.c.b16 %v5735, %v5733
          %v5820 = vpack.c.b16 %v5738, %v5736
          %v5821 = vpack.c.b16 %v5739, %v5737
          %v5822 = vpack.c.b16 %v5742, %v5740
          %v5823 = vpack.c.b16 %v5743, %v5741
          %v5824 = vpack.c.b16 %v5746, %v5744
          %v5825 = vpack.c.b16 %v5747, %v5745
          %v5826 = vpack.c.b16 %v5750, %v5748
          %v5827 = vpack.c.b16 %v5751, %v5749
          %v5828 = vpack.c.b16 %v5754, %v5752
          %v5829 = vpack.c.b16 %v5755, %v5753
          %v5830 = vpack.c.b16 %v5758, %v5756
          %v5831 = vpack.c.b16 %v5759, %v5757
          %v5832 = vpack.c.b16 %v5762, %v5760
          %v5833 = vpack.c.b16 %v5763, %v5761
          %v5834 = vpack.c.b16 %v5766, %v5764
          %v5835 = vpack.c.b16 %v5767, %v5765
          %v5836 = vpack.c.b16 %v5770, %v5768
          %v5837 = vpack.c.b16 %v5771, %v5769
          %v5838 = vpack.c.b16 %v5774, %v5772
          %v5839 = vpack.c.b16 %v5775, %v5773
          %5904 = vmatprep.subr.bf16.mxu0 %v5791
          %5905 = vmatpush1.bf16.msra.mxu0 %v5790
          %5906 = vmatprep.subr.bf16.mxu0 %v5789
          %5907 = vmatpush1.bf16.msra.mxu0 %v5788
          %5908 = vmatprep.subr.bf16.mxu0 %v5787
          %5909 = vmatpush1.bf16.msra.mxu0 %v5786
          %5910 = vmatprep.subr.bf16.mxu0 %v5785
          %5911 = vmatpush1.bf16.msra.mxu0 %v5784
          %5912 = vmatprep.subr.bf16.mxu0 %v5783
          %5913 = vmatpush1.bf16.msra.mxu0 %v5782
          %5914 = vmatprep.subr.bf16.mxu0 %v5781
          %5915 = vmatpush1.bf16.msra.mxu0 %v5780
          %5916 = vmatprep.subr.bf16.mxu0 %v5779
          %5917 = vmatpush1.bf16.msra.mxu0 %v5778
          %5918 = vmatprep.subr.bf16.mxu0 %v5777
          %5919 = vmatpush1.bf16.msra.mxu0 %v5776
          %5920 = vmatprep.subr.bf16.mxu0 %v5807
          %5921 = vmatpush2.bf16.msra.mxu0 %v5806
          %5922 = vmatprep.subr.bf16.mxu0 %v5805
          %5923 = vmatpush2.bf16.msra.mxu0 %v5804
          %5924 = vmatprep.subr.bf16.mxu0 %v5803
          %5925 = vmatpush2.bf16.msra.mxu0 %v5802
          %5926 = vmatprep.subr.bf16.mxu0 %v5801
          %5927 = vmatpush2.bf16.msra.mxu0 %v5800
          %5928 = vmatprep.subr.bf16.mxu0 %v5799
          %5929 = vmatpush2.bf16.msra.mxu0 %v5798
          %5930 = vmatprep.subr.bf16.mxu0 %v5797
          %5931 = vmatpush2.bf16.msra.mxu0 %v5796
          %5932 = vmatprep.subr.bf16.mxu0 %v5795
          %5933 = vmatpush2.bf16.msra.mxu0 %v5794
          %5934 = vmatprep.subr.bf16.mxu0 %v5793
          %5935 = vmatpush2.bf16.msra.mxu0 %v5792
          %5936 = vmatprep.mubr.bf16.mxu0 %v5505
          %5937 = vmatmul.mubr.bf16.gmra.mxu0 %v5504
          %v5938 = vpop.f32.mrf.mxu0
          %v5939 = vadd.f32 %v5577, %v5938
          %v5940 = vpop.f32.mrf.mxu0
          %v5941 = vadd.f32 %v5581, %v5940
          %v5942 = vpop.f32.mrf.mxu0
          %v5943 = vpop.f32.mrf.mxu0
          %5944 = vdwg.mxu0
          %5945 = vmatprep.subr.bf16.mxu0 %v5823
          %5946 = vmatpush1.bf16.msra.mxu0 %v5822
          %5947 = vmatprep.subr.bf16.mxu0 %v5821
          %5948 = vmatpush1.bf16.msra.mxu0 %v5820
          %5949 = vmatprep.subr.bf16.mxu0 %v5819
          %5950 = vmatpush1.bf16.msra.mxu0 %v5818
          %5951 = vmatprep.subr.bf16.mxu0 %v5817
          %5952 = vmatpush1.bf16.msra.mxu0 %v5816
          %5953 = vmatprep.subr.bf16.mxu0 %v5815
          %5954 = vmatpush1.bf16.msra.mxu0 %v5814
          %5955 = vmatprep.subr.bf16.mxu0 %v5813
          %5956 = vmatpush1.bf16.msra.mxu0 %v5812
          %5957 = vmatprep.subr.bf16.mxu0 %v5811
          %5958 = vmatpush1.bf16.msra.mxu0 %v5810
          %5959 = vmatprep.subr.bf16.mxu0 %v5809
          %5960 = vmatpush1.bf16.msra.mxu0 %v5808
          %5961 = vmatprep.subr.bf16.mxu0 %v5839
          %5962 = vmatpush2.bf16.msra.mxu0 %v5838
          %5963 = vmatprep.subr.bf16.mxu0 %v5837
          %5964 = vmatpush2.bf16.msra.mxu0 %v5836
          %5965 = vmatprep.subr.bf16.mxu0 %v5835
          %5966 = vmatpush2.bf16.msra.mxu0 %v5834
          %5967 = vmatprep.subr.bf16.mxu0 %v5833
          %5968 = vmatpush2.bf16.msra.mxu0 %v5832
          %5969 = vmatprep.subr.bf16.mxu0 %v5831
          %5970 = vmatpush2.bf16.msra.mxu0 %v5830
          %5971 = vmatprep.subr.bf16.mxu0 %v5829
          %5972 = vmatpush2.bf16.msra.mxu0 %v5828
          %5973 = vmatprep.subr.bf16.mxu0 %v5827
          %5974 = vmatpush2.bf16.msra.mxu0 %v5826
          %5975 = vmatprep.subr.bf16.mxu0 %v5825
          %5976 = vmatpush2.bf16.msra.mxu0 %v5824
          %5977 = vmatprep.mubr.bf16.mxu0 %v5507
          %5978 = vmatmul.mubr.bf16.gmra.mxu0 %v5506
          %v5979 = vpop.f32.mrf.mxu0
          %v5980 = vadd.f32 %v5939, %v5979
          %v5981 = vpop.f32.mrf.mxu0
          %v5982 = vadd.f32 %v5941, %v5981
          %v5983 = vpop.f32.mrf.mxu0
          %v5984 = vpop.f32.mrf.mxu0
          %5985 = vdwg.mxu0
          %v5986 = vmax.f32 %v5980, 0.0
          %v5987 = vmax.f32 %v5982, 0.0
          %v5988 = vpack.c.bf16 %v5986, %v5986
          %v5989 = vpack.c.bf16 %v5987, %v5987
          %v5990 = vld [vmem:[%s11] sm:$0xf]
          %v5991 = vld [vmem:[%s11 + $0x4] sm:$0xf]
          %v5992 = vld [vmem:[%s11 + $0x8] sm:$0xf]
          %v5993 = vld [vmem:[%s11 + $0xc] sm:$0xf]
          %v5994 = vld [vmem:[%s11 + $0x10] sm:$0xf]
          %v5995 = vld [vmem:[%s11 + $0x14] sm:$0xf]
          %v5996 = vld [vmem:[%s11 + $0x18] sm:$0xf]
          %v5997 = vld [vmem:[%s11 + $0x1c] sm:$0xf]
          %v5998 = vld [vmem:[%s11 + $0x20] sm:$0xf]
          %v5999 = vld [vmem:[%s11 + $0x24] sm:$0xf]
          %v6000 = vld [vmem:[%s11 + $0x28] sm:$0xf]
          %v6001 = vld [vmem:[%s11 + $0x2c] sm:$0xf]
          %v6002 = vld [vmem:[%s11 + $0x30] sm:$0xf]
          %v6003 = vld [vmem:[%s11 + $0x34] sm:$0xf]
          %v6004 = vld [vmem:[%s11 + $0x38] sm:$0xf]
          %v6005 = vld [vmem:[%s11 + $0x3c] sm:$0xf]
          %v6006 = vld [vmem:[%s11 + $0x40] sm:$0xf]
          %v6007 = vld [vmem:[%s11 + $0x44] sm:$0xf]
          %v6008 = vld [vmem:[%s11 + $0x48] sm:$0xf]
          %v6009 = vld [vmem:[%s11 + $0x4c] sm:$0xf]
          %v6010 = vld [vmem:[%s11 + $0x50] sm:$0xf]
          %v6011 = vld [vmem:[%s11 + $0x54] sm:$0xf]
          %v6012 = vld [vmem:[%s11 + $0x58] sm:$0xf]
          %v6013 = vld [vmem:[%s11 + $0x5c] sm:$0xf]
          %v6014 = vld [vmem:[%s11 + $0x60] sm:$0xf]
          %v6015 = vld [vmem:[%s11 + $0x64] sm:$0xf]
          %v6016 = vld [vmem:[%s11 + $0x68] sm:$0xf]
          %v6017 = vld [vmem:[%s11 + $0x6c] sm:$0xf]
          %v6018 = vld [vmem:[%s11 + $0x70] sm:$0xf]
          %v6019 = vld [vmem:[%s11 + $0x74] sm:$0xf]
          %v6020 = vld [vmem:[%s11 + $0x78] sm:$0xf]
          %v6021 = vld [vmem:[%s11 + $0x7c] sm:$0xf]
          %v6022 = vld [vmem:[%s12] sm:$0x1]
          %v6024 = vlaneseq
          %v6025 = vshrl.u32 %v6024, 7
          %v6026 = vsub.s32 0, %v6025
          %v6027 = vrot.slane %v6022, %v6026
          %v6061 = vunpack.c.l.b16 %v5990
          %v6062 = vunpack.c.l.b16 %v5991
          %v6063 = vunpack.c.l.b16 %v5992
          %v6064 = vunpack.c.l.b16 %v5993
          %v6065 = vunpack.c.l.b16 %v5994
          %v6066 = vunpack.c.l.b16 %v5995
          %v6067 = vunpack.c.l.b16 %v5996
          %v6068 = vunpack.c.l.b16 %v5997
          %v6069 = vunpack.c.l.b16 %v5998
          %v6070 = vunpack.c.l.b16 %v5999
          %v6071 = vunpack.c.l.b16 %v6000
          %v6072 = vunpack.c.l.b16 %v6001
          %v6073 = vunpack.c.l.b16 %v6002
          %v6074 = vunpack.c.l.b16 %v6003
          %v6075 = vunpack.c.l.b16 %v6004
          %v6076 = vunpack.c.l.b16 %v6005
          %v6077 = vunpack.c.l.b16 %v6006
          %v6078 = vunpack.c.l.b16 %v6007
          %v6079 = vunpack.c.l.b16 %v6008
          %v6080 = vunpack.c.l.b16 %v6009
          %v6081 = vunpack.c.l.b16 %v6010
          %v6082 = vunpack.c.l.b16 %v6011
          %v6083 = vunpack.c.l.b16 %v6012
          %v6084 = vunpack.c.l.b16 %v6013
          %v6085 = vunpack.c.l.b16 %v6014
          %v6086 = vunpack.c.l.b16 %v6015
          %v6087 = vunpack.c.l.b16 %v6016
          %v6088 = vunpack.c.l.b16 %v6017
          %v6089 = vunpack.c.l.b16 %v6018
          %v6090 = vunpack.c.l.b16 %v6019
          %v6091 = vunpack.c.l.b16 %v6020
          %v6092 = vunpack.c.l.b16 %v6021
          %v6093 = vpack.c.b16 %v6062, %v6061
          %v6094 = vpack.c.b16 %v6064, %v6063
          %v6095 = vpack.c.b16 %v6066, %v6065
          %v6096 = vpack.c.b16 %v6068, %v6067
          %v6097 = vpack.c.b16 %v6070, %v6069
          %v6098 = vpack.c.b16 %v6072, %v6071
          %v6099 = vpack.c.b16 %v6074, %v6073
          %v6100 = vpack.c.b16 %v6076, %v6075
          %v6101 = vpack.c.b16 %v6078, %v6077
          %v6102 = vpack.c.b16 %v6080, %v6079
          %v6103 = vpack.c.b16 %v6082, %v6081
          %v6104 = vpack.c.b16 %v6084, %v6083
          %v6105 = vpack.c.b16 %v6086, %v6085
          %v6106 = vpack.c.b16 %v6088, %v6087
          %v6107 = vpack.c.b16 %v6090, %v6089
          %v6108 = vpack.c.b16 %v6092, %v6091
          %6125 = vmatprep.subr.bf16.mxu0 0
          %6126 = vmatpush1.bf16.msra.mxu0 %v6100
          %6127 = vmatprep.subr.bf16.mxu0 0
          %6128 = vmatpush1.bf16.msra.mxu0 %v6099
          %6129 = vmatprep.subr.bf16.mxu0 0
          %6130 = vmatpush1.bf16.msra.mxu0 %v6098
          %6131 = vmatprep.subr.bf16.mxu0 0
          %6132 = vmatpush1.bf16.msra.mxu0 %v6097
          %6133 = vmatprep.subr.bf16.mxu0 0
          %6134 = vmatpush1.bf16.msra.mxu0 %v6096
          %6135 = vmatprep.subr.bf16.mxu0 0
          %6136 = vmatpush1.bf16.msra.mxu0 %v6095
          %6137 = vmatprep.subr.bf16.mxu0 0
          %6138 = vmatpush1.bf16.msra.mxu0 %v6094
          %6139 = vmatprep.subr.bf16.mxu0 0
          %6140 = vmatpush1.bf16.msra.mxu0 %v6093
          %6141 = vmatprep.subr.bf16.mxu0 0
          %6142 = vmatpush2.bf16.msra.mxu0 %v6108
          %6143 = vmatprep.subr.bf16.mxu0 0
          %6144 = vmatpush2.bf16.msra.mxu0 %v6107
          %6145 = vmatprep.subr.bf16.mxu0 0
          %6146 = vmatpush2.bf16.msra.mxu0 %v6106
          %6147 = vmatprep.subr.bf16.mxu0 0
          %6148 = vmatpush2.bf16.msra.mxu0 %v6105
          %6149 = vmatprep.subr.bf16.mxu0 0
          %6150 = vmatpush2.bf16.msra.mxu0 %v6104
          %6151 = vmatprep.subr.bf16.mxu0 0
          %6152 = vmatpush2.bf16.msra.mxu0 %v6103
          %6153 = vmatprep.subr.bf16.mxu0 0
          %6154 = vmatpush2.bf16.msra.mxu0 %v6102
          %6155 = vmatprep.subr.bf16.mxu0 0
          %6156 = vmatpush2.bf16.msra.mxu0 %v6101
          %6157 = vmatprep.mubr.bf16.mxu0 %v5989
          %6158 = vmatmul.mubr.bf16.gmra.mxu0 %v5988
          %v6159 = vpop.f32.mrf.mxu0
          %v6160 = vadd.f32 %v6027, %v6159
          %v6161 = vpop.f32.mrf.mxu0
          %v6162 = vpop.f32.mrf.mxu0
          %v6163 = vpop.f32.mrf.mxu0
          %6164 = vdwg.mxu0
          %v6167 = vunpack.c.l.s4 1966171168
          %v6168 = vunpack.c.0.s8 %v6167
          %v6169 = vlaneseq
          %v6170 = vshrl.u32 %v6169, 7
          %v6171 = vsub.s32 %v6168, %v6170
          %v6172 = vrot.slane %v6160, %v6171
          %v6173 = vcombine.high %v6172, %v6172
          %v6175 = vunpack.c.l.s4 1966171168
          %v6176 = vunpack.c.0.s8 %v6175
          %v6177 = vlaneseq
          %v6178 = vshrl.u32 %v6177, 7
          %v6179 = vsub.s32 %v6176, %v6178
          %v6180 = vrot.slane %v6172, %v6179
          %v6182 = vunpack.c.l.s4 1966171168
          %v6183 = vunpack.c.0.s8 %v6182
          %v6184 = vlaneseq
          %v6185 = vshrl.u32 %v6184, 7
          %v6186 = vsub.s32 %v6183, %v6185
          %v6187 = vrot.slane %v6173, %v6186
          %6190 = vst [vmem:[#allocation9] sm:$0x1] %v6180
          %6191 = vst [vmem:[#allocation9 + $0x1] sm:$0x1] %v6187
        $region126: #{tpu_custom_call.1} parent=105 // pred_fallthru
          _
        // Predicated region
        $region127: #{tpu_custom_call.1} parent=105 // pred_check
          %p6192 = pneg %p337
        $region128: #{tpu_custom_call.1} parent=105 // pred_check_branch
          %6194 = sbr.rel (%p6192) target = $region130
        $region129: #{tpu_custom_call.1} parent=105 // pred_region
          %s6195 = smul.u32 2, %s31
          %s6197 = ssub.s32 32, 32
          %6198 = vsyncadd [#allocation6], %s6197
          %s6199 = smul.addr %s6195, 16
          %s6200 = scalar_lea.hbm %s13, %s6199
          %s6201 = sshll.u32 [#allocation9], 4
          %s6202 = int_to_ptr.vmem [resolvable:$true] %s6201
          %6207 = dma.vmem_to_hbm [thread:$0]  %s6202, 32, %s6200, [#allocation6], 16, 16, 1
        $region130: #{tpu_custom_call.1} parent=105 // pred_fallthru
          _
        // Predicated region
        $region131: #{tpu_custom_call.1} parent=105 // pred_check
          %p6208 = pneg %p337
        $region132: #{tpu_custom_call.1} parent=105 // pred_check_branch
          %6210 = sbr.rel (%p6208) target = $region134
        $region133: #{tpu_custom_call.1} parent=105 // pred_region
          %6211 = dma.done [#allocation6], 32
        $region134: #{tpu_custom_call.1} parent=105 // pred_fallthru
          _
      $region106: #{tpu_custom_call.1} parent=5 // pred_fallthru
        _
      %p6212 = scmp.le.s32.totalorder 2, %s22
      // Predicated region
      $region135: #{tpu_custom_call.1} parent=5 // pred_check
        %p6213 = pneg %p6212
      $region136: #{tpu_custom_call.1} parent=5 // pred_check_branch
        %6215 = sbr.rel (%p6213) target = $region138
      $region137: #{tpu_custom_call.1} parent=5 // pred_region
        %s6216 = ssub.s32 %s22, 2
      $region138: #{tpu_custom_call.1} parent=5 // pred_fallthru
        _
    $region6: #{tpu_custom_call.1} parent=1 // loop_footer
      %s26 = sadd.s32 1, %s22
    $region7: #{tpu_custom_call.1} parent=1 // loop_footer_branch
      %21 = sbr.rel target = $region3
    $region8: #{tpu_custom_call.1} parent=1 // loop_exit
      _
    %6217 = vsyncpa [#allocation5], 1
    %s6218 = scalar_lea.sflag [#allocation5], 1
    %6219 = vsyncpa %s6218, 1
    %6220 = vsyncpa [#allocation8], 1
    %6221 = vsyncpa [#allocation6], 1
    %s6222 = scalar_lea.sflag [#allocation6], 1
    %6223 = vsyncpa %s6222, 1

</llo_original>
